<compile_context>
chip_gen: v7x
topology: tpu7x:2x2x1
jax: 0.10.0
libtpu: 0.0.40
codegen_flags: <defaults>
</compile_context>

<pallas_src>
import math

import jax
import jax.numpy as jnp
from jax.experimental import pallas as pl
from jax.experimental.pallas import tpu as pltpu

STATE_DIM = 150
ACTION_DIM = 1
LATENT_DIM = 16
HIDDEN = 512
PAD_IN = 256                 # padded feature width fed to e1/d1 (K of the MXU matmuls)
A_LANE = STATE_DIM           # lane 150 carries the transformed action (e1 only)
Z_OFF = STATE_DIM            # lanes [150,166) carry z (d1 only)
OUT_W = 128                  # packed lane-dense output width
MAX_ACTION = 1.0             # module config scalar (self.max_action)
B_MIN = 10000.0
B_MAX = 8000000.0
LOG_BMIN = math.log(B_MIN)
LOG_BMAX = math.log(B_MAX)
LOG_RANGE = LOG_BMAX - LOG_BMIN

MUL_WEIGHTS = [9.108388780987298e-07, 1.059008923220972e-06, 1.0491108923815773e-06, 1.1062785461035674e-06, 1.1233828445256222e-06, 1.2176325299151358e-06, 1.2276935876798234e-06, 1.225727373821428e-06, 1.2282000625418732e-06, 1.2310398460613214e-06, 0.11547315120697021, 0.1370280683040619, 0.13245660066604614, 0.14291255176067352, 0.14601102471351624, 0.01579149439930916, 0.015916554257273674, 0.015866877511143684, 0.015860475599765778, 0.01589406281709671, 0.00012113105913158506, 0.00014051565085537732, 0.00013927537656854838, 0.00014692841796204448, 0.0001496588665759191, 1.6243957361439243e-05, 1.6617701476207003e-05, 1.658736618992407e-05, 1.6620524547761306e-05, 1.669244738877751e-05, 0.007275158539414406, 0.009120622649788857, 0.008939903229475021, 0.009114483371376991, 0.008997362107038498, 0.007180711720138788, 0.00841580517590046, 0.007690922822803259, 0.008248683996498585, 0.008288963697850704, 0.00620803888887167, 0.007471443619579077, 0.007342279423028231, 0.0074492571875452995, 0.007365750148892403, 0.006154336035251617, 0.006908596493303776, 0.006505969446152449, 0.006853444501757622, 0.006897413171827793, 0.008673721924424171, 0.008673866279423237, 0.008672562427818775, 0.008672185242176056, 0.008671551011502743, 0.008673721924424171, 0.008665213361382484, 0.00865672342479229, 0.008649756200611591, 0.008646947331726551, 1.799630045890808, 2.278015613555908, 2.185457706451416, 2.502725124359131, 2.1366732120513916, 0.7276115417480469, 0.7529850602149963, 0.7551690936088562, 0.7569636106491089, 0.7683706283569336, 0.04213936626911163, 0.07190877199172974, 0.06961502134799957, 0.07673759758472443, 0.07813231647014618, 0.021535275503993034, 0.026588434353470802, 0.025132175534963608, 0.02553657442331314, 0.026560090482234955, 0.036353643983602524, 0.04710008576512337, 0.048716530203819275, 0.04568418487906456, 0.048586416989564896, 0.042830608785152435, 0.052614402025938034, 0.047247227281332016, 0.0500192828476429, 0.049893688410520554, 0.06829073280096054, 0.12170270830392838, 0.1143275797367096, 0.12081389874219894, 0.11699365079402924, 0.057100776582956314, 0.07574842870235443, 0.0641368180513382, 0.07225460559129715, 0.07336115837097168, 8.385283470153809, 8.79195785522461, 8.734068870544434, 8.727130889892578, 8.733592987060547, 9.911806106567383, 10.059857368469238, 9.928916931152344, 9.957329750061035, 9.947797775268555, 0.5528498291969299, 0.6015455722808838, 0.6040346622467041, 0.6128904819488525, 0.6106728315353394, 0.45432814955711365, 0.4981219172477722, 0.47951459884643555, 0.4930354356765747, 0.47873011231422424, 3.129629373550415, 2.868824005126953, 2.8642611503601074, 2.9201724529266357, 2.926238536834717, 3.7120745182037354, 3.6531338691711426, 3.61527681350708, 3.5694897174835205, 3.5351955890655518, 3.234508514404297, 2.8877975940704346, 2.9905972480773926, 2.9318313598632812, 2.9699902534484863, 3.759488582611084, 3.7236077785491943, 3.7136762142181396, 3.6999588012695312, 3.696364641189575, 20.4775333404541, 19.821626663208008, 20.3739013671875, 19.948535919189453, 20.258892059326172, 34.844886779785156, 34.0961799621582, 33.8519172668457, 33.95980453491211, 34.118324279785156]

SUB_WEIGHTS = [738496.125, 694683.3125, 691479.25, 673617.375, 666556.0625, 681600.1875, 669463.3125, 666129.0, 662238.1875, 659593.75, 7.3224053382873535, 6.640115737915039, 6.661839008331299, 6.499343395233154, 6.463366985321045, 66.41350555419922, 65.2419204711914, 65.0151138305664, 64.62989807128906, 64.40997314453125, 5549.7080078125, 5218.357421875, 5197.064453125, 5061.17431640625, 5007.40673828125, 51043.18359375, 50241.6328125, 50011.48046875, 49687.8984375, 49473.1640625, 51.766231536865234, 43.154056549072266, 46.73100662231445, 44.35700988769531, 45.82548522949219, 54.172786712646484, 52.25625228881836, 52.80331802368164, 52.15654754638672, 51.818397521972656, -8.076197624206543, -9.032713890075684, -8.184115409851074, -8.881279945373535, -8.57718276977539, -6.027364253997803, -7.842897415161133, -7.138024806976318, -7.600769519805908, -7.766489505767822, 151.33204650878906, 151.2038116455078, 151.07054138183594, 150.9722900390625, 150.88592529296875, 151.33204650878906, 150.38157653808594, 149.42373657226562, 148.60403442382812, 147.83462524414062, 1.048581838607788, 0.9403055310249329, 0.965387225151062, 0.9410541653633118, 0.9549955725669861, 1.2477848529815674, 1.222879409790039, 1.2160511016845703, 1.2063682079315186, 1.194684624671936, 12.129443168640137, 9.123194694519043, 9.858774185180664, 9.137080192565918, 9.637124061584473, 28.483427047729492, 27.244096755981445, 27.210426330566406, 27.071775436401367, 26.76516342163086, 20.601516723632812, 17.87394142150879, 18.152664184570312, 18.502660751342773, 17.923423767089844, 18.974851608276367, 18.55058479309082, 18.663055419921875, 18.46375274658203, 18.452112197875977, 8.178370475769043, 5.5424723625183105, 6.423187732696533, 5.719115734100342, 6.158593654632568, 12.5791015625, 11.946151733398438, 12.197224617004395, 11.995094299316406, 12.022625923156738, 0.03417285904288292, 0.029939087107777596, 0.0304565466940403, 0.030316563323140144, 0.030231211334466934, 0.04919557273387909, 0.0460132472217083, 0.04782531410455704, 0.04682319611310959, 0.04794519394636154, 0.31053441762924194, 0.27375665307044983, 0.27528613805770874, 0.271941214799881, 0.26977038383483887, 0.8403489589691162, 0.7605294585227966, 0.8009557127952576, 0.771939218044281, 0.8093596696853638, 0.5885034799575806, 0.5472908020019531, 0.561969518661499, 0.555245578289032, 0.5488224029541016, 0.5749943256378174, 0.5683791637420654, 0.5661110281944275, 0.5616078972816467, 0.5590522885322571, 0.42020806670188904, 0.41124776005744934, 0.40748050808906555, 0.40527647733688354, 0.414554625749588, 0.43730807304382324, 0.43566998839378357, 0.4336211681365967, 0.4324624836444855, 0.43000659346580505, 0.004606906324625015, 0.004368430934846401, 0.004239862319082022, 0.00433636549860239, 0.004258331842720509, 0.005296767223626375, 0.005273005925118923, 0.005282784346491098, 0.00526299886405468, 0.005225192755460739]


def _round_up(x, m):
    return (x + m - 1) // m * m


def _cdiv(a, b):
    return -(-a // b)


def _tpu_tile_policy():
    """(max_tile_rows, vmem_limit_bytes, min_grid_steps) per TPU generation."""
    kind = ""
    try:
        kind = jax.devices()[0].device_kind.lower()
    except Exception:
        pass
    if "v7" in kind:
        # 64 MiB VMEM per TC, 2 TCs/chip -> want >= 2 parallel grid steps.
        return 2048, 48 * 1024 * 1024, 2
    if "v6" in kind:
        return 2048, 64 * 1024 * 1024, 1
    if "v5" in kind:
        # v5e is MXU-slow; tile wins are second-order, keep scoped VMEM modest.
        return 1024, 48 * 1024 * 1024, 1
    # unknown generation: conservative defaults
    return 1024, 48 * 1024 * 1024, 1


def _vae_kernel(state_ref, act_ref, eps_ref, sub_ref, mul_ref,
                we1_ref, be1_ref, we2_ref, be2_ref,
                wh_ref, bh_ref,
                wd1_ref, bd1_ref, wd2_ref, bd2_ref,
                wd3_ref, bd3_ref,
                out_ref):
    f32 = jnp.float32
    bf16 = jnp.bfloat16
    tile_n = state_ref.shape[0]

    # ---- input normalization + action log transform (VPU/EUP, f32) ----
    s_norm = (state_ref[...] - sub_ref[...]) * mul_ref[...]          # (T, 150)
    a_t = (jnp.log(act_ref[...]) - LOG_BMIN) * (2.0 / LOG_RANGE) - 1.0
    a_t = jnp.clip(a_t, -1.0, 1.0)                                   # (T, 1)

    # 256-lane padded feature slab assembled in-kernel (no HBM concat/pad).
    # Encoder input: [state(150) | action(1) | zeros(105)]
    xe = jnp.concatenate(
        [s_norm, a_t,
         jnp.zeros((tile_n, PAD_IN - STATE_DIM - ACTION_DIM), f32)],
        axis=-1).astype(bf16)                                        # (T, 256)

    # ---- encoder (bf16 MXU, f32 accumulation) ----
    h = jnp.dot(xe, we1_ref[...], preferred_element_type=f32) + be1_ref[...]
    h = jnp.maximum(h, 0.0)                                          # (T, 512)
    h = jnp.dot(h.astype(bf16), we2_ref[...],
                preferred_element_type=f32) + be2_ref[...]
    h = jnp.maximum(h, 0.0)

    # fused mean / log_std head: one (512, 32) matmul, split afterwards
    ms = jnp.dot(h.astype(bf16), wh_ref[...],
                 preferred_element_type=f32) + bh_ref[...]           # (T, 32)
    mean = ms[:, :LATENT_DIM]
    log_std = jnp.clip(ms[:, LATENT_DIM:], -4.0, 15.0)
    std = jnp.exp(log_std)
    z = mean + std * eps_ref[...]                                    # (T, 16)

    # ---- decoder ----
    # Decoder input: [state(150) | z(16) | zeros(90)]; wd1 rows [150,166) carry z.
    xd = jnp.concatenate(
        [s_norm, z,
         jnp.zeros((tile_n, PAD_IN - STATE_DIM - LATENT_DIM), f32)],
        axis=-1).astype(bf16)                                        # (T, 256)

    d = jnp.dot(xd, wd1_ref[...], preferred_element_type=f32) + bd1_ref[...]
    d = jnp.maximum(d, 0.0)
    d = jnp.dot(d.astype(bf16), wd2_ref[...],
                preferred_element_type=f32) + bd2_ref[...]
    d = jnp.maximum(d, 0.0)

    # d3 (512 -> 1) stays off the MXU: VPU multiply + XLU lane reduce (f32).
    u = MAX_ACTION * jnp.tanh(
        jnp.sum(d * wd3_ref[...], axis=-1, keepdims=True) + bd3_ref[...])  # (T, 1)

    # ---- lane-dense packed output: [mean(16) | std(16) | u broadcast(96)] ----
    out_ref[:, :LATENT_DIM] = mean
    out_ref[:, LATENT_DIM:2 * LATENT_DIM] = std
    out_ref[:, 2 * LATENT_DIM:] = jnp.broadcast_to(
        u, (tile_n, OUT_W - 2 * LATENT_DIM))


def init_params(key):
    """Deterministic nn.Linear-style init: U(-1/sqrt(fan_in), 1/sqrt(fan_in))."""
    def linear(k, fan_in, fan_out):
        kw, kb = jax.random.split(k)
        bound = 1.0 / float(fan_in) ** 0.5
        w = jax.random.uniform(kw, (fan_out, fan_in), jnp.float32, -bound, bound)
        b = jax.random.uniform(kb, (fan_out,), jnp.float32, -bound, bound)
        return w, b

    ks = jax.random.split(key, 7)
    return {
        "e1": linear(ks[0], STATE_DIM + ACTION_DIM, HIDDEN),
        "e2": linear(ks[1], HIDDEN, HIDDEN),
        "mean": linear(ks[2], HIDDEN, LATENT_DIM),
        "log_std": linear(ks[3], HIDDEN, LATENT_DIM),
        "d1": linear(ks[4], STATE_DIM + LATENT_DIM, HIDDEN),
        "d2": linear(ks[5], HIDDEN, HIDDEN),
        "d3": linear(ks[6], HIDDEN, ACTION_DIM),
    }


def prepare_weights(params):
    """One-time weight packing (transpose / pad / fuse / bf16 cast)."""
    bf16 = jnp.bfloat16
    we1, be1 = params["e1"]          # (512, 151), (512,)
    we2, be2 = params["e2"]          # (512, 512)
    wm, bm = params["mean"]          # (16, 512)
    wls, bls = params["log_std"]     # (16, 512)
    wd1, bd1 = params["d1"]          # (512, 166)
    wd2, bd2 = params["d2"]          # (512, 512)
    wd3, bd3 = params["d3"]          # (1, 512), (1,)

    # e1: rows [0,150) = state, row 150 = action, rest zero (K padded to 256)
    we1_full = jnp.zeros((PAD_IN, HIDDEN), jnp.float32)
    we1_full = we1_full.at[:STATE_DIM].set(we1[:, :STATE_DIM].T)
    we1_full = we1_full.at[A_LANE].set(we1[:, STATE_DIM])

    # d1: rows [0,150) = state, rows [150,166) = z, rest zero
    wd1_full = jnp.zeros((PAD_IN, HIDDEN), jnp.float32)
    wd1_full = wd1_full.at[:STATE_DIM].set(wd1[:, :STATE_DIM].T)
    wd1_full = wd1_full.at[Z_OFF:Z_OFF + LATENT_DIM].set(wd1[:, STATE_DIM:].T)

    # fused mean / log_std head
    w_heads = jnp.concatenate([wm.T, wls.T], axis=1)             # (512, 32)
    b_heads = jnp.concatenate([bm, bls])[None, :]                # (1, 32)

    sub = jnp.asarray(SUB_WEIGHTS, jnp.float32)[None, :]         # (1, 150)
    mul = jnp.asarray(MUL_WEIGHTS, jnp.float32)[None, :]         # (1, 150)

    # TODO(synk): optional v7x-only fp8 quantization of we2/wd2 (the two 512x512
    # matmuls) would further cut MXU time but needs accuracy validation.
    return {
        "sub": sub, "mul": mul,
        "we1": we1_full.astype(bf16), "be1": be1[None, :],
        "we2": we2.T.astype(bf16), "be2": be2[None, :],
        "wh": w_heads.astype(bf16), "bh": b_heads,
        "wd1": wd1_full.astype(bf16), "bd1": bd1[None, :],
        "wd2": wd2.T.astype(bf16), "bd2": bd2[None, :],
        "wd3": wd3.astype(jnp.float32), "bd3": bd3.reshape(1, 1),
    }


@jax.jit
def vae_forward(w, state, action, eps):
    """state: (B, S, 150) f32, action: (B, S) f32 (>0), eps: (B, S, L) f32."""
    B, S, _ = state.shape
    N = B * S
    s2 = state.reshape(N, STATE_DIM).astype(jnp.float32)
    a2 = action.reshape(N, 1).astype(jnp.float32)
    e2 = eps.reshape(N, LATENT_DIM).astype(jnp.float32)

    # ---- generation-aware, balanced row tiling ----
    max_tile, vmem_bytes, min_tiles = _tpu_tile_policy()
    num_tiles = max(_cdiv(N, max_tile), min_tiles)
    num_tiles = max(min(num_tiles, _cdiv(N, 8)), 1)
    tile_n = _round_up(_cdiv(N, num_tiles), 8)
    n_pad = num_tiles * tile_n

    if n_pad != N:
        pad = n_pad - N
        s2 = jnp.pad(s2, ((0, pad), (0, 0)))
        # pad action with 1.0 so log() on padded rows stays finite
        a2 = jnp.pad(a2, ((0, pad), (0, 0)), constant_values=1.0)
        e2 = jnp.pad(e2, ((0, pad), (0, 0)))

    grid = (num_tiles,)

    def row_spec(width):
        return pl.BlockSpec((tile_n, width), lambda i: (i, 0))

    def const_spec(shape):
        return pl.BlockSpec(shape, lambda i: (0, 0))

    in_specs = [
        row_spec(STATE_DIM),              # state
        row_spec(ACTION_DIM),             # raw action
        row_spec(LATENT_DIM),             # eps
        const_spec((1, STATE_DIM)),       # sub
        const_spec((1, STATE_DIM)),       # mul
        const_spec((PAD_IN, HIDDEN)),     # we1
        const_spec((1, HIDDEN)),          # be1
        const_spec((HIDDEN, HIDDEN)),     # we2
        const_spec((1, HIDDEN)),          # be2
        const_spec((HIDDEN, 2 * LATENT_DIM)),  # wh
        const_spec((1, 2 * LATENT_DIM)),  # bh
        const_spec((PAD_IN, HIDDEN)),     # wd1
        const_spec((1, HIDDEN)),          # bd1
        const_spec((HIDDEN, HIDDEN)),     # wd2
        const_spec((1, HIDDEN)),          # bd2
        const_spec((1, HIDDEN)),          # wd3
        const_spec((1, 1)),               # bd3
    ]
    out_specs = pl.BlockSpec((tile_n, OUT_W), lambda i: (i, 0))

    # advisory cost estimate for XLA scheduling
    macs_per_row = (2 * PAD_IN * HIDDEN + 2 * HIDDEN * HIDDEN
                    + HIDDEN * 2 * LATENT_DIM + HIDDEN)
    weight_bytes = (2 * (2 * PAD_IN * HIDDEN + 2 * HIDDEN * HIDDEN
                         + HIDDEN * 2 * LATENT_DIM)          # bf16 matmul weights
                    + 4 * (2 * STATE_DIM + 5 * HIDDEN
                           + 2 * LATENT_DIM + 1))            # f32 biases / consts
    cost = pl.CostEstimate(
        flops=2 * macs_per_row * n_pad,
        transcendentals=(LATENT_DIM + 2) * n_pad,            # log + 16*exp + tanh
        bytes_accessed=n_pad * 4 * (STATE_DIM + ACTION_DIM + LATENT_DIM + OUT_W)
                       + weight_bytes)

    out = pl.pallas_call(
        _vae_kernel,
        out_shape=jax.ShapeDtypeStruct((n_pad, OUT_W), jnp.float32),
        grid=grid,
        in_specs=in_specs,
        out_specs=out_specs,
        compiler_params=pltpu.CompilerParams(
            dimension_semantics=("parallel",),
            vmem_limit_bytes=vmem_bytes),
        cost_estimate=cost,
    )(s2, a2, e2, w["sub"], w["mul"], w["we1"], w["be1"], w["we2"], w["be2"],
      w["wh"], w["bh"], w["wd1"], w["bd1"], w["wd2"], w["bd2"],
      w["wd3"], w["bd3"])

    mean = out[:N, :LATENT_DIM]
    std = out[:N, LATENT_DIM:2 * LATENT_DIM]
    u = out[:N, 2 * LATENT_DIM:2 * LATENT_DIM + 1]

    return (u.reshape(B, S, ACTION_DIM),
            mean.reshape(B, S, LATENT_DIM),
            std.reshape(B, S, LATENT_DIM))


if __name__ == "__main__":
    key = jax.random.PRNGKey(0)
    kp, k_state, k_action, k_eps = jax.random.split(key, 4)

    params = init_params(kp)
    packed = prepare_weights(params)   # one-time weight packing (not per call)

    B, S = 2, 4
    sub = jnp.asarray(SUB_WEIGHTS, jnp.float32)
    # state fluctuates around the normalization offsets; action in [b_min, b_max]
    state = sub[None, None, :] + 10.0 * jax.random.normal(
        k_state, (B, S, STATE_DIM), jnp.float32)
    action = jax.random.uniform(k_action, (B, S), jnp.float32,
                                minval=B_MIN, maxval=B_MAX)
    eps = jax.random.normal(k_eps, (B, S, LATENT_DIM), jnp.float32)  # randn_like(std)

    u, mean, std = jax.block_until_ready(vae_forward(packed, state, action, eps))

    assert u.shape == (B, S, ACTION_DIM)
    assert mean.shape == (B, S, LATENT_DIM)
    assert std.shape == (B, S, LATENT_DIM)
    assert bool(jnp.isfinite(u).all() & jnp.isfinite(mean).all() & jnp.isfinite(std).all())
    assert bool((std > 0).all())
    print("KERNEL_OK")
</pallas_src>

<mosaic_0001>
module attributes {stable_mosaic.version = 11 : i64} {
  func.func @_vae_kernel(%arg0: i32, %arg1: memref<8x150xf32, #tpu.memory_space<vmem>>, %arg2: memref<8x1xf32, #tpu.memory_space<vmem>>, %arg3: memref<8x16xf32, #tpu.memory_space<vmem>>, %arg4: memref<1x150xf32, #tpu.memory_space<vmem>>, %arg5: memref<1x150xf32, #tpu.memory_space<vmem>>, %arg6: memref<256x512xbf16, #tpu.memory_space<vmem>>, %arg7: memref<1x512xf32, #tpu.memory_space<vmem>>, %arg8: memref<512x512xbf16, #tpu.memory_space<vmem>>, %arg9: memref<1x512xf32, #tpu.memory_space<vmem>>, %arg10: memref<512x32xbf16, #tpu.memory_space<vmem>>, %arg11: memref<1x32xf32, #tpu.memory_space<vmem>>, %arg12: memref<256x512xbf16, #tpu.memory_space<vmem>>, %arg13: memref<1x512xf32, #tpu.memory_space<vmem>>, %arg14: memref<512x512xbf16, #tpu.memory_space<vmem>>, %arg15: memref<1x512xf32, #tpu.memory_space<vmem>>, %arg16: memref<1x512xf32, #tpu.memory_space<vmem>>, %arg17: memref<1x1xf32, #tpu.memory_space<vmem>>, %arg18: memref<8x128xf32, #tpu.memory_space<vmem>>) attributes {dimension_semantics = [#tpu.dimension_semantics<parallel>], iteration_bounds = array<i64: 1>, scalar_prefetch = 0 : i64, scratch_operands = 0 : i64, tpu.core_type = #tpu.core_type<tc>, window_params = [{transform_indices = @transform_0, window_bounds = array<i64: 8, 150>}, {transform_indices = @transform_1, window_bounds = array<i64: 8, 1>}, {transform_indices = @transform_2, window_bounds = array<i64: 8, 16>}, {pipeline_mode = #tpu.pipeline_mode<synchronous>, transform_indices = @transform_3, window_bounds = array<i64: 1, 150>}, {pipeline_mode = #tpu.pipeline_mode<synchronous>, transform_indices = @transform_4, window_bounds = array<i64: 1, 150>}, {pipeline_mode = #tpu.pipeline_mode<synchronous>, transform_indices = @transform_5, window_bounds = array<i64: 256, 512>}, {pipeline_mode = #tpu.pipeline_mode<synchronous>, transform_indices = @transform_6, window_bounds = array<i64: 1, 512>}, {pipeline_mode = #tpu.pipeline_mode<synchronous>, transform_indices = @transform_7, window_bounds = array<i64: 512, 512>}, {pipeline_mode = #tpu.pipeline_mode<synchronous>, transform_indices = @transform_8, window_bounds = array<i64: 1, 512>}, {pipeline_mode = #tpu.pipeline_mode<synchronous>, transform_indices = @transform_9, window_bounds = array<i64: 512, 32>}, {pipeline_mode = #tpu.pipeline_mode<synchronous>, transform_indices = @transform_10, window_bounds = array<i64: 1, 32>}, {pipeline_mode = #tpu.pipeline_mode<synchronous>, transform_indices = @transform_11, window_bounds = array<i64: 256, 512>}, {pipeline_mode = #tpu.pipeline_mode<synchronous>, transform_indices = @transform_12, window_bounds = array<i64: 1, 512>}, {pipeline_mode = #tpu.pipeline_mode<synchronous>, transform_indices = @transform_13, window_bounds = array<i64: 512, 512>}, {pipeline_mode = #tpu.pipeline_mode<synchronous>, transform_indices = @transform_14, window_bounds = array<i64: 1, 512>}, {pipeline_mode = #tpu.pipeline_mode<synchronous>, transform_indices = @transform_15, window_bounds = array<i64: 1, 512>}, {pipeline_mode = #tpu.pipeline_mode<synchronous>, transform_indices = @transform_16, window_bounds = array<i64: 1, 1>}, {transform_indices = @transform_17, window_bounds = array<i64: 8, 128>}]} {
    %c0 = arith.constant 0 : index
    %c0_0 = arith.constant 0 : index
    %0 = vector.load %arg1[%c0, %c0_0] : memref<8x150xf32, #tpu.memory_space<vmem>>, vector<8x150xf32>
    %c0_1 = arith.constant 0 : index
    %c0_2 = arith.constant 0 : index
    %1 = vector.load %arg4[%c0_1, %c0_2] : memref<1x150xf32, #tpu.memory_space<vmem>>, vector<1x150xf32>
    %2 = vector.broadcast %1 : vector<1x150xf32> to vector<8x150xf32>
    %3 = arith.subf %0, %2 : vector<8x150xf32>
    %c0_3 = arith.constant 0 : index
    %c0_4 = arith.constant 0 : index
    %4 = vector.load %arg5[%c0_3, %c0_4] : memref<1x150xf32, #tpu.memory_space<vmem>>, vector<1x150xf32>
    %5 = vector.broadcast %4 : vector<1x150xf32> to vector<8x150xf32>
    %6 = arith.mulf %3, %5 : vector<8x150xf32>
    %c0_5 = arith.constant 0 : index
    %c0_6 = arith.constant 0 : index
    %7 = vector.load %arg2[%c0_5, %c0_6] : memref<8x1xf32, #tpu.memory_space<vmem>>, vector<8x1xf32>
    %8 = math.log %7 : vector<8x1xf32>
    %cst = arith.constant 9.21034049 : f32
    %9 = vector.broadcast %cst : f32 to vector<8x1xf32>
    %10 = arith.subf %8, %9 : vector<8x1xf32>
    %cst_7 = arith.constant 0.299194634 : f32
    %11 = vector.broadcast %cst_7 : f32 to vector<8x1xf32>
    %12 = arith.mulf %10, %11 : vector<8x1xf32>
    %cst_8 = arith.constant 1.000000e+00 : f32
    %13 = vector.broadcast %cst_8 : f32 to vector<8x1xf32>
    %14 = arith.subf %12, %13 : vector<8x1xf32>
    %cst_9 = arith.constant -1.000000e+00 : f32
    %cst_10 = arith.constant 1.000000e+00 : f32
    %15 = vector.broadcast %cst_9 : f32 to vector<8x1xf32>
    %16 = arith.maximumf %15, %14 : vector<8x1xf32>
    %17 = vector.broadcast %cst_10 : f32 to vector<8x1xf32>
    %18 = arith.minimumf %17, %16 : vector<8x1xf32>
    %cst_11 = arith.constant 0.000000e+00 : f32
    %19 = vector.broadcast %cst_11 : f32 to vector<8x105xf32>
    %20 = tpu.concatenate %6, %18, %19 in 1 : vector<8x150xf32>, vector<8x1xf32>, vector<8x105xf32> -> vector<8x256xf32>
    %21 = arith.truncf %20 : vector<8x256xf32> to vector<8x256xbf16>
    %c0_12 = arith.constant 0 : index
    %c0_13 = arith.constant 0 : index
    %22 = vector.load %arg6[%c0_12, %c0_13] : memref<256x512xbf16, #tpu.memory_space<vmem>>, vector<256x512xbf16>
    %cst_14 = arith.constant dense<0.000000e+00> : vector<8x512xf32>
    %23 = tpu.matmul %21, %22, %cst_14 {dimension_numbers = #tpu.dot_dimension_numbers<[1], [0], [0], [1], [0, 0, 1, 1], [], []>} : vector<8x256xbf16>, vector<256x512xbf16>, vector<8x512xf32> -> vector<8x512xf32>
    %c0_15 = arith.constant 0 : index
    %c0_16 = arith.constant 0 : index
    %24 = vector.load %arg7[%c0_15, %c0_16] : memref<1x512xf32, #tpu.memory_space<vmem>>, vector<1x512xf32>
    %25 = vector.broadcast %24 : vector<1x512xf32> to vector<8x512xf32>
    %26 = arith.addf %23, %25 : vector<8x512xf32>
    %cst_17 = arith.constant 0.000000e+00 : f32
    %27 = vector.broadcast %cst_17 : f32 to vector<8x512xf32>
    %28 = arith.maximumf %26, %27 : vector<8x512xf32>
    %29 = arith.truncf %28 : vector<8x512xf32> to vector<8x512xbf16>
    %c0_18 = arith.constant 0 : index
    %c0_19 = arith.constant 0 : index
    %30 = vector.load %arg8[%c0_18, %c0_19] : memref<512x512xbf16, #tpu.memory_space<vmem>>, vector<512x512xbf16>
    %cst_20 = arith.constant dense<0.000000e+00> : vector<8x512xf32>
    %31 = tpu.matmul %29, %30, %cst_20 {dimension_numbers = #tpu.dot_dimension_numbers<[1], [0], [0], [1], [0, 0, 1, 1], [], []>} : vector<8x512xbf16>, vector<512x512xbf16>, vector<8x512xf32> -> vector<8x512xf32>
    %c0_21 = arith.constant 0 : index
    %c0_22 = arith.constant 0 : index
    %32 = vector.load %arg9[%c0_21, %c0_22] : memref<1x512xf32, #tpu.memory_space<vmem>>, vector<1x512xf32>
    %33 = vector.broadcast %32 : vector<1x512xf32> to vector<8x512xf32>
    %34 = arith.addf %31, %33 : vector<8x512xf32>
    %cst_23 = arith.constant 0.000000e+00 : f32
    %35 = vector.broadcast %cst_23 : f32 to vector<8x512xf32>
    %36 = arith.maximumf %34, %35 : vector<8x512xf32>
    %37 = arith.truncf %36 : vector<8x512xf32> to vector<8x512xbf16>
    %c0_24 = arith.constant 0 : index
    %c0_25 = arith.constant 0 : index
    %38 = vector.load %arg10[%c0_24, %c0_25] : memref<512x32xbf16, #tpu.memory_space<vmem>>, vector<512x32xbf16>
    %cst_26 = arith.constant dense<0.000000e+00> : vector<8x32xf32>
    %39 = tpu.matmul %37, %38, %cst_26 {dimension_numbers = #tpu.dot_dimension_numbers<[1], [0], [0], [1], [0, 0, 1, 1], [], []>} : vector<8x512xbf16>, vector<512x32xbf16>, vector<8x32xf32> -> vector<8x32xf32>
    %c0_27 = arith.constant 0 : index
    %c0_28 = arith.constant 0 : index
    %40 = vector.load %arg11[%c0_27, %c0_28] : memref<1x32xf32, #tpu.memory_space<vmem>>, vector<1x32xf32>
    %41 = vector.broadcast %40 : vector<1x32xf32> to vector<8x32xf32>
    %42 = arith.addf %39, %41 : vector<8x32xf32>
    %43 = vector.extract_strided_slice %42 {offsets = [0, 0], sizes = [8, 16], strides = [1, 1]} : vector<8x32xf32> to vector<8x16xf32>
    %44 = vector.extract_strided_slice %42 {offsets = [0, 16], sizes = [8, 16], strides = [1, 1]} : vector<8x32xf32> to vector<8x16xf32>
    %cst_29 = arith.constant -4.000000e+00 : f32
    %cst_30 = arith.constant 1.500000e+01 : f32
    %45 = vector.broadcast %cst_29 : f32 to vector<8x16xf32>
    %46 = arith.maximumf %45, %44 : vector<8x16xf32>
    %47 = vector.broadcast %cst_30 : f32 to vector<8x16xf32>
    %48 = arith.minimumf %47, %46 : vector<8x16xf32>
    %49 = math.exp %48 : vector<8x16xf32>
    %c0_31 = arith.constant 0 : index
    %c0_32 = arith.constant 0 : index
    %50 = vector.load %arg3[%c0_31, %c0_32] : memref<8x16xf32, #tpu.memory_space<vmem>>, vector<8x16xf32>
    %51 = arith.mulf %49, %50 : vector<8x16xf32>
    %52 = arith.addf %43, %51 : vector<8x16xf32>
    %cst_33 = arith.constant 0.000000e+00 : f32
    %53 = vector.broadcast %cst_33 : f32 to vector<8x90xf32>
    %54 = tpu.concatenate %6, %52, %53 in 1 : vector<8x150xf32>, vector<8x16xf32>, vector<8x90xf32> -> vector<8x256xf32>
    %55 = arith.truncf %54 : vector<8x256xf32> to vector<8x256xbf16>
    %c0_34 = arith.constant 0 : index
    %c0_35 = arith.constant 0 : index
    %56 = vector.load %arg12[%c0_34, %c0_35] : memref<256x512xbf16, #tpu.memory_space<vmem>>, vector<256x512xbf16>
    %cst_36 = arith.constant dense<0.000000e+00> : vector<8x512xf32>
    %57 = tpu.matmul %55, %56, %cst_36 {dimension_numbers = #tpu.dot_dimension_numbers<[1], [0], [0], [1], [0, 0, 1, 1], [], []>} : vector<8x256xbf16>, vector<256x512xbf16>, vector<8x512xf32> -> vector<8x512xf32>
    %c0_37 = arith.constant 0 : index
    %c0_38 = arith.constant 0 : index
    %58 = vector.load %arg13[%c0_37, %c0_38] : memref<1x512xf32, #tpu.memory_space<vmem>>, vector<1x512xf32>
    %59 = vector.broadcast %58 : vector<1x512xf32> to vector<8x512xf32>
    %60 = arith.addf %57, %59 : vector<8x512xf32>
    %cst_39 = arith.constant 0.000000e+00 : f32
    %61 = vector.broadcast %cst_39 : f32 to vector<8x512xf32>
    %62 = arith.maximumf %60, %61 : vector<8x512xf32>
    %63 = arith.truncf %62 : vector<8x512xf32> to vector<8x512xbf16>
    %c0_40 = arith.constant 0 : index
    %c0_41 = arith.constant 0 : index
    %64 = vector.load %arg14[%c0_40, %c0_41] : memref<512x512xbf16, #tpu.memory_space<vmem>>, vector<512x512xbf16>
    %cst_42 = arith.constant dense<0.000000e+00> : vector<8x512xf32>
    %65 = tpu.matmul %63, %64, %cst_42 {dimension_numbers = #tpu.dot_dimension_numbers<[1], [0], [0], [1], [0, 0, 1, 1], [], []>} : vector<8x512xbf16>, vector<512x512xbf16>, vector<8x512xf32> -> vector<8x512xf32>
    %c0_43 = arith.constant 0 : index
    %c0_44 = arith.constant 0 : index
    %66 = vector.load %arg15[%c0_43, %c0_44] : memref<1x512xf32, #tpu.memory_space<vmem>>, vector<1x512xf32>
    %67 = vector.broadcast %66 : vector<1x512xf32> to vector<8x512xf32>
    %68 = arith.addf %65, %67 : vector<8x512xf32>
    %cst_45 = arith.constant 0.000000e+00 : f32
    %69 = vector.broadcast %cst_45 : f32 to vector<8x512xf32>
    %70 = arith.maximumf %68, %69 : vector<8x512xf32>
    %c0_46 = arith.constant 0 : index
    %c0_47 = arith.constant 0 : index
    %71 = vector.load %arg16[%c0_46, %c0_47] : memref<1x512xf32, #tpu.memory_space<vmem>>, vector<1x512xf32>
    %72 = vector.broadcast %71 : vector<1x512xf32> to vector<8x512xf32>
    %73 = arith.mulf %70, %72 : vector<8x512xf32>
    %cst_48 = arith.constant dense<0.000000e+00> : vector<8xf32>
    %74 = vector.multi_reduction <add>, %73, %cst_48 [1] : vector<8x512xf32> to vector<8xf32>
    %75 = vector.shape_cast %74 : vector<8xf32> to vector<8x1xf32>
    %c0_49 = arith.constant 0 : index
    %c0_50 = arith.constant 0 : index
    %76 = vector.load %arg17[%c0_49, %c0_50] : memref<1x1xf32, #tpu.memory_space<vmem>>, vector<1x1xf32>
    %77 = vector.broadcast %76 : vector<1x1xf32> to vector<8x1xf32>
    %78 = arith.addf %75, %77 : vector<8x1xf32>
    %79 = math.tanh %78 : vector<8x1xf32>
    %cst_51 = arith.constant 1.000000e+00 : f32
    %80 = vector.broadcast %cst_51 : f32 to vector<8x1xf32>
    %81 = arith.mulf %80, %79 : vector<8x1xf32>
    %c0_52 = arith.constant 0 : index
    %c0_53 = arith.constant 0 : index
    %82 = vector.load %arg18[%c0_52, %c0_53] : memref<8x128xf32, #tpu.memory_space<vmem>>, vector<8x16xf32>
    tpu.vector_store %arg18[%c0_52, %c0_53], %43 {strides = array<i32>} : memref<8x128xf32, #tpu.memory_space<vmem>>, vector<8x16xf32>,
    %c0_54 = arith.constant 0 : index
    %c16 = arith.constant 16 : index
    %83 = vector.load %arg18[%c0_54, %c16] : memref<8x128xf32, #tpu.memory_space<vmem>>, vector<8x16xf32>
    tpu.vector_store %arg18[%c0_54, %c16], %49 {strides = array<i32>} : memref<8x128xf32, #tpu.memory_space<vmem>>, vector<8x16xf32>,
    %84 = vector.shape_cast %81 : vector<8x1xf32> to vector<8x1xf32>
    %85 = vector.broadcast %84 : vector<8x1xf32> to vector<8x96xf32>
    %c0_55 = arith.constant 0 : index
    %c32 = arith.constant 32 : index
    %86 = vector.load %arg18[%c0_55, %c32] : memref<8x128xf32, #tpu.memory_space<vmem>>, vector<8x96xf32>
    tpu.vector_store %arg18[%c0_55, %c32], %85 {strides = array<i32>} : memref<8x128xf32, #tpu.memory_space<vmem>>, vector<8x96xf32>,
    return
  }
  func.func @transform_0(%arg0: i32) -> (i32, i32) {
    %c0_i32 = arith.constant 0 : i32
    %c0_i32_0 = arith.constant 0 : i32
    return %arg0, %c0_i32 : i32, i32
  }
  func.func @transform_1(%arg0: i32) -> (i32, i32) {
    %c0_i32 = arith.constant 0 : i32
    %c0_i32_0 = arith.constant 0 : i32
    return %arg0, %c0_i32 : i32, i32
  }
  func.func @transform_2(%arg0: i32) -> (i32, i32) {
    %c0_i32 = arith.constant 0 : i32
    %c0_i32_0 = arith.constant 0 : i32
    return %arg0, %c0_i32 : i32, i32
  }
  func.func @transform_3(%arg0: i32) -> (i32, i32) {
    %c0_i32 = arith.constant 0 : i32
    %c0_i32_0 = arith.constant 0 : i32
    %c0_i32_1 = arith.constant 0 : i32
    return %c0_i32, %c0_i32_0 : i32, i32
  }
  func.func @transform_4(%arg0: i32) -> (i32, i32) {
    %c0_i32 = arith.constant 0 : i32
    %c0_i32_0 = arith.constant 0 : i32
    %c0_i32_1 = arith.constant 0 : i32
    return %c0_i32, %c0_i32_0 : i32, i32
  }
  func.func @transform_5(%arg0: i32) -> (i32, i32) {
    %c0_i32 = arith.constant 0 : i32
    %c0_i32_0 = arith.constant 0 : i32
    %c0_i32_1 = arith.constant 0 : i32
    return %c0_i32, %c0_i32_0 : i32, i32
  }
  func.func @transform_6(%arg0: i32) -> (i32, i32) {
    %c0_i32 = arith.constant 0 : i32
    %c0_i32_0 = arith.constant 0 : i32
    %c0_i32_1 = arith.constant 0 : i32
    return %c0_i32, %c0_i32_0 : i32, i32
  }
  func.func @transform_7(%arg0: i32) -> (i32, i32) {
    %c0_i32 = arith.constant 0 : i32
    %c0_i32_0 = arith.constant 0 : i32
    %c0_i32_1 = arith.constant 0 : i32
    return %c0_i32, %c0_i32_0 : i32, i32
  }
  func.func @transform_8(%arg0: i32) -> (i32, i32) {
    %c0_i32 = arith.constant 0 : i32
    %c0_i32_0 = arith.constant 0 : i32
    %c0_i32_1 = arith.constant 0 : i32
    return %c0_i32, %c0_i32_0 : i32, i32
  }
  func.func @transform_9(%arg0: i32) -> (i32, i32) {
    %c0_i32 = arith.constant 0 : i32
    %c0_i32_0 = arith.constant 0 : i32
    %c0_i32_1 = arith.constant 0 : i32
    return %c0_i32, %c0_i32_0 : i32, i32
  }
  func.func @transform_10(%arg0: i32) -> (i32, i32) {
    %c0_i32 = arith.constant 0 : i32
    %c0_i32_0 = arith.constant 0 : i32
    %c0_i32_1 = arith.constant 0 : i32
    return %c0_i32, %c0_i32_0 : i32, i32
  }
  func.func @transform_11(%arg0: i32) -> (i32, i32) {
    %c0_i32 = arith.constant 0 : i32
    %c0_i32_0 = arith.constant 0 : i32
    %c0_i32_1 = arith.constant 0 : i32
    return %c0_i32, %c0_i32_0 : i32, i32
  }
  func.func @transform_12(%arg0: i32) -> (i32, i32) {
    %c0_i32 = arith.constant 0 : i32
    %c0_i32_0 = arith.constant 0 : i32
    %c0_i32_1 = arith.constant 0 : i32
    return %c0_i32, %c0_i32_0 : i32, i32
  }
  func.func @transform_13(%arg0: i32) -> (i32, i32) {
    %c0_i32 = arith.constant 0 : i32
    %c0_i32_0 = arith.constant 0 : i32
    %c0_i32_1 = arith.constant 0 : i32
    return %c0_i32, %c0_i32_0 : i32, i32
  }
  func.func @transform_14(%arg0: i32) -> (i32, i32) {
    %c0_i32 = arith.constant 0 : i32
    %c0_i32_0 = arith.constant 0 : i32
    %c0_i32_1 = arith.constant 0 : i32
    return %c0_i32, %c0_i32_0 : i32, i32
  }
  func.func @transform_15(%arg0: i32) -> (i32, i32) {
    %c0_i32 = arith.constant 0 : i32
    %c0_i32_0 = arith.constant 0 : i32
    %c0_i32_1 = arith.constant 0 : i32
    return %c0_i32, %c0_i32_0 : i32, i32
  }
  func.func @transform_16(%arg0: i32) -> (i32, i32) {
    %c0_i32 = arith.constant 0 : i32
    %c0_i32_0 = arith.constant 0 : i32
    %c0_i32_1 = arith.constant 0 : i32
    return %c0_i32, %c0_i32_0 : i32, i32
  }
  func.func @transform_17(%arg0: i32) -> (i32, i32) {
    %c0_i32 = arith.constant 0 : i32
    %c0_i32_0 = arith.constant 0 : i32
    return %arg0, %c0_i32 : i32, i32
  }
}

</mosaic_0001>

<llo_original>
// kernel: vae_forward.1
$region0: #{vae_forward.1}
  #allocation0 [shape = 'u32[]', space=smem, size = 0x4, offset = 0x4, fixed_abs, tag = 'smem constant byte address 0x4 - core index']
  #allocation1 [shape = 'u32[144,128]{1,0:T(1,128)}', space=vmem, size = 0x12000, scoped, tag = 'internal scratch']
  #allocation2 [shape = 'f32[1,1]{1,0:T(1,128)S(1)}', space=vmem, size = 0x200, scoped, tag = 'scoped memory for vae_forward.1']
  %s0 = inlined_call_operand.vmem [shape: f32[8,150], index: 0, kind: input, shape index: {}]
  %s1 = inlined_call_operand.vmem [shape: f32[8,1], index: 1, kind: input, shape index: {}]
  %s2 = inlined_call_operand.vmem [shape: f32[8,16], index: 2, kind: input, shape index: {}]
  %s3 = inlined_call_operand.vmem [shape: f32[1,150], index: 3, kind: input, shape index: {}]
  %s4 = inlined_call_operand.vmem [shape: f32[1,150], index: 4, kind: input, shape index: {}]
  %s5 = inlined_call_operand.hbm [shape: bf16[256,512], index: 5, kind: input, shape index: {}]
  %s6 = inlined_call_operand.vmem [shape: f32[1,512], index: 6, kind: input, shape index: {}]
  %s7 = inlined_call_operand.hbm [shape: bf16[512,512], index: 7, kind: input, shape index: {}]
  %s8 = inlined_call_operand.vmem [shape: f32[1,512], index: 8, kind: input, shape index: {}]
  %s9 = inlined_call_operand.vmem [shape: bf16[512,32], index: 9, kind: input, shape index: {}]
  %s10 = inlined_call_operand.vmem [shape: f32[1,32], index: 10, kind: input, shape index: {}]
  %s11 = inlined_call_operand.hbm [shape: bf16[256,512], index: 11, kind: input, shape index: {}]
  %s12 = inlined_call_operand.vmem [shape: f32[1,512], index: 12, kind: input, shape index: {}]
  %s13 = inlined_call_operand.hbm [shape: bf16[512,512], index: 13, kind: input, shape index: {}]
  %s14 = inlined_call_operand.vmem [shape: f32[1,512], index: 14, kind: input, shape index: {}]
  %s15 = inlined_call_operand.vmem [shape: f32[1,512], index: 15, kind: input, shape index: {}]
  %s16 = inlined_call_operand.<no memory space> [shape: f32[1,1], index: 16, kind: input, shape index: {}]
  %s17 = inlined_call_operand.vmem [shape: f32[8,128], index: 17, kind: output, shape index: {}]
  %s18 = sld [smem:[#allocation0]]
  $region94: #{vae_forward.1} parent=0
    _
  %s20 = ssub.s32 1, %s18
  %s21 = scalar_select 0, %s20, %s18
  %v22 = vstv %s16
  %23 = vst [vmem:[#allocation2] sm:$0x1] %v22
  $region1: #{vae_forward.1} parent=0
    #allocation3 [shape = 'u8[262144]{0}', space=vmem, size = 0x40000, scoped, tag = 'input window, operand 5, single buffered']
    #allocation4 [shape = 's32[1]{0}', space=sflag, size = 0x4, scoped, tag = 'scoped memory for vae_forward.1']
    #allocation5 [shape = 'u8[524288]{0}', space=vmem, size = 0x80000, scoped, tag = 'input window, operand 7, single buffered']
    #allocation6 [shape = 's32[1]{0}', space=sflag, size = 0x4, scoped, tag = 'scoped memory for vae_forward.1']
    #allocation7 [shape = 'u8[262144]{0}', space=vmem, size = 0x40000, scoped, tag = 'input window, operand 11, single buffered']
    #allocation8 [shape = 'u8[524288]{0}', space=vmem, size = 0x80000, scoped, tag = 'input window, operand 13, single buffered']
    #allocation9 [shape = 's32[1]{0}', space=sflag, size = 0x4, scoped, tag = 'scoped memory for vae_forward.1']
    %24 = vsyncpa [#allocation4], 0
    %25 = vsyncpa [#allocation6], 0
    %26 = vsyncpa [#allocation9], 0
    // Predicated region
    $region2: #{vae_forward.1} parent=1 // pred_check
      _
    $region3: #{vae_forward.1} parent=1 // pred_check_branch
      %28 = sbr.rel (0) target = $region5
    $region4: #{vae_forward.1} parent=1 // pred_region
      _
    $region5: #{vae_forward.1} parent=1 // pred_fallthru
      _
    // Predicated region
    $region6: #{vae_forward.1} parent=1 // pred_check
      _
    $region7: #{vae_forward.1} parent=1 // pred_check_branch
      %30 = sbr.rel (0) target = $region9
    $region8: #{vae_forward.1} parent=1 // pred_region
      _
    $region9: #{vae_forward.1} parent=1 // pred_fallthru
      _
    // Predicated region
    $region10: #{vae_forward.1} parent=1 // pred_check
      _
    $region11: #{vae_forward.1} parent=1 // pred_check_branch
      %32 = sbr.rel (0) target = $region13
    $region12: #{vae_forward.1} parent=1 // pred_region
      _
    $region13: #{vae_forward.1} parent=1 // pred_fallthru
      _
    // Predicated region
    $region14: #{vae_forward.1} parent=1 // pred_check
      _
    $region15: #{vae_forward.1} parent=1 // pred_check_branch
      %34 = sbr.rel (0) target = $region17
    $region16: #{vae_forward.1} parent=1 // pred_region
      _
    $region17: #{vae_forward.1} parent=1 // pred_fallthru
      _
    // Predicated region
    $region18: #{vae_forward.1} parent=1 // pred_check
      _
    $region19: #{vae_forward.1} parent=1 // pred_check_branch
      %36 = sbr.rel (0) target = $region21
    $region20: #{vae_forward.1} parent=1 // pred_region
      _
    $region21: #{vae_forward.1} parent=1 // pred_fallthru
      _
    // Predicated region
    $region22: #{vae_forward.1} parent=1 // pred_check
      _
    $region23: #{vae_forward.1} parent=1 // pred_check_branch
      %38 = sbr.rel (0) target = $region25
    $region24: #{vae_forward.1} parent=1 // pred_region
      %s40 = ssub.s32 8192, 8192
      %41 = vsyncadd [#allocation4], %s40
      %s42 = sshll.u32 [#allocation3], 4
      %s43 = int_to_ptr.vmem [resolvable:$true] %s42
      %48 = dma.hbm_to_vmem [thread:$0]  %s5, 8192, %s43, [#allocation4], 256, 256, 16
    $region25: #{vae_forward.1} parent=1 // pred_fallthru
      _
    // Predicated region
    $region26: #{vae_forward.1} parent=1 // pred_check
      _
    $region27: #{vae_forward.1} parent=1 // pred_check_branch
      %50 = sbr.rel (0) target = $region29
    $region28: #{vae_forward.1} parent=1 // pred_region
      _
    $region29: #{vae_forward.1} parent=1 // pred_fallthru
      _
    // Predicated region
    $region30: #{vae_forward.1} parent=1 // pred_check
      _
    $region31: #{vae_forward.1} parent=1 // pred_check_branch
      %52 = sbr.rel (0) target = $region33
    $region32: #{vae_forward.1} parent=1 // pred_region
      %s54 = ssub.s32 16384, 16384
      %55 = vsyncadd [#allocation6], %s54
      %s56 = sshll.u32 [#allocation5], 4
      %s57 = int_to_ptr.vmem [resolvable:$true] %s56
      %62 = dma.hbm_to_vmem [thread:$0]  %s7, 16384, %s57, [#allocation6], 256, 256, 16
    $region33: #{vae_forward.1} parent=1 // pred_fallthru
      _
    // Predicated region
    $region34: #{vae_forward.1} parent=1 // pred_check
      _
    $region35: #{vae_forward.1} parent=1 // pred_check_branch
      %64 = sbr.rel (0) target = $region37
    $region36: #{vae_forward.1} parent=1 // pred_region
      _
    $region37: #{vae_forward.1} parent=1 // pred_fallthru
      _
    // Predicated region
    $region38: #{vae_forward.1} parent=1 // pred_check
      _
    $region39: #{vae_forward.1} parent=1 // pred_check_branch
      %66 = sbr.rel (0) target = $region41
    $region40: #{vae_forward.1} parent=1 // pred_region
      _
    $region41: #{vae_forward.1} parent=1 // pred_fallthru
      _
    // Predicated region
    $region42: #{vae_forward.1} parent=1 // pred_check
      _
    $region43: #{vae_forward.1} parent=1 // pred_check_branch
      %68 = sbr.rel (0) target = $region45
    $region44: #{vae_forward.1} parent=1 // pred_region
      _
    $region45: #{vae_forward.1} parent=1 // pred_fallthru
      _
    // Predicated region
    $region46: #{vae_forward.1} parent=1 // pred_check
      _
    $region47: #{vae_forward.1} parent=1 // pred_check_branch
      %70 = sbr.rel (0) target = $region49
    $region48: #{vae_forward.1} parent=1 // pred_region
      %s72 = ssub.s32 8192, 8192
      %73 = vsyncadd [#allocation6], %s72
      %s74 = sshll.u32 [#allocation7], 4
      %s75 = int_to_ptr.vmem [resolvable:$true] %s74
      %80 = dma.hbm_to_vmem [thread:$0]  %s11, 8192, %s75, [#allocation6], 256, 256, 16
    $region49: #{vae_forward.1} parent=1 // pred_fallthru
      _
    // Predicated region
    $region50: #{vae_forward.1} parent=1 // pred_check
      _
    $region51: #{vae_forward.1} parent=1 // pred_check_branch
      %82 = sbr.rel (0) target = $region53
    $region52: #{vae_forward.1} parent=1 // pred_region
      _
    $region53: #{vae_forward.1} parent=1 // pred_fallthru
      _
    // Predicated region
    $region54: #{vae_forward.1} parent=1 // pred_check
      _
    $region55: #{vae_forward.1} parent=1 // pred_check_branch
      %84 = sbr.rel (0) target = $region57
    $region56: #{vae_forward.1} parent=1 // pred_region
      %s86 = ssub.s32 16384, 16384
      %87 = vsyncadd [#allocation9], %s86
      %s88 = sshll.u32 [#allocation8], 4
      %s89 = int_to_ptr.vmem [resolvable:$true] %s88
      %94 = dma.hbm_to_vmem [thread:$0]  %s13, 16384, %s89, [#allocation9], 256, 256, 16
    $region57: #{vae_forward.1} parent=1 // pred_fallthru
      _
    // Predicated region
    $region58: #{vae_forward.1} parent=1 // pred_check
      _
    $region59: #{vae_forward.1} parent=1 // pred_check_branch
      %96 = sbr.rel (0) target = $region61
    $region60: #{vae_forward.1} parent=1 // pred_region
      _
    $region61: #{vae_forward.1} parent=1 // pred_fallthru
      _
    // Predicated region
    $region62: #{vae_forward.1} parent=1 // pred_check
      _
    $region63: #{vae_forward.1} parent=1 // pred_check_branch
      %98 = sbr.rel (0) target = $region65
    $region64: #{vae_forward.1} parent=1 // pred_region
      _
    $region65: #{vae_forward.1} parent=1 // pred_fallthru
      _
    // Predicated region
    $region66: #{vae_forward.1} parent=1 // pred_check
      _
    $region67: #{vae_forward.1} parent=1 // pred_check_branch
      %100 = sbr.rel (0) target = $region69
    $region68: #{vae_forward.1} parent=1 // pred_region
      _
    $region69: #{vae_forward.1} parent=1 // pred_fallthru
      _
    // Predicated region
    $region70: #{vae_forward.1} parent=1 // pred_check
      _
    $region71: #{vae_forward.1} parent=1 // pred_check_branch
      %102 = sbr.rel (0) target = $region73
    $region72: #{vae_forward.1} parent=1 // pred_region
      %103 = dma.done [#allocation4], 8192
    $region73: #{vae_forward.1} parent=1 // pred_fallthru
      _
    // Predicated region
    $region74: #{vae_forward.1} parent=1 // pred_check
      _
    $region75: #{vae_forward.1} parent=1 // pred_check_branch
      %105 = sbr.rel (0) target = $region77
    $region76: #{vae_forward.1} parent=1 // pred_region
      %106 = dma.done [#allocation6], 16384
    $region77: #{vae_forward.1} parent=1 // pred_fallthru
      _
    // Predicated region
    $region78: #{vae_forward.1} parent=1 // pred_check
      _
    $region79: #{vae_forward.1} parent=1 // pred_check_branch
      %108 = sbr.rel (0) target = $region81
    $region80: #{vae_forward.1} parent=1 // pred_region
      %109 = dma.done [#allocation6], 8192
    $region81: #{vae_forward.1} parent=1 // pred_fallthru
      _
    // Predicated region
    $region82: #{vae_forward.1} parent=1 // pred_check
      _
    $region83: #{vae_forward.1} parent=1 // pred_check_branch
      %111 = sbr.rel (0) target = $region85
    $region84: #{vae_forward.1} parent=1 // pred_region
      %112 = dma.done [#allocation9], 16384
    $region85: #{vae_forward.1} parent=1 // pred_fallthru
      _
    %v114 = vld [vmem:[%s0] sm:$0xff]
    %v115 = vld [vmem:[%s0 + $0x8] sm:$0xff]
    %v116 = vld [vmem:[%s3] sm:$0x3]
    %v118 = vlaneseq
    %v119 = vshrl.u32 %v118, 7
    %v120 = vsub.s32 0, %v119
    %v121 = vrot.slane %v116, %v120
    %v122 = vlaneseq
    %v123 = vshrl.u32 %v122, 7
    %v124 = vsub.s32 1, %v123
    %v125 = vrot.slane %v116, %v124
    %v128 = vsub.f32 %v114, %v121
    %v129 = vsub.f32 %v115, %v125
    %v130 = vld [vmem:[%s4] sm:$0x3]
    %v132 = vlaneseq
    %v133 = vshrl.u32 %v132, 7
    %v134 = vsub.s32 0, %v133
    %v135 = vrot.slane %v130, %v134
    %v136 = vlaneseq
    %v137 = vshrl.u32 %v136, 7
    %v138 = vsub.s32 1, %v137
    %v139 = vrot.slane %v130, %v138
    %v142 = vmul.f32 %v128, %v135
    %v143 = vmul.f32 %v129, %v139
    %v144 = vld [vmem:[%s1] sm:$0xff]
    %v145 = vlog2.pop %v144
    %v146 = vmul.f32 %v145, 0.6931472
    %v147 = vsub.f32 %v146, 9.2103405
    %v148 = vmul.f32 %v147, 0.29919463
    %v149 = vsub.f32 %v148, 1.0
    %v150 = vmax.f32 %v149, -1.0
    %v151 = vmin.f32 %v150, 1.0
    %153 = vrot.lane.b32.xlu0 %v151, 22
    %v154 = vpop.permute.xlu0 %153
    %vm156 = vcmask 179200
    %v157 = vsel %vm156, %v143, %v154
    %vm158 = vcmask 187392
    %v159 = vsel %vm158, %v157, 0.0
    %v160 = vpack.c.bf16 %v142, %v142
    %v161 = vpack.c.bf16 %v159, %v159
    %v162 = vld [vmem:[#allocation3] sm:$0xff]
    %v163 = vld [vmem:[#allocation3 + $0x8] sm:$0xff]
    %v164 = vld [vmem:[#allocation3 + $0x10] sm:$0xff]
    %v165 = vld [vmem:[#allocation3 + $0x18] sm:$0xff]
    %v166 = vld [vmem:[#allocation3 + $0x20] sm:$0xff]
    %v167 = vld [vmem:[#allocation3 + $0x28] sm:$0xff]
    %v168 = vld [vmem:[#allocation3 + $0x30] sm:$0xff]
    %v169 = vld [vmem:[#allocation3 + $0x38] sm:$0xff]
    %v170 = vld [vmem:[#allocation3 + $0x40] sm:$0xff]
    %v171 = vld [vmem:[#allocation3 + $0x48] sm:$0xff]
    %v172 = vld [vmem:[#allocation3 + $0x50] sm:$0xff]
    %v173 = vld [vmem:[#allocation3 + $0x58] sm:$0xff]
    %v174 = vld [vmem:[#allocation3 + $0x60] sm:$0xff]
    %v175 = vld [vmem:[#allocation3 + $0x68] sm:$0xff]
    %v176 = vld [vmem:[#allocation3 + $0x70] sm:$0xff]
    %v177 = vld [vmem:[#allocation3 + $0x78] sm:$0xff]
    %v178 = vld [vmem:[#allocation3 + $0x80] sm:$0xff]
    %v179 = vld [vmem:[#allocation3 + $0x88] sm:$0xff]
    %v180 = vld [vmem:[#allocation3 + $0x90] sm:$0xff]
    %v181 = vld [vmem:[#allocation3 + $0x98] sm:$0xff]
    %v182 = vld [vmem:[#allocation3 + $0xa0] sm:$0xff]
    %v183 = vld [vmem:[#allocation3 + $0xa8] sm:$0xff]
    %v184 = vld [vmem:[#allocation3 + $0xb0] sm:$0xff]
    %v185 = vld [vmem:[#allocation3 + $0xb8] sm:$0xff]
    %v186 = vld [vmem:[#allocation3 + $0xc0] sm:$0xff]
    %v187 = vld [vmem:[#allocation3 + $0xc8] sm:$0xff]
    %v188 = vld [vmem:[#allocation3 + $0xd0] sm:$0xff]
    %v189 = vld [vmem:[#allocation3 + $0xd8] sm:$0xff]
    %v190 = vld [vmem:[#allocation3 + $0xe0] sm:$0xff]
    %v191 = vld [vmem:[#allocation3 + $0xe8] sm:$0xff]
    %v192 = vld [vmem:[#allocation3 + $0xf0] sm:$0xff]
    %v193 = vld [vmem:[#allocation3 + $0xf8] sm:$0xff]
    %v194 = vld [vmem:[#allocation3 + $0x100] sm:$0xff]
    %v195 = vld [vmem:[#allocation3 + $0x108] sm:$0xff]
    %v196 = vld [vmem:[#allocation3 + $0x110] sm:$0xff]
    %v197 = vld [vmem:[#allocation3 + $0x118] sm:$0xff]
    %v198 = vld [vmem:[#allocation3 + $0x120] sm:$0xff]
    %v199 = vld [vmem:[#allocation3 + $0x128] sm:$0xff]
    %v200 = vld [vmem:[#allocation3 + $0x130] sm:$0xff]
    %v201 = vld [vmem:[#allocation3 + $0x138] sm:$0xff]
    %v202 = vld [vmem:[#allocation3 + $0x140] sm:$0xff]
    %v203 = vld [vmem:[#allocation3 + $0x148] sm:$0xff]
    %v204 = vld [vmem:[#allocation3 + $0x150] sm:$0xff]
    %v205 = vld [vmem:[#allocation3 + $0x158] sm:$0xff]
    %v206 = vld [vmem:[#allocation3 + $0x160] sm:$0xff]
    %v207 = vld [vmem:[#allocation3 + $0x168] sm:$0xff]
    %v208 = vld [vmem:[#allocation3 + $0x170] sm:$0xff]
    %v209 = vld [vmem:[#allocation3 + $0x178] sm:$0xff]
    %v210 = vld [vmem:[#allocation3 + $0x180] sm:$0xff]
    %v211 = vld [vmem:[#allocation3 + $0x188] sm:$0xff]
    %v212 = vld [vmem:[#allocation3 + $0x190] sm:$0xff]
    %v213 = vld [vmem:[#allocation3 + $0x198] sm:$0xff]
    %v214 = vld [vmem:[#allocation3 + $0x1a0] sm:$0xff]
    %v215 = vld [vmem:[#allocation3 + $0x1a8] sm:$0xff]
    %v216 = vld [vmem:[#allocation3 + $0x1b0] sm:$0xff]
    %v217 = vld [vmem:[#allocation3 + $0x1b8] sm:$0xff]
    %v218 = vld [vmem:[#allocation3 + $0x1c0] sm:$0xff]
    %v219 = vld [vmem:[#allocation3 + $0x1c8] sm:$0xff]
    %v220 = vld [vmem:[#allocation3 + $0x1d0] sm:$0xff]
    %v221 = vld [vmem:[#allocation3 + $0x1d8] sm:$0xff]
    %v222 = vld [vmem:[#allocation3 + $0x1e0] sm:$0xff]
    %v223 = vld [vmem:[#allocation3 + $0x1e8] sm:$0xff]
    %v224 = vld [vmem:[#allocation3 + $0x1f0] sm:$0xff]
    %v225 = vld [vmem:[#allocation3 + $0x1f8] sm:$0xff]
    %v226 = vld [vmem:[%s6] sm:$0xf]
    %v228 = vlaneseq
    %v229 = vshrl.u32 %v228, 7
    %v230 = vsub.s32 0, %v229
    %v231 = vrot.slane %v226, %v230
    %v232 = vlaneseq
    %v233 = vshrl.u32 %v232, 7
    %v234 = vsub.s32 1, %v233
    %v235 = vrot.slane %v226, %v234
    %v236 = vlaneseq
    %v237 = vshrl.u32 %v236, 7
    %v238 = vsub.s32 2, %v237
    %v239 = vrot.slane %v226, %v238
    %v240 = vlaneseq
    %v241 = vshrl.u32 %v240, 7
    %v242 = vsub.s32 3, %v241
    %v243 = vrot.slane %v226, %v242
    %v312 = vunpack.c.l.b16 %v162
    %v313 = vunpack.c.h.b16 %v162
    %v314 = vunpack.c.l.b16 %v163
    %v315 = vunpack.c.h.b16 %v163
    %v316 = vunpack.c.l.b16 %v164
    %v317 = vunpack.c.h.b16 %v164
    %v318 = vunpack.c.l.b16 %v165
    %v319 = vunpack.c.h.b16 %v165
    %v320 = vunpack.c.l.b16 %v166
    %v321 = vunpack.c.h.b16 %v166
    %v322 = vunpack.c.l.b16 %v167
    %v323 = vunpack.c.h.b16 %v167
    %v324 = vunpack.c.l.b16 %v168
    %v325 = vunpack.c.h.b16 %v168
    %v326 = vunpack.c.l.b16 %v169
    %v327 = vunpack.c.h.b16 %v169
    %v328 = vunpack.c.l.b16 %v170
    %v329 = vunpack.c.h.b16 %v170
    %v330 = vunpack.c.l.b16 %v171
    %v331 = vunpack.c.h.b16 %v171
    %v332 = vunpack.c.l.b16 %v172
    %v333 = vunpack.c.h.b16 %v172
    %v334 = vunpack.c.l.b16 %v173
    %v335 = vunpack.c.h.b16 %v173
    %v336 = vunpack.c.l.b16 %v174
    %v337 = vunpack.c.h.b16 %v174
    %v338 = vunpack.c.l.b16 %v175
    %v339 = vunpack.c.h.b16 %v175
    %v340 = vunpack.c.l.b16 %v176
    %v341 = vunpack.c.h.b16 %v176
    %v342 = vunpack.c.l.b16 %v177
    %v343 = vunpack.c.h.b16 %v177
    %v344 = vunpack.c.l.b16 %v178
    %v345 = vunpack.c.h.b16 %v178
    %v346 = vunpack.c.l.b16 %v179
    %v347 = vunpack.c.h.b16 %v179
    %v348 = vunpack.c.l.b16 %v180
    %v349 = vunpack.c.h.b16 %v180
    %v350 = vunpack.c.l.b16 %v181
    %v351 = vunpack.c.h.b16 %v181
    %v352 = vunpack.c.l.b16 %v182
    %v353 = vunpack.c.h.b16 %v182
    %v354 = vunpack.c.l.b16 %v183
    %v355 = vunpack.c.h.b16 %v183
    %v356 = vunpack.c.l.b16 %v184
    %v357 = vunpack.c.h.b16 %v184
    %v358 = vunpack.c.l.b16 %v185
    %v359 = vunpack.c.h.b16 %v185
    %v360 = vunpack.c.l.b16 %v186
    %v361 = vunpack.c.h.b16 %v186
    %v362 = vunpack.c.l.b16 %v187
    %v363 = vunpack.c.h.b16 %v187
    %v364 = vunpack.c.l.b16 %v188
    %v365 = vunpack.c.h.b16 %v188
    %v366 = vunpack.c.l.b16 %v189
    %v367 = vunpack.c.h.b16 %v189
    %v368 = vunpack.c.l.b16 %v190
    %v369 = vunpack.c.h.b16 %v190
    %v370 = vunpack.c.l.b16 %v191
    %v371 = vunpack.c.h.b16 %v191
    %v372 = vunpack.c.l.b16 %v192
    %v373 = vunpack.c.h.b16 %v192
    %v374 = vunpack.c.l.b16 %v193
    %v375 = vunpack.c.h.b16 %v193
    %v376 = vunpack.c.l.b16 %v194
    %v377 = vunpack.c.h.b16 %v194
    %v378 = vunpack.c.l.b16 %v195
    %v379 = vunpack.c.h.b16 %v195
    %v380 = vunpack.c.l.b16 %v196
    %v381 = vunpack.c.h.b16 %v196
    %v382 = vunpack.c.l.b16 %v197
    %v383 = vunpack.c.h.b16 %v197
    %v384 = vunpack.c.l.b16 %v198
    %v385 = vunpack.c.h.b16 %v198
    %v386 = vunpack.c.l.b16 %v199
    %v387 = vunpack.c.h.b16 %v199
    %v388 = vunpack.c.l.b16 %v200
    %v389 = vunpack.c.h.b16 %v200
    %v390 = vunpack.c.l.b16 %v201
    %v391 = vunpack.c.h.b16 %v201
    %v392 = vunpack.c.l.b16 %v202
    %v393 = vunpack.c.h.b16 %v202
    %v394 = vunpack.c.l.b16 %v203
    %v395 = vunpack.c.h.b16 %v203
    %v396 = vunpack.c.l.b16 %v204
    %v397 = vunpack.c.h.b16 %v204
    %v398 = vunpack.c.l.b16 %v205
    %v399 = vunpack.c.h.b16 %v205
    %v400 = vunpack.c.l.b16 %v206
    %v401 = vunpack.c.h.b16 %v206
    %v402 = vunpack.c.l.b16 %v207
    %v403 = vunpack.c.h.b16 %v207
    %v404 = vunpack.c.l.b16 %v208
    %v405 = vunpack.c.h.b16 %v208
    %v406 = vunpack.c.l.b16 %v209
    %v407 = vunpack.c.h.b16 %v209
    %v408 = vunpack.c.l.b16 %v210
    %v409 = vunpack.c.h.b16 %v210
    %v410 = vunpack.c.l.b16 %v211
    %v411 = vunpack.c.h.b16 %v211
    %v412 = vunpack.c.l.b16 %v212
    %v413 = vunpack.c.h.b16 %v212
    %v414 = vunpack.c.l.b16 %v213
    %v415 = vunpack.c.h.b16 %v213
    %v416 = vunpack.c.l.b16 %v214
    %v417 = vunpack.c.h.b16 %v214
    %v418 = vunpack.c.l.b16 %v215
    %v419 = vunpack.c.h.b16 %v215
    %v420 = vunpack.c.l.b16 %v216
    %v421 = vunpack.c.h.b16 %v216
    %v422 = vunpack.c.l.b16 %v217
    %v423 = vunpack.c.h.b16 %v217
    %v424 = vunpack.c.l.b16 %v218
    %v425 = vunpack.c.h.b16 %v218
    %v426 = vunpack.c.l.b16 %v219
    %v427 = vunpack.c.h.b16 %v219
    %v428 = vunpack.c.l.b16 %v220
    %v429 = vunpack.c.h.b16 %v220
    %v430 = vunpack.c.l.b16 %v221
    %v431 = vunpack.c.h.b16 %v221
    %v432 = vunpack.c.l.b16 %v222
    %v433 = vunpack.c.h.b16 %v222
    %v434 = vunpack.c.l.b16 %v223
    %v435 = vunpack.c.h.b16 %v223
    %v436 = vunpack.c.l.b16 %v224
    %v437 = vunpack.c.h.b16 %v224
    %v438 = vunpack.c.l.b16 %v225
    %v439 = vunpack.c.h.b16 %v225
    %v440 = vpack.c.b16 %v316, %v312
    %v441 = vpack.c.b16 %v317, %v313
    %v442 = vpack.c.b16 %v318, %v314
    %v443 = vpack.c.b16 %v319, %v315
    %v444 = vpack.c.b16 %v324, %v320
    %v445 = vpack.c.b16 %v325, %v321
    %v446 = vpack.c.b16 %v326, %v322
    %v447 = vpack.c.b16 %v327, %v323
    %v448 = vpack.c.b16 %v332, %v328
    %v449 = vpack.c.b16 %v333, %v329
    %v450 = vpack.c.b16 %v334, %v330
    %v451 = vpack.c.b16 %v335, %v331
    %v452 = vpack.c.b16 %v340, %v336
    %v453 = vpack.c.b16 %v341, %v337
    %v454 = vpack.c.b16 %v342, %v338
    %v455 = vpack.c.b16 %v343, %v339
    %v456 = vpack.c.b16 %v348, %v344
    %v457 = vpack.c.b16 %v349, %v345
    %v458 = vpack.c.b16 %v350, %v346
    %v459 = vpack.c.b16 %v351, %v347
    %v460 = vpack.c.b16 %v356, %v352
    %v461 = vpack.c.b16 %v357, %v353
    %v462 = vpack.c.b16 %v358, %v354
    %v463 = vpack.c.b16 %v359, %v355
    %v464 = vpack.c.b16 %v364, %v360
    %v465 = vpack.c.b16 %v365, %v361
    %v466 = vpack.c.b16 %v366, %v362
    %v467 = vpack.c.b16 %v367, %v363
    %v468 = vpack.c.b16 %v372, %v368
    %v469 = vpack.c.b16 %v373, %v369
    %v470 = vpack.c.b16 %v374, %v370
    %v471 = vpack.c.b16 %v375, %v371
    %v472 = vpack.c.b16 %v380, %v376
    %v473 = vpack.c.b16 %v381, %v377
    %v474 = vpack.c.b16 %v382, %v378
    %v475 = vpack.c.b16 %v383, %v379
    %v476 = vpack.c.b16 %v388, %v384
    %v477 = vpack.c.b16 %v389, %v385
    %v478 = vpack.c.b16 %v390, %v386
    %v479 = vpack.c.b16 %v391, %v387
    %v480 = vpack.c.b16 %v396, %v392
    %v481 = vpack.c.b16 %v397, %v393
    %v482 = vpack.c.b16 %v398, %v394
    %v483 = vpack.c.b16 %v399, %v395
    %v484 = vpack.c.b16 %v404, %v400
    %v485 = vpack.c.b16 %v405, %v401
    %v486 = vpack.c.b16 %v406, %v402
    %v487 = vpack.c.b16 %v407, %v403
    %v488 = vpack.c.b16 %v412, %v408
    %v489 = vpack.c.b16 %v413, %v409
    %v490 = vpack.c.b16 %v414, %v410
    %v491 = vpack.c.b16 %v415, %v411
    %v492 = vpack.c.b16 %v420, %v416
    %v493 = vpack.c.b16 %v421, %v417
    %v494 = vpack.c.b16 %v422, %v418
    %v495 = vpack.c.b16 %v423, %v419
    %v496 = vpack.c.b16 %v428, %v424
    %v497 = vpack.c.b16 %v429, %v425
    %v498 = vpack.c.b16 %v430, %v426
    %v499 = vpack.c.b16 %v431, %v427
    %v500 = vpack.c.b16 %v436, %v432
    %v501 = vpack.c.b16 %v437, %v433
    %v502 = vpack.c.b16 %v438, %v434
    %v503 = vpack.c.b16 %v439, %v435
    %568 = vmatprep.subr.bf16.mxu0 %v441
    %569 = vmatpush1.bf16.msra.mxu0 %v440
    %570 = vmatprep.subr.bf16.mxu0 %v445
    %571 = vmatpush1.bf16.msra.mxu0 %v444
    %572 = vmatprep.subr.bf16.mxu0 %v449
    %573 = vmatpush1.bf16.msra.mxu0 %v448
    %574 = vmatprep.subr.bf16.mxu0 %v453
    %575 = vmatpush1.bf16.msra.mxu0 %v452
    %576 = vmatprep.subr.bf16.mxu0 %v457
    %577 = vmatpush1.bf16.msra.mxu0 %v456
    %578 = vmatprep.subr.bf16.mxu0 %v461
    %579 = vmatpush1.bf16.msra.mxu0 %v460
    %580 = vmatprep.subr.bf16.mxu0 %v465
    %581 = vmatpush1.bf16.msra.mxu0 %v464
    %582 = vmatprep.subr.bf16.mxu0 %v469
    %583 = vmatpush1.bf16.msra.mxu0 %v468
    %584 = vmatprep.subr.bf16.mxu0 %v473
    %585 = vmatpush1.bf16.msra.mxu0 %v472
    %586 = vmatprep.subr.bf16.mxu0 %v477
    %587 = vmatpush1.bf16.msra.mxu0 %v476
    %588 = vmatprep.subr.bf16.mxu0 %v481
    %589 = vmatpush1.bf16.msra.mxu0 %v480
    %590 = vmatprep.subr.bf16.mxu0 %v485
    %591 = vmatpush1.bf16.msra.mxu0 %v484
    %592 = vmatprep.subr.bf16.mxu0 %v489
    %593 = vmatpush1.bf16.msra.mxu0 %v488
    %594 = vmatprep.subr.bf16.mxu0 %v493
    %595 = vmatpush1.bf16.msra.mxu0 %v492
    %596 = vmatprep.subr.bf16.mxu0 %v497
    %597 = vmatpush1.bf16.msra.mxu0 %v496
    %598 = vmatprep.subr.bf16.mxu0 %v501
    %599 = vmatpush1.bf16.msra.mxu0 %v500
    %600 = vmatprep.mubr.bf16.mxu0 %v161
    %601 = vmatmul.mubr.bf16.gmra.mrb[0].mxu0 %v160
    %v602 = vpop.f32.mrb[0].mxu0
    %v603 = vadd.f32 %v231, %v602
    %v604 = vpop.f32.mrb[0].mxu0
    %v605 = vadd.f32 %v235, %v604
    %v606 = vpop.f32.mrb[0].mxu0
    %v607 = vpop.f32.mrb[0].mxu0
    %608 = vdwg.mxu0
    %609 = vmatprep.subr.bf16.mxu0 %v443
    %610 = vmatpush1.bf16.msra.mxu0 %v442
    %611 = vmatprep.subr.bf16.mxu0 %v447
    %612 = vmatpush1.bf16.msra.mxu0 %v446
    %613 = vmatprep.subr.bf16.mxu0 %v451
    %614 = vmatpush1.bf16.msra.mxu0 %v450
    %615 = vmatprep.subr.bf16.mxu0 %v455
    %616 = vmatpush1.bf16.msra.mxu0 %v454
    %617 = vmatprep.subr.bf16.mxu0 %v459
    %618 = vmatpush1.bf16.msra.mxu0 %v458
    %619 = vmatprep.subr.bf16.mxu0 %v463
    %620 = vmatpush1.bf16.msra.mxu0 %v462
    %621 = vmatprep.subr.bf16.mxu0 %v467
    %622 = vmatpush1.bf16.msra.mxu0 %v466
    %623 = vmatprep.subr.bf16.mxu0 %v471
    %624 = vmatpush1.bf16.msra.mxu0 %v470
    %625 = vmatprep.subr.bf16.mxu0 %v475
    %626 = vmatpush1.bf16.msra.mxu0 %v474
    %627 = vmatprep.subr.bf16.mxu0 %v479
    %628 = vmatpush1.bf16.msra.mxu0 %v478
    %629 = vmatprep.subr.bf16.mxu0 %v483
    %630 = vmatpush1.bf16.msra.mxu0 %v482
    %631 = vmatprep.subr.bf16.mxu0 %v487
    %632 = vmatpush1.bf16.msra.mxu0 %v486
    %633 = vmatprep.subr.bf16.mxu0 %v491
    %634 = vmatpush1.bf16.msra.mxu0 %v490
    %635 = vmatprep.subr.bf16.mxu0 %v495
    %636 = vmatpush1.bf16.msra.mxu0 %v494
    %637 = vmatprep.subr.bf16.mxu0 %v499
    %638 = vmatpush1.bf16.msra.mxu0 %v498
    %639 = vmatprep.subr.bf16.mxu0 %v503
    %640 = vmatpush1.bf16.msra.mxu0 %v502
    %641 = vmatprep.mubr.bf16.mxu0 %v161
    %642 = vmatmul.mubr.bf16.gmra.mrb[0].mxu0 %v160
    %v643 = vpop.f32.mrb[0].mxu0
    %v644 = vadd.f32 %v239, %v643
    %v645 = vpop.f32.mrb[0].mxu0
    %v646 = vadd.f32 %v243, %v645
    %v647 = vpop.f32.mrb[0].mxu0
    %v648 = vpop.f32.mrb[0].mxu0
    %649 = vdwg.mxu0
    %v650 = vmax.f32 %v603, 0.0
    %v651 = vmax.f32 %v605, 0.0
    %v652 = vmax.f32 %v644, 0.0
    %v653 = vmax.f32 %v646, 0.0
    %v654 = vpack.c.bf16 %v650, %v650
    %v655 = vpack.c.bf16 %v651, %v651
    %v656 = vpack.c.bf16 %v652, %v652
    %v657 = vpack.c.bf16 %v653, %v653
    %v658 = vld [vmem:[#allocation5] sm:$0xff]
    %v659 = vld [vmem:[#allocation5 + $0x8] sm:$0xff]
    %v660 = vld [vmem:[#allocation5 + $0x10] sm:$0xff]
    %v661 = vld [vmem:[#allocation5 + $0x18] sm:$0xff]
    %v662 = vld [vmem:[#allocation5 + $0x20] sm:$0xff]
    %v663 = vld [vmem:[#allocation5 + $0x28] sm:$0xff]
    %v664 = vld [vmem:[#allocation5 + $0x30] sm:$0xff]
    %v665 = vld [vmem:[#allocation5 + $0x38] sm:$0xff]
    %v666 = vld [vmem:[#allocation5 + $0x40] sm:$0xff]
    %v667 = vld [vmem:[#allocation5 + $0x48] sm:$0xff]
    %v668 = vld [vmem:[#allocation5 + $0x50] sm:$0xff]
    %v669 = vld [vmem:[#allocation5 + $0x58] sm:$0xff]
    %v670 = vld [vmem:[#allocation5 + $0x60] sm:$0xff]
    %v671 = vld [vmem:[#allocation5 + $0x68] sm:$0xff]
    %v672 = vld [vmem:[#allocation5 + $0x70] sm:$0xff]
    %v673 = vld [vmem:[#allocation5 + $0x78] sm:$0xff]
    %v674 = vld [vmem:[#allocation5 + $0x80] sm:$0xff]
    %v675 = vld [vmem:[#allocation5 + $0x88] sm:$0xff]
    %v676 = vld [vmem:[#allocation5 + $0x90] sm:$0xff]
    %v677 = vld [vmem:[#allocation5 + $0x98] sm:$0xff]
    %v678 = vld [vmem:[#allocation5 + $0xa0] sm:$0xff]
    %v679 = vld [vmem:[#allocation5 + $0xa8] sm:$0xff]
    %v680 = vld [vmem:[#allocation5 + $0xb0] sm:$0xff]
    %v681 = vld [vmem:[#allocation5 + $0xb8] sm:$0xff]
    %v682 = vld [vmem:[#allocation5 + $0xc0] sm:$0xff]
    %v683 = vld [vmem:[#allocation5 + $0xc8] sm:$0xff]
    %v684 = vld [vmem:[#allocation5 + $0xd0] sm:$0xff]
    %v685 = vld [vmem:[#allocation5 + $0xd8] sm:$0xff]
    %v686 = vld [vmem:[#allocation5 + $0xe0] sm:$0xff]
    %v687 = vld [vmem:[#allocation5 + $0xe8] sm:$0xff]
    %v688 = vld [vmem:[#allocation5 + $0xf0] sm:$0xff]
    %v689 = vld [vmem:[#allocation5 + $0xf8] sm:$0xff]
    %v690 = vld [vmem:[#allocation5 + $0x100] sm:$0xff]
    %v691 = vld [vmem:[#allocation5 + $0x108] sm:$0xff]
    %v692 = vld [vmem:[#allocation5 + $0x110] sm:$0xff]
    %v693 = vld [vmem:[#allocation5 + $0x118] sm:$0xff]
    %v694 = vld [vmem:[#allocation5 + $0x120] sm:$0xff]
    %v695 = vld [vmem:[#allocation5 + $0x128] sm:$0xff]
    %v696 = vld [vmem:[#allocation5 + $0x130] sm:$0xff]
    %v697 = vld [vmem:[#allocation5 + $0x138] sm:$0xff]
    %v698 = vld [vmem:[#allocation5 + $0x140] sm:$0xff]
    %v699 = vld [vmem:[#allocation5 + $0x148] sm:$0xff]
    %v700 = vld [vmem:[#allocation5 + $0x150] sm:$0xff]
    %v701 = vld [vmem:[#allocation5 + $0x158] sm:$0xff]
    %v702 = vld [vmem:[#allocation5 + $0x160] sm:$0xff]
    %v703 = vld [vmem:[#allocation5 + $0x168] sm:$0xff]
    %v704 = vld [vmem:[#allocation5 + $0x170] sm:$0xff]
    %v705 = vld [vmem:[#allocation5 + $0x178] sm:$0xff]
    %v706 = vld [vmem:[#allocation5 + $0x180] sm:$0xff]
    %v707 = vld [vmem:[#allocation5 + $0x188] sm:$0xff]
    %v708 = vld [vmem:[#allocation5 + $0x190] sm:$0xff]
    %v709 = vld [vmem:[#allocation5 + $0x198] sm:$0xff]
    %v710 = vld [vmem:[#allocation5 + $0x1a0] sm:$0xff]
    %v711 = vld [vmem:[#allocation5 + $0x1a8] sm:$0xff]
    %v712 = vld [vmem:[#allocation5 + $0x1b0] sm:$0xff]
    %v713 = vld [vmem:[#allocation5 + $0x1b8] sm:$0xff]
    %v714 = vld [vmem:[#allocation5 + $0x1c0] sm:$0xff]
    %v715 = vld [vmem:[#allocation5 + $0x1c8] sm:$0xff]
    %v716 = vld [vmem:[#allocation5 + $0x1d0] sm:$0xff]
    %v717 = vld [vmem:[#allocation5 + $0x1d8] sm:$0xff]
    %v718 = vld [vmem:[#allocation5 + $0x1e0] sm:$0xff]
    %v719 = vld [vmem:[#allocation5 + $0x1e8] sm:$0xff]
    %v720 = vld [vmem:[#allocation5 + $0x1f0] sm:$0xff]
    %v721 = vld [vmem:[#allocation5 + $0x1f8] sm:$0xff]
    %v722 = vld [vmem:[#allocation5 + $0x200] sm:$0xff]
    %v723 = vld [vmem:[#allocation5 + $0x208] sm:$0xff]
    %v724 = vld [vmem:[#allocation5 + $0x210] sm:$0xff]
    %v725 = vld [vmem:[#allocation5 + $0x218] sm:$0xff]
    %v726 = vld [vmem:[#allocation5 + $0x220] sm:$0xff]
    %v727 = vld [vmem:[#allocation5 + $0x228] sm:$0xff]
    %v728 = vld [vmem:[#allocation5 + $0x230] sm:$0xff]
    %v729 = vld [vmem:[#allocation5 + $0x238] sm:$0xff]
    %v730 = vld [vmem:[#allocation5 + $0x240] sm:$0xff]
    %v731 = vld [vmem:[#allocation5 + $0x248] sm:$0xff]
    %v732 = vld [vmem:[#allocation5 + $0x250] sm:$0xff]
    %v733 = vld [vmem:[#allocation5 + $0x258] sm:$0xff]
    %v734 = vld [vmem:[#allocation5 + $0x260] sm:$0xff]
    %v735 = vld [vmem:[#allocation5 + $0x268] sm:$0xff]
    %v736 = vld [vmem:[#allocation5 + $0x270] sm:$0xff]
    %v737 = vld [vmem:[#allocation5 + $0x278] sm:$0xff]
    %v738 = vld [vmem:[#allocation5 + $0x280] sm:$0xff]
    %v739 = vld [vmem:[#allocation5 + $0x288] sm:$0xff]
    %v740 = vld [vmem:[#allocation5 + $0x290] sm:$0xff]
    %v741 = vld [vmem:[#allocation5 + $0x298] sm:$0xff]
    %v742 = vld [vmem:[#allocation5 + $0x2a0] sm:$0xff]
    %v743 = vld [vmem:[#allocation5 + $0x2a8] sm:$0xff]
    %v744 = vld [vmem:[#allocation5 + $0x2b0] sm:$0xff]
    %v745 = vld [vmem:[#allocation5 + $0x2b8] sm:$0xff]
    %v746 = vld [vmem:[#allocation5 + $0x2c0] sm:$0xff]
    %v747 = vld [vmem:[#allocation5 + $0x2c8] sm:$0xff]
    %v748 = vld [vmem:[#allocation5 + $0x2d0] sm:$0xff]
    %v749 = vld [vmem:[#allocation5 + $0x2d8] sm:$0xff]
    %v750 = vld [vmem:[#allocation5 + $0x2e0] sm:$0xff]
    %v751 = vld [vmem:[#allocation5 + $0x2e8] sm:$0xff]
    %v752 = vld [vmem:[#allocation5 + $0x2f0] sm:$0xff]
    %v753 = vld [vmem:[#allocation5 + $0x2f8] sm:$0xff]
    %v754 = vld [vmem:[#allocation5 + $0x300] sm:$0xff]
    %v755 = vld [vmem:[#allocation5 + $0x308] sm:$0xff]
    %v756 = vld [vmem:[#allocation5 + $0x310] sm:$0xff]
    %v757 = vld [vmem:[#allocation5 + $0x318] sm:$0xff]
    %v758 = vld [vmem:[#allocation5 + $0x320] sm:$0xff]
    %v759 = vld [vmem:[#allocation5 + $0x328] sm:$0xff]
    %v760 = vld [vmem:[#allocation5 + $0x330] sm:$0xff]
    %v761 = vld [vmem:[#allocation5 + $0x338] sm:$0xff]
    %v762 = vld [vmem:[#allocation5 + $0x340] sm:$0xff]
    %v763 = vld [vmem:[#allocation5 + $0x348] sm:$0xff]
    %v764 = vld [vmem:[#allocation5 + $0x350] sm:$0xff]
    %v765 = vld [vmem:[#allocation5 + $0x358] sm:$0xff]
    %v766 = vld [vmem:[#allocation5 + $0x360] sm:$0xff]
    %v767 = vld [vmem:[#allocation5 + $0x368] sm:$0xff]
    %v768 = vld [vmem:[#allocation5 + $0x370] sm:$0xff]
    %v769 = vld [vmem:[#allocation5 + $0x378] sm:$0xff]
    %v770 = vld [vmem:[#allocation5 + $0x380] sm:$0xff]
    %v771 = vld [vmem:[#allocation5 + $0x388] sm:$0xff]
    %v772 = vld [vmem:[#allocation5 + $0x390] sm:$0xff]
    %v773 = vld [vmem:[#allocation5 + $0x398] sm:$0xff]
    %v774 = vld [vmem:[#allocation5 + $0x3a0] sm:$0xff]
    %v775 = vld [vmem:[#allocation5 + $0x3a8] sm:$0xff]
    %v776 = vld [vmem:[#allocation5 + $0x3b0] sm:$0xff]
    %v777 = vld [vmem:[#allocation5 + $0x3b8] sm:$0xff]
    %v778 = vld [vmem:[#allocation5 + $0x3c0] sm:$0xff]
    %v779 = vld [vmem:[#allocation5 + $0x3c8] sm:$0xff]
    %v780 = vld [vmem:[#allocation5 + $0x3d0] sm:$0xff]
    %v781 = vld [vmem:[#allocation5 + $0x3d8] sm:$0xff]
    %v782 = vld [vmem:[#allocation5 + $0x3e0] sm:$0xff]
    %v783 = vld [vmem:[#allocation5 + $0x3e8] sm:$0xff]
    %v784 = vld [vmem:[#allocation5 + $0x3f0] sm:$0xff]
    %v785 = vld [vmem:[#allocation5 + $0x3f8] sm:$0xff]
    %v786 = vld [vmem:[%s8] sm:$0xf]
    %v788 = vlaneseq
    %v789 = vshrl.u32 %v788, 7
    %v790 = vsub.s32 0, %v789
    %v791 = vrot.slane %v786, %v790
    %v792 = vlaneseq
    %v793 = vshrl.u32 %v792, 7
    %v794 = vsub.s32 1, %v793
    %v795 = vrot.slane %v786, %v794
    %v796 = vlaneseq
    %v797 = vshrl.u32 %v796, 7
    %v798 = vsub.s32 2, %v797
    %v799 = vrot.slane %v786, %v798
    %v800 = vlaneseq
    %v801 = vshrl.u32 %v800, 7
    %v802 = vsub.s32 3, %v801
    %v803 = vrot.slane %v786, %v802
    %v936 = vunpack.c.l.b16 %v658
    %v937 = vunpack.c.h.b16 %v658
    %v938 = vunpack.c.l.b16 %v659
    %v939 = vunpack.c.h.b16 %v659
    %v940 = vunpack.c.l.b16 %v660
    %v941 = vunpack.c.h.b16 %v660
    %v942 = vunpack.c.l.b16 %v661
    %v943 = vunpack.c.h.b16 %v661
    %v944 = vunpack.c.l.b16 %v662
    %v945 = vunpack.c.h.b16 %v662
    %v946 = vunpack.c.l.b16 %v663
    %v947 = vunpack.c.h.b16 %v663
    %v948 = vunpack.c.l.b16 %v664
    %v949 = vunpack.c.h.b16 %v664
    %v950 = vunpack.c.l.b16 %v665
    %v951 = vunpack.c.h.b16 %v665
    %v952 = vunpack.c.l.b16 %v666
    %v953 = vunpack.c.h.b16 %v666
    %v954 = vunpack.c.l.b16 %v667
    %v955 = vunpack.c.h.b16 %v667
    %v956 = vunpack.c.l.b16 %v668
    %v957 = vunpack.c.h.b16 %v668
    %v958 = vunpack.c.l.b16 %v669
    %v959 = vunpack.c.h.b16 %v669
    %v960 = vunpack.c.l.b16 %v670
    %v961 = vunpack.c.h.b16 %v670
    %v962 = vunpack.c.l.b16 %v671
    %v963 = vunpack.c.h.b16 %v671
    %v964 = vunpack.c.l.b16 %v672
    %v965 = vunpack.c.h.b16 %v672
    %v966 = vunpack.c.l.b16 %v673
    %v967 = vunpack.c.h.b16 %v673
    %v968 = vunpack.c.l.b16 %v674
    %v969 = vunpack.c.h.b16 %v674
    %v970 = vunpack.c.l.b16 %v675
    %v971 = vunpack.c.h.b16 %v675
    %v972 = vunpack.c.l.b16 %v676
    %v973 = vunpack.c.h.b16 %v676
    %v974 = vunpack.c.l.b16 %v677
    %v975 = vunpack.c.h.b16 %v677
    %v976 = vunpack.c.l.b16 %v678
    %v977 = vunpack.c.h.b16 %v678
    %v978 = vunpack.c.l.b16 %v679
    %v979 = vunpack.c.h.b16 %v679
    %v980 = vunpack.c.l.b16 %v680
    %v981 = vunpack.c.h.b16 %v680
    %v982 = vunpack.c.l.b16 %v681
    %v983 = vunpack.c.h.b16 %v681
    %v984 = vunpack.c.l.b16 %v682
    %v985 = vunpack.c.h.b16 %v682
    %v986 = vunpack.c.l.b16 %v683
    %v987 = vunpack.c.h.b16 %v683
    %v988 = vunpack.c.l.b16 %v684
    %v989 = vunpack.c.h.b16 %v684
    %v990 = vunpack.c.l.b16 %v685
    %v991 = vunpack.c.h.b16 %v685
    %v992 = vunpack.c.l.b16 %v686
    %v993 = vunpack.c.h.b16 %v686
    %v994 = vunpack.c.l.b16 %v687
    %v995 = vunpack.c.h.b16 %v687
    %v996 = vunpack.c.l.b16 %v688
    %v997 = vunpack.c.h.b16 %v688
    %v998 = vunpack.c.l.b16 %v689
    %v999 = vunpack.c.h.b16 %v689
    %v1000 = vunpack.c.l.b16 %v690
    %v1001 = vunpack.c.h.b16 %v690
    %v1002 = vunpack.c.l.b16 %v691
    %v1003 = vunpack.c.h.b16 %v691
    %v1004 = vunpack.c.l.b16 %v692
    %v1005 = vunpack.c.h.b16 %v692
    %v1006 = vunpack.c.l.b16 %v693
    %v1007 = vunpack.c.h.b16 %v693
    %v1008 = vunpack.c.l.b16 %v694
    %v1009 = vunpack.c.h.b16 %v694
    %v1010 = vunpack.c.l.b16 %v695
    %v1011 = vunpack.c.h.b16 %v695
    %v1012 = vunpack.c.l.b16 %v696
    %v1013 = vunpack.c.h.b16 %v696
    %v1014 = vunpack.c.l.b16 %v697
    %v1015 = vunpack.c.h.b16 %v697
    %v1016 = vunpack.c.l.b16 %v698
    %v1017 = vunpack.c.h.b16 %v698
    %v1018 = vunpack.c.l.b16 %v699
    %v1019 = vunpack.c.h.b16 %v699
    %v1020 = vunpack.c.l.b16 %v700
    %v1021 = vunpack.c.h.b16 %v700
    %v1022 = vunpack.c.l.b16 %v701
    %v1023 = vunpack.c.h.b16 %v701
    %v1024 = vunpack.c.l.b16 %v702
    %v1025 = vunpack.c.h.b16 %v702
    %v1026 = vunpack.c.l.b16 %v703
    %v1027 = vunpack.c.h.b16 %v703
    %v1028 = vunpack.c.l.b16 %v704
    %v1029 = vunpack.c.h.b16 %v704
    %v1030 = vunpack.c.l.b16 %v705
    %v1031 = vunpack.c.h.b16 %v705
    %v1032 = vunpack.c.l.b16 %v706
    %v1033 = vunpack.c.h.b16 %v706
    %v1034 = vunpack.c.l.b16 %v707
    %v1035 = vunpack.c.h.b16 %v707
    %v1036 = vunpack.c.l.b16 %v708
    %v1037 = vunpack.c.h.b16 %v708
    %v1038 = vunpack.c.l.b16 %v709
    %v1039 = vunpack.c.h.b16 %v709
    %v1040 = vunpack.c.l.b16 %v710
    %v1041 = vunpack.c.h.b16 %v710
    %v1042 = vunpack.c.l.b16 %v711
    %v1043 = vunpack.c.h.b16 %v711
    %v1044 = vunpack.c.l.b16 %v712
    %v1045 = vunpack.c.h.b16 %v712
    %v1046 = vunpack.c.l.b16 %v713
    %v1047 = vunpack.c.h.b16 %v713
    %v1048 = vunpack.c.l.b16 %v714
    %v1049 = vunpack.c.h.b16 %v714
    %v1050 = vunpack.c.l.b16 %v715
    %v1051 = vunpack.c.h.b16 %v715
    %v1052 = vunpack.c.l.b16 %v716
    %v1053 = vunpack.c.h.b16 %v716
    %v1054 = vunpack.c.l.b16 %v717
    %v1055 = vunpack.c.h.b16 %v717
    %v1056 = vunpack.c.l.b16 %v718
    %v1057 = vunpack.c.h.b16 %v718
    %v1058 = vunpack.c.l.b16 %v719
    %v1059 = vunpack.c.h.b16 %v719
    %v1060 = vunpack.c.l.b16 %v720
    %v1061 = vunpack.c.h.b16 %v720
    %v1062 = vunpack.c.l.b16 %v721
    %v1063 = vunpack.c.h.b16 %v721
    %v1064 = vunpack.c.l.b16 %v722
    %v1065 = vunpack.c.h.b16 %v722
    %v1066 = vunpack.c.l.b16 %v723
    %v1067 = vunpack.c.h.b16 %v723
    %v1068 = vunpack.c.l.b16 %v724
    %v1069 = vunpack.c.h.b16 %v724
    %v1070 = vunpack.c.l.b16 %v725
    %v1071 = vunpack.c.h.b16 %v725
    %v1072 = vunpack.c.l.b16 %v726
    %v1073 = vunpack.c.h.b16 %v726
    %v1074 = vunpack.c.l.b16 %v727
    %v1075 = vunpack.c.h.b16 %v727
    %v1076 = vunpack.c.l.b16 %v728
    %v1077 = vunpack.c.h.b16 %v728
    %v1078 = vunpack.c.l.b16 %v729
    %v1079 = vunpack.c.h.b16 %v729
    %v1080 = vunpack.c.l.b16 %v730
    %v1081 = vunpack.c.h.b16 %v730
    %v1082 = vunpack.c.l.b16 %v731
    %v1083 = vunpack.c.h.b16 %v731
    %v1084 = vunpack.c.l.b16 %v732
    %v1085 = vunpack.c.h.b16 %v732
    %v1086 = vunpack.c.l.b16 %v733
    %v1087 = vunpack.c.h.b16 %v733
    %v1088 = vunpack.c.l.b16 %v734
    %v1089 = vunpack.c.h.b16 %v734
    %v1090 = vunpack.c.l.b16 %v735
    %v1091 = vunpack.c.h.b16 %v735
    %v1092 = vunpack.c.l.b16 %v736
    %v1093 = vunpack.c.h.b16 %v736
    %v1094 = vunpack.c.l.b16 %v737
    %v1095 = vunpack.c.h.b16 %v737
    %v1096 = vunpack.c.l.b16 %v738
    %v1097 = vunpack.c.h.b16 %v738
    %v1098 = vunpack.c.l.b16 %v739
    %v1099 = vunpack.c.h.b16 %v739
    %v1100 = vunpack.c.l.b16 %v740
    %v1101 = vunpack.c.h.b16 %v740
    %v1102 = vunpack.c.l.b16 %v741
    %v1103 = vunpack.c.h.b16 %v741
    %v1104 = vunpack.c.l.b16 %v742
    %v1105 = vunpack.c.h.b16 %v742
    %v1106 = vunpack.c.l.b16 %v743
    %v1107 = vunpack.c.h.b16 %v743
    %v1108 = vunpack.c.l.b16 %v744
    %v1109 = vunpack.c.h.b16 %v744
    %v1110 = vunpack.c.l.b16 %v745
    %v1111 = vunpack.c.h.b16 %v745
    %v1112 = vunpack.c.l.b16 %v746
    %v1113 = vunpack.c.h.b16 %v746
    %v1114 = vunpack.c.l.b16 %v747
    %v1115 = vunpack.c.h.b16 %v747
    %v1116 = vunpack.c.l.b16 %v748
    %v1117 = vunpack.c.h.b16 %v748
    %v1118 = vunpack.c.l.b16 %v749
    %v1119 = vunpack.c.h.b16 %v749
    %v1120 = vunpack.c.l.b16 %v750
    %v1121 = vunpack.c.h.b16 %v750
    %v1122 = vunpack.c.l.b16 %v751
    %v1123 = vunpack.c.h.b16 %v751
    %v1124 = vunpack.c.l.b16 %v752
    %v1125 = vunpack.c.h.b16 %v752
    %v1126 = vunpack.c.l.b16 %v753
    %v1127 = vunpack.c.h.b16 %v753
    %v1128 = vunpack.c.l.b16 %v754
    %v1129 = vunpack.c.h.b16 %v754
    %v1130 = vunpack.c.l.b16 %v755
    %v1131 = vunpack.c.h.b16 %v755
    %v1132 = vunpack.c.l.b16 %v756
    %v1133 = vunpack.c.h.b16 %v756
    %v1134 = vunpack.c.l.b16 %v757
    %v1135 = vunpack.c.h.b16 %v757
    %v1136 = vunpack.c.l.b16 %v758
    %v1137 = vunpack.c.h.b16 %v758
    %v1138 = vunpack.c.l.b16 %v759
    %v1139 = vunpack.c.h.b16 %v759
    %v1140 = vunpack.c.l.b16 %v760
    %v1141 = vunpack.c.h.b16 %v760
    %v1142 = vunpack.c.l.b16 %v761
    %v1143 = vunpack.c.h.b16 %v761
    %v1144 = vunpack.c.l.b16 %v762
    %v1145 = vunpack.c.h.b16 %v762
    %v1146 = vunpack.c.l.b16 %v763
    %v1147 = vunpack.c.h.b16 %v763
    %v1148 = vunpack.c.l.b16 %v764
    %v1149 = vunpack.c.h.b16 %v764
    %v1150 = vunpack.c.l.b16 %v765
    %v1151 = vunpack.c.h.b16 %v765
    %v1152 = vunpack.c.l.b16 %v766
    %v1153 = vunpack.c.h.b16 %v766
    %v1154 = vunpack.c.l.b16 %v767
    %v1155 = vunpack.c.h.b16 %v767
    %v1156 = vunpack.c.l.b16 %v768
    %v1157 = vunpack.c.h.b16 %v768
    %v1158 = vunpack.c.l.b16 %v769
    %v1159 = vunpack.c.h.b16 %v769
    %v1160 = vunpack.c.l.b16 %v770
    %v1161 = vunpack.c.h.b16 %v770
    %v1162 = vunpack.c.l.b16 %v771
    %v1163 = vunpack.c.h.b16 %v771
    %v1164 = vunpack.c.l.b16 %v772
    %v1165 = vunpack.c.h.b16 %v772
    %v1166 = vunpack.c.l.b16 %v773
    %v1167 = vunpack.c.h.b16 %v773
    %v1168 = vunpack.c.l.b16 %v774
    %v1169 = vunpack.c.h.b16 %v774
    %v1170 = vunpack.c.l.b16 %v775
    %v1171 = vunpack.c.h.b16 %v775
    %v1172 = vunpack.c.l.b16 %v776
    %v1173 = vunpack.c.h.b16 %v776
    %v1174 = vunpack.c.l.b16 %v777
    %v1175 = vunpack.c.h.b16 %v777
    %v1176 = vunpack.c.l.b16 %v778
    %v1177 = vunpack.c.h.b16 %v778
    %v1178 = vunpack.c.l.b16 %v779
    %v1179 = vunpack.c.h.b16 %v779
    %v1180 = vunpack.c.l.b16 %v780
    %v1181 = vunpack.c.h.b16 %v780
    %v1182 = vunpack.c.l.b16 %v781
    %v1183 = vunpack.c.h.b16 %v781
    %v1184 = vunpack.c.l.b16 %v782
    %v1185 = vunpack.c.h.b16 %v782
    %v1186 = vunpack.c.l.b16 %v783
    %v1187 = vunpack.c.h.b16 %v783
    %v1188 = vunpack.c.l.b16 %v784
    %v1189 = vunpack.c.h.b16 %v784
    %v1190 = vunpack.c.l.b16 %v785
    %v1191 = vunpack.c.h.b16 %v785
    %v1192 = vpack.c.b16 %v940, %v936
    %v1193 = vpack.c.b16 %v941, %v937
    %v1194 = vpack.c.b16 %v942, %v938
    %v1195 = vpack.c.b16 %v943, %v939
    %v1196 = vpack.c.b16 %v948, %v944
    %v1197 = vpack.c.b16 %v949, %v945
    %v1198 = vpack.c.b16 %v950, %v946
    %v1199 = vpack.c.b16 %v951, %v947
    %v1200 = vpack.c.b16 %v956, %v952
    %v1201 = vpack.c.b16 %v957, %v953
    %v1202 = vpack.c.b16 %v958, %v954
    %v1203 = vpack.c.b16 %v959, %v955
    %v1204 = vpack.c.b16 %v964, %v960
    %v1205 = vpack.c.b16 %v965, %v961
    %v1206 = vpack.c.b16 %v966, %v962
    %v1207 = vpack.c.b16 %v967, %v963
    %v1208 = vpack.c.b16 %v972, %v968
    %v1209 = vpack.c.b16 %v973, %v969
    %v1210 = vpack.c.b16 %v974, %v970
    %v1211 = vpack.c.b16 %v975, %v971
    %v1212 = vpack.c.b16 %v980, %v976
    %v1213 = vpack.c.b16 %v981, %v977
    %v1214 = vpack.c.b16 %v982, %v978
    %v1215 = vpack.c.b16 %v983, %v979
    %v1216 = vpack.c.b16 %v988, %v984
    %v1217 = vpack.c.b16 %v989, %v985
    %v1218 = vpack.c.b16 %v990, %v986
    %v1219 = vpack.c.b16 %v991, %v987
    %v1220 = vpack.c.b16 %v996, %v992
    %v1221 = vpack.c.b16 %v997, %v993
    %v1222 = vpack.c.b16 %v998, %v994
    %v1223 = vpack.c.b16 %v999, %v995
    %v1224 = vpack.c.b16 %v1004, %v1000
    %v1225 = vpack.c.b16 %v1005, %v1001
    %v1226 = vpack.c.b16 %v1006, %v1002
    %v1227 = vpack.c.b16 %v1007, %v1003
    %v1228 = vpack.c.b16 %v1012, %v1008
    %v1229 = vpack.c.b16 %v1013, %v1009
    %v1230 = vpack.c.b16 %v1014, %v1010
    %v1231 = vpack.c.b16 %v1015, %v1011
    %v1232 = vpack.c.b16 %v1020, %v1016
    %v1233 = vpack.c.b16 %v1021, %v1017
    %v1234 = vpack.c.b16 %v1022, %v1018
    %v1235 = vpack.c.b16 %v1023, %v1019
    %v1236 = vpack.c.b16 %v1028, %v1024
    %v1237 = vpack.c.b16 %v1029, %v1025
    %v1238 = vpack.c.b16 %v1030, %v1026
    %v1239 = vpack.c.b16 %v1031, %v1027
    %v1240 = vpack.c.b16 %v1036, %v1032
    %v1241 = vpack.c.b16 %v1037, %v1033
    %v1242 = vpack.c.b16 %v1038, %v1034
    %v1243 = vpack.c.b16 %v1039, %v1035
    %v1244 = vpack.c.b16 %v1044, %v1040
    %v1245 = vpack.c.b16 %v1045, %v1041
    %v1246 = vpack.c.b16 %v1046, %v1042
    %v1247 = vpack.c.b16 %v1047, %v1043
    %v1248 = vpack.c.b16 %v1052, %v1048
    %v1249 = vpack.c.b16 %v1053, %v1049
    %v1250 = vpack.c.b16 %v1054, %v1050
    %v1251 = vpack.c.b16 %v1055, %v1051
    %v1252 = vpack.c.b16 %v1060, %v1056
    %v1253 = vpack.c.b16 %v1061, %v1057
    %v1254 = vpack.c.b16 %v1062, %v1058
    %v1255 = vpack.c.b16 %v1063, %v1059
    %v1256 = vpack.c.b16 %v1068, %v1064
    %v1257 = vpack.c.b16 %v1069, %v1065
    %v1258 = vpack.c.b16 %v1070, %v1066
    %v1259 = vpack.c.b16 %v1071, %v1067
    %v1260 = vpack.c.b16 %v1076, %v1072
    %v1261 = vpack.c.b16 %v1077, %v1073
    %v1262 = vpack.c.b16 %v1078, %v1074
    %v1263 = vpack.c.b16 %v1079, %v1075
    %v1264 = vpack.c.b16 %v1084, %v1080
    %v1265 = vpack.c.b16 %v1085, %v1081
    %v1266 = vpack.c.b16 %v1086, %v1082
    %v1267 = vpack.c.b16 %v1087, %v1083
    %v1268 = vpack.c.b16 %v1092, %v1088
    %v1269 = vpack.c.b16 %v1093, %v1089
    %v1270 = vpack.c.b16 %v1094, %v1090
    %v1271 = vpack.c.b16 %v1095, %v1091
    %v1272 = vpack.c.b16 %v1100, %v1096
    %v1273 = vpack.c.b16 %v1101, %v1097
    %v1274 = vpack.c.b16 %v1102, %v1098
    %v1275 = vpack.c.b16 %v1103, %v1099
    %v1276 = vpack.c.b16 %v1108, %v1104
    %v1277 = vpack.c.b16 %v1109, %v1105
    %v1278 = vpack.c.b16 %v1110, %v1106
    %v1279 = vpack.c.b16 %v1111, %v1107
    %v1280 = vpack.c.b16 %v1116, %v1112
    %v1281 = vpack.c.b16 %v1117, %v1113
    %v1282 = vpack.c.b16 %v1118, %v1114
    %v1283 = vpack.c.b16 %v1119, %v1115
    %v1284 = vpack.c.b16 %v1124, %v1120
    %v1285 = vpack.c.b16 %v1125, %v1121
    %v1286 = vpack.c.b16 %v1126, %v1122
    %v1287 = vpack.c.b16 %v1127, %v1123
    %v1288 = vpack.c.b16 %v1132, %v1128
    %v1289 = vpack.c.b16 %v1133, %v1129
    %v1290 = vpack.c.b16 %v1134, %v1130
    %v1291 = vpack.c.b16 %v1135, %v1131
    %v1292 = vpack.c.b16 %v1140, %v1136
    %v1293 = vpack.c.b16 %v1141, %v1137
    %v1294 = vpack.c.b16 %v1142, %v1138
    %v1295 = vpack.c.b16 %v1143, %v1139
    %v1296 = vpack.c.b16 %v1148, %v1144
    %v1297 = vpack.c.b16 %v1149, %v1145
    %v1298 = vpack.c.b16 %v1150, %v1146
    %v1299 = vpack.c.b16 %v1151, %v1147
    %v1300 = vpack.c.b16 %v1156, %v1152
    %v1301 = vpack.c.b16 %v1157, %v1153
    %v1302 = vpack.c.b16 %v1158, %v1154
    %v1303 = vpack.c.b16 %v1159, %v1155
    %v1304 = vpack.c.b16 %v1164, %v1160
    %v1305 = vpack.c.b16 %v1165, %v1161
    %v1306 = vpack.c.b16 %v1166, %v1162
    %v1307 = vpack.c.b16 %v1167, %v1163
    %v1308 = vpack.c.b16 %v1172, %v1168
    %v1309 = vpack.c.b16 %v1173, %v1169
    %v1310 = vpack.c.b16 %v1174, %v1170
    %v1311 = vpack.c.b16 %v1175, %v1171
    %v1312 = vpack.c.b16 %v1180, %v1176
    %v1313 = vpack.c.b16 %v1181, %v1177
    %v1314 = vpack.c.b16 %v1182, %v1178
    %v1315 = vpack.c.b16 %v1183, %v1179
    %v1316 = vpack.c.b16 %v1188, %v1184
    %v1317 = vpack.c.b16 %v1189, %v1185
    %v1318 = vpack.c.b16 %v1190, %v1186
    %v1319 = vpack.c.b16 %v1191, %v1187
    %1448 = vmatprep.subr.bf16.mxu0 %v1193
    %1449 = vmatpush1.bf16.msra.mxu0 %v1192
    %1450 = vmatprep.subr.bf16.mxu0 %v1197
    %1451 = vmatpush1.bf16.msra.mxu0 %v1196
    %1452 = vmatprep.subr.bf16.mxu0 %v1201
    %1453 = vmatpush1.bf16.msra.mxu0 %v1200
    %1454 = vmatprep.subr.bf16.mxu0 %v1205
    %1455 = vmatpush1.bf16.msra.mxu0 %v1204
    %1456 = vmatprep.subr.bf16.mxu0 %v1209
    %1457 = vmatpush1.bf16.msra.mxu0 %v1208
    %1458 = vmatprep.subr.bf16.mxu0 %v1213
    %1459 = vmatpush1.bf16.msra.mxu0 %v1212
    %1460 = vmatprep.subr.bf16.mxu0 %v1217
    %1461 = vmatpush1.bf16.msra.mxu0 %v1216
    %1462 = vmatprep.subr.bf16.mxu0 %v1221
    %1463 = vmatpush1.bf16.msra.mxu0 %v1220
    %1464 = vmatprep.subr.bf16.mxu0 %v1225
    %1465 = vmatpush1.bf16.msra.mxu0 %v1224
    %1466 = vmatprep.subr.bf16.mxu0 %v1229
    %1467 = vmatpush1.bf16.msra.mxu0 %v1228
    %1468 = vmatprep.subr.bf16.mxu0 %v1233
    %1469 = vmatpush1.bf16.msra.mxu0 %v1232
    %1470 = vmatprep.subr.bf16.mxu0 %v1237
    %1471 = vmatpush1.bf16.msra.mxu0 %v1236
    %1472 = vmatprep.subr.bf16.mxu0 %v1241
    %1473 = vmatpush1.bf16.msra.mxu0 %v1240
    %1474 = vmatprep.subr.bf16.mxu0 %v1245
    %1475 = vmatpush1.bf16.msra.mxu0 %v1244
    %1476 = vmatprep.subr.bf16.mxu0 %v1249
    %1477 = vmatpush1.bf16.msra.mxu0 %v1248
    %1478 = vmatprep.subr.bf16.mxu0 %v1253
    %1479 = vmatpush1.bf16.msra.mxu0 %v1252
    %1480 = vmatprep.mubr.bf16.mxu0 %v655
    %1481 = vmatmul.mubr.bf16.gmra.mrb[0].mxu0 %v654
    %v1482 = vpop.f32.mrb[0].mxu0
    %v1483 = vadd.f32 %v791, %v1482
    %v1484 = vpop.f32.mrb[0].mxu0
    %v1485 = vadd.f32 %v795, %v1484
    %v1486 = vpop.f32.mrb[0].mxu0
    %v1487 = vpop.f32.mrb[0].mxu0
    %1488 = vdwg.mxu0
    %1489 = vmatprep.subr.bf16.mxu0 %v1257
    %1490 = vmatpush1.bf16.msra.mxu0 %v1256
    %1491 = vmatprep.subr.bf16.mxu0 %v1261
    %1492 = vmatpush1.bf16.msra.mxu0 %v1260
    %1493 = vmatprep.subr.bf16.mxu0 %v1265
    %1494 = vmatpush1.bf16.msra.mxu0 %v1264
    %1495 = vmatprep.subr.bf16.mxu0 %v1269
    %1496 = vmatpush1.bf16.msra.mxu0 %v1268
    %1497 = vmatprep.subr.bf16.mxu0 %v1273
    %1498 = vmatpush1.bf16.msra.mxu0 %v1272
    %1499 = vmatprep.subr.bf16.mxu0 %v1277
    %1500 = vmatpush1.bf16.msra.mxu0 %v1276
    %1501 = vmatprep.subr.bf16.mxu0 %v1281
    %1502 = vmatpush1.bf16.msra.mxu0 %v1280
    %1503 = vmatprep.subr.bf16.mxu0 %v1285
    %1504 = vmatpush1.bf16.msra.mxu0 %v1284
    %1505 = vmatprep.subr.bf16.mxu0 %v1289
    %1506 = vmatpush1.bf16.msra.mxu0 %v1288
    %1507 = vmatprep.subr.bf16.mxu0 %v1293
    %1508 = vmatpush1.bf16.msra.mxu0 %v1292
    %1509 = vmatprep.subr.bf16.mxu0 %v1297
    %1510 = vmatpush1.bf16.msra.mxu0 %v1296
    %1511 = vmatprep.subr.bf16.mxu0 %v1301
    %1512 = vmatpush1.bf16.msra.mxu0 %v1300
    %1513 = vmatprep.subr.bf16.mxu0 %v1305
    %1514 = vmatpush1.bf16.msra.mxu0 %v1304
    %1515 = vmatprep.subr.bf16.mxu0 %v1309
    %1516 = vmatpush1.bf16.msra.mxu0 %v1308
    %1517 = vmatprep.subr.bf16.mxu0 %v1313
    %1518 = vmatpush1.bf16.msra.mxu0 %v1312
    %1519 = vmatprep.subr.bf16.mxu0 %v1317
    %1520 = vmatpush1.bf16.msra.mxu0 %v1316
    %1521 = vmatprep.mubr.bf16.mxu0 %v657
    %1522 = vmatmul.mubr.bf16.gmra.mrb[0].mxu0 %v656
    %v1523 = vpop.f32.mrb[0].mxu0
    %v1524 = vadd.f32 %v1483, %v1523
    %v1525 = vpop.f32.mrb[0].mxu0
    %v1526 = vadd.f32 %v1485, %v1525
    %v1527 = vpop.f32.mrb[0].mxu0
    %v1528 = vpop.f32.mrb[0].mxu0
    %1529 = vdwg.mxu0
    %1530 = vmatprep.subr.bf16.mxu0 %v1195
    %1531 = vmatpush1.bf16.msra.mxu0 %v1194
    %1532 = vmatprep.subr.bf16.mxu0 %v1199
    %1533 = vmatpush1.bf16.msra.mxu0 %v1198
    %1534 = vmatprep.subr.bf16.mxu0 %v1203
    %1535 = vmatpush1.bf16.msra.mxu0 %v1202
    %1536 = vmatprep.subr.bf16.mxu0 %v1207
    %1537 = vmatpush1.bf16.msra.mxu0 %v1206
    %1538 = vmatprep.subr.bf16.mxu0 %v1211
    %1539 = vmatpush1.bf16.msra.mxu0 %v1210
    %1540 = vmatprep.subr.bf16.mxu0 %v1215
    %1541 = vmatpush1.bf16.msra.mxu0 %v1214
    %1542 = vmatprep.subr.bf16.mxu0 %v1219
    %1543 = vmatpush1.bf16.msra.mxu0 %v1218
    %1544 = vmatprep.subr.bf16.mxu0 %v1223
    %1545 = vmatpush1.bf16.msra.mxu0 %v1222
    %1546 = vmatprep.subr.bf16.mxu0 %v1227
    %1547 = vmatpush1.bf16.msra.mxu0 %v1226
    %1548 = vmatprep.subr.bf16.mxu0 %v1231
    %1549 = vmatpush1.bf16.msra.mxu0 %v1230
    %1550 = vmatprep.subr.bf16.mxu0 %v1235
    %1551 = vmatpush1.bf16.msra.mxu0 %v1234
    %1552 = vmatprep.subr.bf16.mxu0 %v1239
    %1553 = vmatpush1.bf16.msra.mxu0 %v1238
    %1554 = vmatprep.subr.bf16.mxu0 %v1243
    %1555 = vmatpush1.bf16.msra.mxu0 %v1242
    %1556 = vmatprep.subr.bf16.mxu0 %v1247
    %1557 = vmatpush1.bf16.msra.mxu0 %v1246
    %1558 = vmatprep.subr.bf16.mxu0 %v1251
    %1559 = vmatpush1.bf16.msra.mxu0 %v1250
    %1560 = vmatprep.subr.bf16.mxu0 %v1255
    %1561 = vmatpush1.bf16.msra.mxu0 %v1254
    %1562 = vmatprep.mubr.bf16.mxu0 %v655
    %1563 = vmatmul.mubr.bf16.gmra.mrb[0].mxu0 %v654
    %v1564 = vpop.f32.mrb[0].mxu0
    %v1565 = vadd.f32 %v799, %v1564
    %v1566 = vpop.f32.mrb[0].mxu0
    %v1567 = vadd.f32 %v803, %v1566
    %v1568 = vpop.f32.mrb[0].mxu0
    %v1569 = vpop.f32.mrb[0].mxu0
    %1570 = vdwg.mxu0
    %1571 = vmatprep.subr.bf16.mxu0 %v1259
    %1572 = vmatpush1.bf16.msra.mxu0 %v1258
    %1573 = vmatprep.subr.bf16.mxu0 %v1263
    %1574 = vmatpush1.bf16.msra.mxu0 %v1262
    %1575 = vmatprep.subr.bf16.mxu0 %v1267
    %1576 = vmatpush1.bf16.msra.mxu0 %v1266
    %1577 = vmatprep.subr.bf16.mxu0 %v1271
    %1578 = vmatpush1.bf16.msra.mxu0 %v1270
    %1579 = vmatprep.subr.bf16.mxu0 %v1275
    %1580 = vmatpush1.bf16.msra.mxu0 %v1274
    %1581 = vmatprep.subr.bf16.mxu0 %v1279
    %1582 = vmatpush1.bf16.msra.mxu0 %v1278
    %1583 = vmatprep.subr.bf16.mxu0 %v1283
    %1584 = vmatpush1.bf16.msra.mxu0 %v1282
    %1585 = vmatprep.subr.bf16.mxu0 %v1287
    %1586 = vmatpush1.bf16.msra.mxu0 %v1286
    %1587 = vmatprep.subr.bf16.mxu0 %v1291
    %1588 = vmatpush1.bf16.msra.mxu0 %v1290
    %1589 = vmatprep.subr.bf16.mxu0 %v1295
    %1590 = vmatpush1.bf16.msra.mxu0 %v1294
    %1591 = vmatprep.subr.bf16.mxu0 %v1299
    %1592 = vmatpush1.bf16.msra.mxu0 %v1298
    %1593 = vmatprep.subr.bf16.mxu0 %v1303
    %1594 = vmatpush1.bf16.msra.mxu0 %v1302
    %1595 = vmatprep.subr.bf16.mxu0 %v1307
    %1596 = vmatpush1.bf16.msra.mxu0 %v1306
    %1597 = vmatprep.subr.bf16.mxu0 %v1311
    %1598 = vmatpush1.bf16.msra.mxu0 %v1310
    %1599 = vmatprep.subr.bf16.mxu0 %v1315
    %1600 = vmatpush1.bf16.msra.mxu0 %v1314
    %1601 = vmatprep.subr.bf16.mxu0 %v1319
    %1602 = vmatpush1.bf16.msra.mxu0 %v1318
    %1603 = vmatprep.mubr.bf16.mxu0 %v657
    %1604 = vmatmul.mubr.bf16.gmra.mrb[0].mxu0 %v656
    %v1605 = vpop.f32.mrb[0].mxu0
    %v1606 = vadd.f32 %v1565, %v1605
    %v1607 = vpop.f32.mrb[0].mxu0
    %v1608 = vadd.f32 %v1567, %v1607
    %v1609 = vpop.f32.mrb[0].mxu0
    %v1610 = vpop.f32.mrb[0].mxu0
    %1611 = vdwg.mxu0
    %v1612 = vmax.f32 %v1524, 0.0
    %v1613 = vmax.f32 %v1526, 0.0
    %v1614 = vmax.f32 %v1606, 0.0
    %v1615 = vmax.f32 %v1608, 0.0
    %v1616 = vpack.c.bf16 %v1612, %v1612
    %v1617 = vpack.c.bf16 %v1613, %v1613
    %v1618 = vpack.c.bf16 %v1614, %v1614
    %v1619 = vpack.c.bf16 %v1615, %v1615
    %v1620 = vld [vmem:[%s9] sm:$0xf]
    %v1621 = vld [vmem:[%s9 + $0x4] sm:$0xf]
    %v1622 = vld [vmem:[%s9 + $0x8] sm:$0xf]
    %v1623 = vld [vmem:[%s9 + $0xc] sm:$0xf]
    %v1624 = vld [vmem:[%s9 + $0x10] sm:$0xf]
    %v1625 = vld [vmem:[%s9 + $0x14] sm:$0xf]
    %v1626 = vld [vmem:[%s9 + $0x18] sm:$0xf]
    %v1627 = vld [vmem:[%s9 + $0x1c] sm:$0xf]
    %v1628 = vld [vmem:[%s9 + $0x20] sm:$0xf]
    %v1629 = vld [vmem:[%s9 + $0x24] sm:$0xf]
    %v1630 = vld [vmem:[%s9 + $0x28] sm:$0xf]
    %v1631 = vld [vmem:[%s9 + $0x2c] sm:$0xf]
    %v1632 = vld [vmem:[%s9 + $0x30] sm:$0xf]
    %v1633 = vld [vmem:[%s9 + $0x34] sm:$0xf]
    %v1634 = vld [vmem:[%s9 + $0x38] sm:$0xf]
    %v1635 = vld [vmem:[%s9 + $0x3c] sm:$0xf]
    %v1636 = vld [vmem:[%s9 + $0x40] sm:$0xf]
    %v1637 = vld [vmem:[%s9 + $0x44] sm:$0xf]
    %v1638 = vld [vmem:[%s9 + $0x48] sm:$0xf]
    %v1639 = vld [vmem:[%s9 + $0x4c] sm:$0xf]
    %v1640 = vld [vmem:[%s9 + $0x50] sm:$0xf]
    %v1641 = vld [vmem:[%s9 + $0x54] sm:$0xf]
    %v1642 = vld [vmem:[%s9 + $0x58] sm:$0xf]
    %v1643 = vld [vmem:[%s9 + $0x5c] sm:$0xf]
    %v1644 = vld [vmem:[%s9 + $0x60] sm:$0xf]
    %v1645 = vld [vmem:[%s9 + $0x64] sm:$0xf]
    %v1646 = vld [vmem:[%s9 + $0x68] sm:$0xf]
    %v1647 = vld [vmem:[%s9 + $0x6c] sm:$0xf]
    %v1648 = vld [vmem:[%s9 + $0x70] sm:$0xf]
    %v1649 = vld [vmem:[%s9 + $0x74] sm:$0xf]
    %v1650 = vld [vmem:[%s9 + $0x78] sm:$0xf]
    %v1651 = vld [vmem:[%s9 + $0x7c] sm:$0xf]
    %v1652 = vld [vmem:[%s9 + $0x80] sm:$0xf]
    %v1653 = vld [vmem:[%s9 + $0x84] sm:$0xf]
    %v1654 = vld [vmem:[%s9 + $0x88] sm:$0xf]
    %v1655 = vld [vmem:[%s9 + $0x8c] sm:$0xf]
    %v1656 = vld [vmem:[%s9 + $0x90] sm:$0xf]
    %v1657 = vld [vmem:[%s9 + $0x94] sm:$0xf]
    %v1658 = vld [vmem:[%s9 + $0x98] sm:$0xf]
    %v1659 = vld [vmem:[%s9 + $0x9c] sm:$0xf]
    %v1660 = vld [vmem:[%s9 + $0xa0] sm:$0xf]
    %v1661 = vld [vmem:[%s9 + $0xa4] sm:$0xf]
    %v1662 = vld [vmem:[%s9 + $0xa8] sm:$0xf]
    %v1663 = vld [vmem:[%s9 + $0xac] sm:$0xf]
    %v1664 = vld [vmem:[%s9 + $0xb0] sm:$0xf]
    %v1665 = vld [vmem:[%s9 + $0xb4] sm:$0xf]
    %v1666 = vld [vmem:[%s9 + $0xb8] sm:$0xf]
    %v1667 = vld [vmem:[%s9 + $0xbc] sm:$0xf]
    %v1668 = vld [vmem:[%s9 + $0xc0] sm:$0xf]
    %v1669 = vld [vmem:[%s9 + $0xc4] sm:$0xf]
    %v1670 = vld [vmem:[%s9 + $0xc8] sm:$0xf]
    %v1671 = vld [vmem:[%s9 + $0xcc] sm:$0xf]
    %v1672 = vld [vmem:[%s9 + $0xd0] sm:$0xf]
    %v1673 = vld [vmem:[%s9 + $0xd4] sm:$0xf]
    %v1674 = vld [vmem:[%s9 + $0xd8] sm:$0xf]
    %v1675 = vld [vmem:[%s9 + $0xdc] sm:$0xf]
    %v1676 = vld [vmem:[%s9 + $0xe0] sm:$0xf]
    %v1677 = vld [vmem:[%s9 + $0xe4] sm:$0xf]
    %v1678 = vld [vmem:[%s9 + $0xe8] sm:$0xf]
    %v1679 = vld [vmem:[%s9 + $0xec] sm:$0xf]
    %v1680 = vld [vmem:[%s9 + $0xf0] sm:$0xf]
    %v1681 = vld [vmem:[%s9 + $0xf4] sm:$0xf]
    %v1682 = vld [vmem:[%s9 + $0xf8] sm:$0xf]
    %v1683 = vld [vmem:[%s9 + $0xfc] sm:$0xf]
    %v1684 = vld [vmem:[%s10] sm:$0x1]
    %v1686 = vlaneseq
    %v1687 = vshrl.u32 %v1686, 7
    %v1688 = vsub.s32 0, %v1687
    %v1689 = vrot.slane %v1684, %v1688
    %v1755 = vunpack.c.l.b16 %v1620
    %v1756 = vunpack.c.l.b16 %v1621
    %v1757 = vunpack.c.l.b16 %v1622
    %v1758 = vunpack.c.l.b16 %v1623
    %v1759 = vunpack.c.l.b16 %v1624
    %v1760 = vunpack.c.l.b16 %v1625
    %v1761 = vunpack.c.l.b16 %v1626
    %v1762 = vunpack.c.l.b16 %v1627
    %v1763 = vunpack.c.l.b16 %v1628
    %v1764 = vunpack.c.l.b16 %v1629
    %v1765 = vunpack.c.l.b16 %v1630
    %v1766 = vunpack.c.l.b16 %v1631
    %v1767 = vunpack.c.l.b16 %v1632
    %v1768 = vunpack.c.l.b16 %v1633
    %v1769 = vunpack.c.l.b16 %v1634
    %v1770 = vunpack.c.l.b16 %v1635
    %v1771 = vunpack.c.l.b16 %v1636
    %v1772 = vunpack.c.l.b16 %v1637
    %v1773 = vunpack.c.l.b16 %v1638
    %v1774 = vunpack.c.l.b16 %v1639
    %v1775 = vunpack.c.l.b16 %v1640
    %v1776 = vunpack.c.l.b16 %v1641
    %v1777 = vunpack.c.l.b16 %v1642
    %v1778 = vunpack.c.l.b16 %v1643
    %v1779 = vunpack.c.l.b16 %v1644
    %v1780 = vunpack.c.l.b16 %v1645
    %v1781 = vunpack.c.l.b16 %v1646
    %v1782 = vunpack.c.l.b16 %v1647
    %v1783 = vunpack.c.l.b16 %v1648
    %v1784 = vunpack.c.l.b16 %v1649
    %v1785 = vunpack.c.l.b16 %v1650
    %v1786 = vunpack.c.l.b16 %v1651
    %v1787 = vunpack.c.l.b16 %v1652
    %v1788 = vunpack.c.l.b16 %v1653
    %v1789 = vunpack.c.l.b16 %v1654
    %v1790 = vunpack.c.l.b16 %v1655
    %v1791 = vunpack.c.l.b16 %v1656
    %v1792 = vunpack.c.l.b16 %v1657
    %v1793 = vunpack.c.l.b16 %v1658
    %v1794 = vunpack.c.l.b16 %v1659
    %v1795 = vunpack.c.l.b16 %v1660
    %v1796 = vunpack.c.l.b16 %v1661
    %v1797 = vunpack.c.l.b16 %v1662
    %v1798 = vunpack.c.l.b16 %v1663
    %v1799 = vunpack.c.l.b16 %v1664
    %v1800 = vunpack.c.l.b16 %v1665
    %v1801 = vunpack.c.l.b16 %v1666
    %v1802 = vunpack.c.l.b16 %v1667
    %v1803 = vunpack.c.l.b16 %v1668
    %v1804 = vunpack.c.l.b16 %v1669
    %v1805 = vunpack.c.l.b16 %v1670
    %v1806 = vunpack.c.l.b16 %v1671
    %v1807 = vunpack.c.l.b16 %v1672
    %v1808 = vunpack.c.l.b16 %v1673
    %v1809 = vunpack.c.l.b16 %v1674
    %v1810 = vunpack.c.l.b16 %v1675
    %v1811 = vunpack.c.l.b16 %v1676
    %v1812 = vunpack.c.l.b16 %v1677
    %v1813 = vunpack.c.l.b16 %v1678
    %v1814 = vunpack.c.l.b16 %v1679
    %v1815 = vunpack.c.l.b16 %v1680
    %v1816 = vunpack.c.l.b16 %v1681
    %v1817 = vunpack.c.l.b16 %v1682
    %v1818 = vunpack.c.l.b16 %v1683
    %v1819 = vpack.c.b16 %v1756, %v1755
    %v1820 = vpack.c.b16 %v1758, %v1757
    %v1821 = vpack.c.b16 %v1760, %v1759
    %v1822 = vpack.c.b16 %v1762, %v1761
    %v1823 = vpack.c.b16 %v1764, %v1763
    %v1824 = vpack.c.b16 %v1766, %v1765
    %v1825 = vpack.c.b16 %v1768, %v1767
    %v1826 = vpack.c.b16 %v1770, %v1769
    %v1827 = vpack.c.b16 %v1772, %v1771
    %v1828 = vpack.c.b16 %v1774, %v1773
    %v1829 = vpack.c.b16 %v1776, %v1775
    %v1830 = vpack.c.b16 %v1778, %v1777
    %v1831 = vpack.c.b16 %v1780, %v1779
    %v1832 = vpack.c.b16 %v1782, %v1781
    %v1833 = vpack.c.b16 %v1784, %v1783
    %v1834 = vpack.c.b16 %v1786, %v1785
    %v1835 = vpack.c.b16 %v1788, %v1787
    %v1836 = vpack.c.b16 %v1790, %v1789
    %v1837 = vpack.c.b16 %v1792, %v1791
    %v1838 = vpack.c.b16 %v1794, %v1793
    %v1839 = vpack.c.b16 %v1796, %v1795
    %v1840 = vpack.c.b16 %v1798, %v1797
    %v1841 = vpack.c.b16 %v1800, %v1799
    %v1842 = vpack.c.b16 %v1802, %v1801
    %v1843 = vpack.c.b16 %v1804, %v1803
    %v1844 = vpack.c.b16 %v1806, %v1805
    %v1845 = vpack.c.b16 %v1808, %v1807
    %v1846 = vpack.c.b16 %v1810, %v1809
    %v1847 = vpack.c.b16 %v1812, %v1811
    %v1848 = vpack.c.b16 %v1814, %v1813
    %v1849 = vpack.c.b16 %v1816, %v1815
    %v1850 = vpack.c.b16 %v1818, %v1817
    %1883 = vmatprep.subr.bf16.mxu0 0
    %1884 = vmatpush1.bf16.msra.mxu0 %v1819
    %1885 = vmatprep.subr.bf16.mxu0 0
    %1886 = vmatpush1.bf16.msra.mxu0 %v1820
    %1887 = vmatprep.subr.bf16.mxu0 0
    %1888 = vmatpush1.bf16.msra.mxu0 %v1821
    %1889 = vmatprep.subr.bf16.mxu0 0
    %1890 = vmatpush1.bf16.msra.mxu0 %v1822
    %1891 = vmatprep.subr.bf16.mxu0 0
    %1892 = vmatpush1.bf16.msra.mxu0 %v1823
    %1893 = vmatprep.subr.bf16.mxu0 0
    %1894 = vmatpush1.bf16.msra.mxu0 %v1824
    %1895 = vmatprep.subr.bf16.mxu0 0
    %1896 = vmatpush1.bf16.msra.mxu0 %v1825
    %1897 = vmatprep.subr.bf16.mxu0 0
    %1898 = vmatpush1.bf16.msra.mxu0 %v1826
    %1899 = vmatprep.subr.bf16.mxu0 0
    %1900 = vmatpush1.bf16.msra.mxu0 %v1827
    %1901 = vmatprep.subr.bf16.mxu0 0
    %1902 = vmatpush1.bf16.msra.mxu0 %v1828
    %1903 = vmatprep.subr.bf16.mxu0 0
    %1904 = vmatpush1.bf16.msra.mxu0 %v1829
    %1905 = vmatprep.subr.bf16.mxu0 0
    %1906 = vmatpush1.bf16.msra.mxu0 %v1830
    %1907 = vmatprep.subr.bf16.mxu0 0
    %1908 = vmatpush1.bf16.msra.mxu0 %v1831
    %1909 = vmatprep.subr.bf16.mxu0 0
    %1910 = vmatpush1.bf16.msra.mxu0 %v1832
    %1911 = vmatprep.subr.bf16.mxu0 0
    %1912 = vmatpush1.bf16.msra.mxu0 %v1833
    %1913 = vmatprep.subr.bf16.mxu0 0
    %1914 = vmatpush1.bf16.msra.mxu0 %v1834
    %1915 = vmatprep.mubr.bf16.mxu0 %v1617
    %1916 = vmatmul.mubr.bf16.gmra.mrb[0].mxu0 %v1616
    %v1917 = vpop.f32.mrb[0].mxu0
    %v1918 = vadd.f32 %v1689, %v1917
    %v1919 = vpop.f32.mrb[0].mxu0
    %v1920 = vpop.f32.mrb[0].mxu0
    %v1921 = vpop.f32.mrb[0].mxu0
    %1922 = vdwg.mxu0
    %1923 = vmatprep.subr.bf16.mxu0 0
    %1924 = vmatpush1.bf16.msra.mxu0 %v1835
    %1925 = vmatprep.subr.bf16.mxu0 0
    %1926 = vmatpush1.bf16.msra.mxu0 %v1836
    %1927 = vmatprep.subr.bf16.mxu0 0
    %1928 = vmatpush1.bf16.msra.mxu0 %v1837
    %1929 = vmatprep.subr.bf16.mxu0 0
    %1930 = vmatpush1.bf16.msra.mxu0 %v1838
    %1931 = vmatprep.subr.bf16.mxu0 0
    %1932 = vmatpush1.bf16.msra.mxu0 %v1839
    %1933 = vmatprep.subr.bf16.mxu0 0
    %1934 = vmatpush1.bf16.msra.mxu0 %v1840
    %1935 = vmatprep.subr.bf16.mxu0 0
    %1936 = vmatpush1.bf16.msra.mxu0 %v1841
    %1937 = vmatprep.subr.bf16.mxu0 0
    %1938 = vmatpush1.bf16.msra.mxu0 %v1842
    %1939 = vmatprep.subr.bf16.mxu0 0
    %1940 = vmatpush1.bf16.msra.mxu0 %v1843
    %1941 = vmatprep.subr.bf16.mxu0 0
    %1942 = vmatpush1.bf16.msra.mxu0 %v1844
    %1943 = vmatprep.subr.bf16.mxu0 0
    %1944 = vmatpush1.bf16.msra.mxu0 %v1845
    %1945 = vmatprep.subr.bf16.mxu0 0
    %1946 = vmatpush1.bf16.msra.mxu0 %v1846
    %1947 = vmatprep.subr.bf16.mxu0 0
    %1948 = vmatpush1.bf16.msra.mxu0 %v1847
    %1949 = vmatprep.subr.bf16.mxu0 0
    %1950 = vmatpush1.bf16.msra.mxu0 %v1848
    %1951 = vmatprep.subr.bf16.mxu0 0
    %1952 = vmatpush1.bf16.msra.mxu0 %v1849
    %1953 = vmatprep.subr.bf16.mxu0 0
    %1954 = vmatpush1.bf16.msra.mxu0 %v1850
    %1955 = vmatprep.mubr.bf16.mxu0 %v1619
    %1956 = vmatmul.mubr.bf16.gmra.mrb[0].mxu0 %v1618
    %v1957 = vpop.f32.mrb[0].mxu0
    %v1958 = vadd.f32 %v1918, %v1957
    %v1959 = vpop.f32.mrb[0].mxu0
    %v1960 = vpop.f32.mrb[0].mxu0
    %v1961 = vpop.f32.mrb[0].mxu0
    %1962 = vdwg.mxu0
    %v1963 = vmax.f32 %v1958, -4.0
    %v1964 = vmin.f32 %v1963, 15.0
    %v1965 = vmul.f32 %v1964, 1.442695
    %v1966 = vpow.pop %v1965
    %v1967 = vld [vmem:[%s2] sm:$0xff]
    %1969 = vrot.lane.b32.xlu0 %v1967, 16
    %v1970 = vpop.permute.xlu0 %1969
    %v1972 = vmul.f32 %v1966, %v1970
    %1974 = vrot.lane.b32.xlu0 %v1972, 112
    %v1975 = vpop.permute.xlu0 %1974
    %v1977 = vadd.f32 %v1958, %v1975
    %1979 = vrot.lane.b32.xlu0 %v1977, 22
    %v1980 = vpop.permute.xlu0 %1979
    %v1982 = vsel %vm156, %v143, %v1980
    %vm1983 = vcmask 310272
    %v1984 = vsel %vm1983, %v1982, 0.0
    %v1985 = vpack.c.bf16 %v1984, %v1984
    %v1986 = vld [vmem:[#allocation7] sm:$0xff]
    %v1987 = vld [vmem:[#allocation7 + $0x8] sm:$0xff]
    %v1988 = vld [vmem:[#allocation7 + $0x10] sm:$0xff]
    %v1989 = vld [vmem:[#allocation7 + $0x18] sm:$0xff]
    %v1990 = vld [vmem:[#allocation7 + $0x20] sm:$0xff]
    %v1991 = vld [vmem:[#allocation7 + $0x28] sm:$0xff]
    %v1992 = vld [vmem:[#allocation7 + $0x30] sm:$0xff]
    %v1993 = vld [vmem:[#allocation7 + $0x38] sm:$0xff]
    %v1994 = vld [vmem:[#allocation7 + $0x40] sm:$0xff]
    %v1995 = vld [vmem:[#allocation7 + $0x48] sm:$0xff]
    %v1996 = vld [vmem:[#allocation7 + $0x50] sm:$0xff]
    %v1997 = vld [vmem:[#allocation7 + $0x58] sm:$0xff]
    %v1998 = vld [vmem:[#allocation7 + $0x60] sm:$0xff]
    %v1999 = vld [vmem:[#allocation7 + $0x68] sm:$0xff]
    %v2000 = vld [vmem:[#allocation7 + $0x70] sm:$0xff]
    %v2001 = vld [vmem:[#allocation7 + $0x78] sm:$0xff]
    %v2002 = vld [vmem:[#allocation7 + $0x80] sm:$0xff]
    %v2003 = vld [vmem:[#allocation7 + $0x88] sm:$0xff]
    %v2004 = vld [vmem:[#allocation7 + $0x90] sm:$0xff]
    %v2005 = vld [vmem:[#allocation7 + $0x98] sm:$0xff]
    %v2006 = vld [vmem:[#allocation7 + $0xa0] sm:$0xff]
    %v2007 = vld [vmem:[#allocation7 + $0xa8] sm:$0xff]
    %v2008 = vld [vmem:[#allocation7 + $0xb0] sm:$0xff]
    %v2009 = vld [vmem:[#allocation7 + $0xb8] sm:$0xff]
    %v2010 = vld [vmem:[#allocation7 + $0xc0] sm:$0xff]
    %v2011 = vld [vmem:[#allocation7 + $0xc8] sm:$0xff]
    %v2012 = vld [vmem:[#allocation7 + $0xd0] sm:$0xff]
    %v2013 = vld [vmem:[#allocation7 + $0xd8] sm:$0xff]
    %v2014 = vld [vmem:[#allocation7 + $0xe0] sm:$0xff]
    %v2015 = vld [vmem:[#allocation7 + $0xe8] sm:$0xff]
    %v2016 = vld [vmem:[#allocation7 + $0xf0] sm:$0xff]
    %v2017 = vld [vmem:[#allocation7 + $0xf8] sm:$0xff]
    %v2018 = vld [vmem:[#allocation7 + $0x100] sm:$0xff]
    %v2019 = vld [vmem:[#allocation7 + $0x108] sm:$0xff]
    %v2020 = vld [vmem:[#allocation7 + $0x110] sm:$0xff]
    %v2021 = vld [vmem:[#allocation7 + $0x118] sm:$0xff]
    %v2022 = vld [vmem:[#allocation7 + $0x120] sm:$0xff]
    %v2023 = vld [vmem:[#allocation7 + $0x128] sm:$0xff]
    %v2024 = vld [vmem:[#allocation7 + $0x130] sm:$0xff]
    %v2025 = vld [vmem:[#allocation7 + $0x138] sm:$0xff]
    %v2026 = vld [vmem:[#allocation7 + $0x140] sm:$0xff]
    %v2027 = vld [vmem:[#allocation7 + $0x148] sm:$0xff]
    %v2028 = vld [vmem:[#allocation7 + $0x150] sm:$0xff]
    %v2029 = vld [vmem:[#allocation7 + $0x158] sm:$0xff]
    %v2030 = vld [vmem:[#allocation7 + $0x160] sm:$0xff]
    %v2031 = vld [vmem:[#allocation7 + $0x168] sm:$0xff]
    %v2032 = vld [vmem:[#allocation7 + $0x170] sm:$0xff]
    %v2033 = vld [vmem:[#allocation7 + $0x178] sm:$0xff]
    %v2034 = vld [vmem:[#allocation7 + $0x180] sm:$0xff]
    %v2035 = vld [vmem:[#allocation7 + $0x188] sm:$0xff]
    %v2036 = vld [vmem:[#allocation7 + $0x190] sm:$0xff]
    %v2037 = vld [vmem:[#allocation7 + $0x198] sm:$0xff]
    %v2038 = vld [vmem:[#allocation7 + $0x1a0] sm:$0xff]
    %v2039 = vld [vmem:[#allocation7 + $0x1a8] sm:$0xff]
    %v2040 = vld [vmem:[#allocation7 + $0x1b0] sm:$0xff]
    %v2041 = vld [vmem:[#allocation7 + $0x1b8] sm:$0xff]
    %v2042 = vld [vmem:[#allocation7 + $0x1c0] sm:$0xff]
    %v2043 = vld [vmem:[#allocation7 + $0x1c8] sm:$0xff]
    %v2044 = vld [vmem:[#allocation7 + $0x1d0] sm:$0xff]
    %v2045 = vld [vmem:[#allocation7 + $0x1d8] sm:$0xff]
    %v2046 = vld [vmem:[#allocation7 + $0x1e0] sm:$0xff]
    %v2047 = vld [vmem:[#allocation7 + $0x1e8] sm:$0xff]
    %v2048 = vld [vmem:[#allocation7 + $0x1f0] sm:$0xff]
    %v2049 = vld [vmem:[#allocation7 + $0x1f8] sm:$0xff]
    %v2050 = vld [vmem:[%s12] sm:$0xf]
    %v2052 = vlaneseq
    %v2053 = vshrl.u32 %v2052, 7
    %v2054 = vsub.s32 0, %v2053
    %v2055 = vrot.slane %v2050, %v2054
    %v2056 = vlaneseq
    %v2057 = vshrl.u32 %v2056, 7
    %v2058 = vsub.s32 1, %v2057
    %v2059 = vrot.slane %v2050, %v2058
    %v2060 = vlaneseq
    %v2061 = vshrl.u32 %v2060, 7
    %v2062 = vsub.s32 2, %v2061
    %v2063 = vrot.slane %v2050, %v2062
    %v2064 = vlaneseq
    %v2065 = vshrl.u32 %v2064, 7
    %v2066 = vsub.s32 3, %v2065
    %v2067 = vrot.slane %v2050, %v2066
    %v2136 = vunpack.c.l.b16 %v1986
    %v2137 = vunpack.c.h.b16 %v1986
    %v2138 = vunpack.c.l.b16 %v1987
    %v2139 = vunpack.c.h.b16 %v1987
    %v2140 = vunpack.c.l.b16 %v1988
    %v2141 = vunpack.c.h.b16 %v1988
    %v2142 = vunpack.c.l.b16 %v1989
    %v2143 = vunpack.c.h.b16 %v1989
    %v2144 = vunpack.c.l.b16 %v1990
    %v2145 = vunpack.c.h.b16 %v1990
    %v2146 = vunpack.c.l.b16 %v1991
    %v2147 = vunpack.c.h.b16 %v1991
    %v2148 = vunpack.c.l.b16 %v1992
    %v2149 = vunpack.c.h.b16 %v1992
    %v2150 = vunpack.c.l.b16 %v1993
    %v2151 = vunpack.c.h.b16 %v1993
    %v2152 = vunpack.c.l.b16 %v1994
    %v2153 = vunpack.c.h.b16 %v1994
    %v2154 = vunpack.c.l.b16 %v1995
    %v2155 = vunpack.c.h.b16 %v1995
    %v2156 = vunpack.c.l.b16 %v1996
    %v2157 = vunpack.c.h.b16 %v1996
    %v2158 = vunpack.c.l.b16 %v1997
    %v2159 = vunpack.c.h.b16 %v1997
    %v2160 = vunpack.c.l.b16 %v1998
    %v2161 = vunpack.c.h.b16 %v1998
    %v2162 = vunpack.c.l.b16 %v1999
    %v2163 = vunpack.c.h.b16 %v1999
    %v2164 = vunpack.c.l.b16 %v2000
    %v2165 = vunpack.c.h.b16 %v2000
    %v2166 = vunpack.c.l.b16 %v2001
    %v2167 = vunpack.c.h.b16 %v2001
    %v2168 = vunpack.c.l.b16 %v2002
    %v2169 = vunpack.c.h.b16 %v2002
    %v2170 = vunpack.c.l.b16 %v2003
    %v2171 = vunpack.c.h.b16 %v2003
    %v2172 = vunpack.c.l.b16 %v2004
    %v2173 = vunpack.c.h.b16 %v2004
    %v2174 = vunpack.c.l.b16 %v2005
    %v2175 = vunpack.c.h.b16 %v2005
    %v2176 = vunpack.c.l.b16 %v2006
    %v2177 = vunpack.c.h.b16 %v2006
    %v2178 = vunpack.c.l.b16 %v2007
    %v2179 = vunpack.c.h.b16 %v2007
    %v2180 = vunpack.c.l.b16 %v2008
    %v2181 = vunpack.c.h.b16 %v2008
    %v2182 = vunpack.c.l.b16 %v2009
    %v2183 = vunpack.c.h.b16 %v2009
    %v2184 = vunpack.c.l.b16 %v2010
    %v2185 = vunpack.c.h.b16 %v2010
    %v2186 = vunpack.c.l.b16 %v2011
    %v2187 = vunpack.c.h.b16 %v2011
    %v2188 = vunpack.c.l.b16 %v2012
    %v2189 = vunpack.c.h.b16 %v2012
    %v2190 = vunpack.c.l.b16 %v2013
    %v2191 = vunpack.c.h.b16 %v2013
    %v2192 = vunpack.c.l.b16 %v2014
    %v2193 = vunpack.c.h.b16 %v2014
    %v2194 = vunpack.c.l.b16 %v2015
    %v2195 = vunpack.c.h.b16 %v2015
    %v2196 = vunpack.c.l.b16 %v2016
    %v2197 = vunpack.c.h.b16 %v2016
    %v2198 = vunpack.c.l.b16 %v2017
    %v2199 = vunpack.c.h.b16 %v2017
    %v2200 = vunpack.c.l.b16 %v2018
    %v2201 = vunpack.c.h.b16 %v2018
    %v2202 = vunpack.c.l.b16 %v2019
    %v2203 = vunpack.c.h.b16 %v2019
    %v2204 = vunpack.c.l.b16 %v2020
    %v2205 = vunpack.c.h.b16 %v2020
    %v2206 = vunpack.c.l.b16 %v2021
    %v2207 = vunpack.c.h.b16 %v2021
    %v2208 = vunpack.c.l.b16 %v2022
    %v2209 = vunpack.c.h.b16 %v2022
    %v2210 = vunpack.c.l.b16 %v2023
    %v2211 = vunpack.c.h.b16 %v2023
    %v2212 = vunpack.c.l.b16 %v2024
    %v2213 = vunpack.c.h.b16 %v2024
    %v2214 = vunpack.c.l.b16 %v2025
    %v2215 = vunpack.c.h.b16 %v2025
    %v2216 = vunpack.c.l.b16 %v2026
    %v2217 = vunpack.c.h.b16 %v2026
    %v2218 = vunpack.c.l.b16 %v2027
    %v2219 = vunpack.c.h.b16 %v2027
    %v2220 = vunpack.c.l.b16 %v2028
    %v2221 = vunpack.c.h.b16 %v2028
    %v2222 = vunpack.c.l.b16 %v2029
    %v2223 = vunpack.c.h.b16 %v2029
    %v2224 = vunpack.c.l.b16 %v2030
    %v2225 = vunpack.c.h.b16 %v2030
    %v2226 = vunpack.c.l.b16 %v2031
    %v2227 = vunpack.c.h.b16 %v2031
    %v2228 = vunpack.c.l.b16 %v2032
    %v2229 = vunpack.c.h.b16 %v2032
    %v2230 = vunpack.c.l.b16 %v2033
    %v2231 = vunpack.c.h.b16 %v2033
    %v2232 = vunpack.c.l.b16 %v2034
    %v2233 = vunpack.c.h.b16 %v2034
    %v2234 = vunpack.c.l.b16 %v2035
    %v2235 = vunpack.c.h.b16 %v2035
    %v2236 = vunpack.c.l.b16 %v2036
    %v2237 = vunpack.c.h.b16 %v2036
    %v2238 = vunpack.c.l.b16 %v2037
    %v2239 = vunpack.c.h.b16 %v2037
    %v2240 = vunpack.c.l.b16 %v2038
    %v2241 = vunpack.c.h.b16 %v2038
    %v2242 = vunpack.c.l.b16 %v2039
    %v2243 = vunpack.c.h.b16 %v2039
    %v2244 = vunpack.c.l.b16 %v2040
    %v2245 = vunpack.c.h.b16 %v2040
    %v2246 = vunpack.c.l.b16 %v2041
    %v2247 = vunpack.c.h.b16 %v2041
    %v2248 = vunpack.c.l.b16 %v2042
    %v2249 = vunpack.c.h.b16 %v2042
    %v2250 = vunpack.c.l.b16 %v2043
    %v2251 = vunpack.c.h.b16 %v2043
    %v2252 = vunpack.c.l.b16 %v2044
    %v2253 = vunpack.c.h.b16 %v2044
    %v2254 = vunpack.c.l.b16 %v2045
    %v2255 = vunpack.c.h.b16 %v2045
    %v2256 = vunpack.c.l.b16 %v2046
    %v2257 = vunpack.c.h.b16 %v2046
    %v2258 = vunpack.c.l.b16 %v2047
    %v2259 = vunpack.c.h.b16 %v2047
    %v2260 = vunpack.c.l.b16 %v2048
    %v2261 = vunpack.c.h.b16 %v2048
    %v2262 = vunpack.c.l.b16 %v2049
    %v2263 = vunpack.c.h.b16 %v2049
    %v2264 = vpack.c.b16 %v2140, %v2136
    %v2265 = vpack.c.b16 %v2141, %v2137
    %v2266 = vpack.c.b16 %v2142, %v2138
    %v2267 = vpack.c.b16 %v2143, %v2139
    %v2268 = vpack.c.b16 %v2148, %v2144
    %v2269 = vpack.c.b16 %v2149, %v2145
    %v2270 = vpack.c.b16 %v2150, %v2146
    %v2271 = vpack.c.b16 %v2151, %v2147
    %v2272 = vpack.c.b16 %v2156, %v2152
    %v2273 = vpack.c.b16 %v2157, %v2153
    %v2274 = vpack.c.b16 %v2158, %v2154
    %v2275 = vpack.c.b16 %v2159, %v2155
    %v2276 = vpack.c.b16 %v2164, %v2160
    %v2277 = vpack.c.b16 %v2165, %v2161
    %v2278 = vpack.c.b16 %v2166, %v2162
    %v2279 = vpack.c.b16 %v2167, %v2163
    %v2280 = vpack.c.b16 %v2172, %v2168
    %v2281 = vpack.c.b16 %v2173, %v2169
    %v2282 = vpack.c.b16 %v2174, %v2170
    %v2283 = vpack.c.b16 %v2175, %v2171
    %v2284 = vpack.c.b16 %v2180, %v2176
    %v2285 = vpack.c.b16 %v2181, %v2177
    %v2286 = vpack.c.b16 %v2182, %v2178
    %v2287 = vpack.c.b16 %v2183, %v2179
    %v2288 = vpack.c.b16 %v2188, %v2184
    %v2289 = vpack.c.b16 %v2189, %v2185
    %v2290 = vpack.c.b16 %v2190, %v2186
    %v2291 = vpack.c.b16 %v2191, %v2187
    %v2292 = vpack.c.b16 %v2196, %v2192
    %v2293 = vpack.c.b16 %v2197, %v2193
    %v2294 = vpack.c.b16 %v2198, %v2194
    %v2295 = vpack.c.b16 %v2199, %v2195
    %v2296 = vpack.c.b16 %v2204, %v2200
    %v2297 = vpack.c.b16 %v2205, %v2201
    %v2298 = vpack.c.b16 %v2206, %v2202
    %v2299 = vpack.c.b16 %v2207, %v2203
    %v2300 = vpack.c.b16 %v2212, %v2208
    %v2301 = vpack.c.b16 %v2213, %v2209
    %v2302 = vpack.c.b16 %v2214, %v2210
    %v2303 = vpack.c.b16 %v2215, %v2211
    %v2304 = vpack.c.b16 %v2220, %v2216
    %v2305 = vpack.c.b16 %v2221, %v2217
    %v2306 = vpack.c.b16 %v2222, %v2218
    %v2307 = vpack.c.b16 %v2223, %v2219
    %v2308 = vpack.c.b16 %v2228, %v2224
    %v2309 = vpack.c.b16 %v2229, %v2225
    %v2310 = vpack.c.b16 %v2230, %v2226
    %v2311 = vpack.c.b16 %v2231, %v2227
    %v2312 = vpack.c.b16 %v2236, %v2232
    %v2313 = vpack.c.b16 %v2237, %v2233
    %v2314 = vpack.c.b16 %v2238, %v2234
    %v2315 = vpack.c.b16 %v2239, %v2235
    %v2316 = vpack.c.b16 %v2244, %v2240
    %v2317 = vpack.c.b16 %v2245, %v2241
    %v2318 = vpack.c.b16 %v2246, %v2242
    %v2319 = vpack.c.b16 %v2247, %v2243
    %v2320 = vpack.c.b16 %v2252, %v2248
    %v2321 = vpack.c.b16 %v2253, %v2249
    %v2322 = vpack.c.b16 %v2254, %v2250
    %v2323 = vpack.c.b16 %v2255, %v2251
    %v2324 = vpack.c.b16 %v2260, %v2256
    %v2325 = vpack.c.b16 %v2261, %v2257
    %v2326 = vpack.c.b16 %v2262, %v2258
    %v2327 = vpack.c.b16 %v2263, %v2259
    %2392 = vmatprep.subr.bf16.mxu0 %v2265
    %2393 = vmatpush1.bf16.msra.mxu0 %v2264
    %2394 = vmatprep.subr.bf16.mxu0 %v2269
    %2395 = vmatpush1.bf16.msra.mxu0 %v2268
    %2396 = vmatprep.subr.bf16.mxu0 %v2273
    %2397 = vmatpush1.bf16.msra.mxu0 %v2272
    %2398 = vmatprep.subr.bf16.mxu0 %v2277
    %2399 = vmatpush1.bf16.msra.mxu0 %v2276
    %2400 = vmatprep.subr.bf16.mxu0 %v2281
    %2401 = vmatpush1.bf16.msra.mxu0 %v2280
    %2402 = vmatprep.subr.bf16.mxu0 %v2285
    %2403 = vmatpush1.bf16.msra.mxu0 %v2284
    %2404 = vmatprep.subr.bf16.mxu0 %v2289
    %2405 = vmatpush1.bf16.msra.mxu0 %v2288
    %2406 = vmatprep.subr.bf16.mxu0 %v2293
    %2407 = vmatpush1.bf16.msra.mxu0 %v2292
    %2408 = vmatprep.subr.bf16.mxu0 %v2297
    %2409 = vmatpush1.bf16.msra.mxu0 %v2296
    %2410 = vmatprep.subr.bf16.mxu0 %v2301
    %2411 = vmatpush1.bf16.msra.mxu0 %v2300
    %2412 = vmatprep.subr.bf16.mxu0 %v2305
    %2413 = vmatpush1.bf16.msra.mxu0 %v2304
    %2414 = vmatprep.subr.bf16.mxu0 %v2309
    %2415 = vmatpush1.bf16.msra.mxu0 %v2308
    %2416 = vmatprep.subr.bf16.mxu0 %v2313
    %2417 = vmatpush1.bf16.msra.mxu0 %v2312
    %2418 = vmatprep.subr.bf16.mxu0 %v2317
    %2419 = vmatpush1.bf16.msra.mxu0 %v2316
    %2420 = vmatprep.subr.bf16.mxu0 %v2321
    %2421 = vmatpush1.bf16.msra.mxu0 %v2320
    %2422 = vmatprep.subr.bf16.mxu0 %v2325
    %2423 = vmatpush1.bf16.msra.mxu0 %v2324
    %2424 = vmatprep.mubr.bf16.mxu0 %v1985
    %2425 = vmatmul.mubr.bf16.gmra.mrb[0].mxu0 %v160
    %v2426 = vpop.f32.mrb[0].mxu0
    %v2427 = vadd.f32 %v2055, %v2426
    %v2428 = vpop.f32.mrb[0].mxu0
    %v2429 = vadd.f32 %v2059, %v2428
    %v2430 = vpop.f32.mrb[0].mxu0
    %v2431 = vpop.f32.mrb[0].mxu0
    %2432 = vdwg.mxu0
    %2433 = vmatprep.subr.bf16.mxu0 %v2267
    %2434 = vmatpush1.bf16.msra.mxu0 %v2266
    %2435 = vmatprep.subr.bf16.mxu0 %v2271
    %2436 = vmatpush1.bf16.msra.mxu0 %v2270
    %2437 = vmatprep.subr.bf16.mxu0 %v2275
    %2438 = vmatpush1.bf16.msra.mxu0 %v2274
    %2439 = vmatprep.subr.bf16.mxu0 %v2279
    %2440 = vmatpush1.bf16.msra.mxu0 %v2278
    %2441 = vmatprep.subr.bf16.mxu0 %v2283
    %2442 = vmatpush1.bf16.msra.mxu0 %v2282
    %2443 = vmatprep.subr.bf16.mxu0 %v2287
    %2444 = vmatpush1.bf16.msra.mxu0 %v2286
    %2445 = vmatprep.subr.bf16.mxu0 %v2291
    %2446 = vmatpush1.bf16.msra.mxu0 %v2290
    %2447 = vmatprep.subr.bf16.mxu0 %v2295
    %2448 = vmatpush1.bf16.msra.mxu0 %v2294
    %2449 = vmatprep.subr.bf16.mxu0 %v2299
    %2450 = vmatpush1.bf16.msra.mxu0 %v2298
    %2451 = vmatprep.subr.bf16.mxu0 %v2303
    %2452 = vmatpush1.bf16.msra.mxu0 %v2302
    %2453 = vmatprep.subr.bf16.mxu0 %v2307
    %2454 = vmatpush1.bf16.msra.mxu0 %v2306
    %2455 = vmatprep.subr.bf16.mxu0 %v2311
    %2456 = vmatpush1.bf16.msra.mxu0 %v2310
    %2457 = vmatprep.subr.bf16.mxu0 %v2315
    %2458 = vmatpush1.bf16.msra.mxu0 %v2314
    %2459 = vmatprep.subr.bf16.mxu0 %v2319
    %2460 = vmatpush1.bf16.msra.mxu0 %v2318
    %2461 = vmatprep.subr.bf16.mxu0 %v2323
    %2462 = vmatpush1.bf16.msra.mxu0 %v2322
    %2463 = vmatprep.subr.bf16.mxu0 %v2327
    %2464 = vmatpush1.bf16.msra.mxu0 %v2326
    %2465 = vmatprep.mubr.bf16.mxu0 %v1985
    %2466 = vmatmul.mubr.bf16.gmra.mrb[0].mxu0 %v160
    %v2467 = vpop.f32.mrb[0].mxu0
    %v2468 = vadd.f32 %v2063, %v2467
    %v2469 = vpop.f32.mrb[0].mxu0
    %v2470 = vadd.f32 %v2067, %v2469
    %v2471 = vpop.f32.mrb[0].mxu0
    %v2472 = vpop.f32.mrb[0].mxu0
    %2473 = vdwg.mxu0
    %v2474 = vmax.f32 %v2427, 0.0
    %v2475 = vmax.f32 %v2429, 0.0
    %v2476 = vmax.f32 %v2468, 0.0
    %v2477 = vmax.f32 %v2470, 0.0
    %v2478 = vpack.c.bf16 %v2474, %v2474
    %v2479 = vpack.c.bf16 %v2475, %v2475
    %v2480 = vpack.c.bf16 %v2476, %v2476
    %v2481 = vpack.c.bf16 %v2477, %v2477
    %v2482 = vld [vmem:[#allocation8] sm:$0xff]
    %v2483 = vld [vmem:[#allocation8 + $0x8] sm:$0xff]
    %v2484 = vld [vmem:[#allocation8 + $0x10] sm:$0xff]
    %v2485 = vld [vmem:[#allocation8 + $0x18] sm:$0xff]
    %v2486 = vld [vmem:[#allocation8 + $0x20] sm:$0xff]
    %v2487 = vld [vmem:[#allocation8 + $0x28] sm:$0xff]
    %v2488 = vld [vmem:[#allocation8 + $0x30] sm:$0xff]
    %v2489 = vld [vmem:[#allocation8 + $0x38] sm:$0xff]
    %v2490 = vld [vmem:[#allocation8 + $0x40] sm:$0xff]
    %v2491 = vld [vmem:[#allocation8 + $0x48] sm:$0xff]
    %v2492 = vld [vmem:[#allocation8 + $0x50] sm:$0xff]
    %v2493 = vld [vmem:[#allocation8 + $0x58] sm:$0xff]
    %v2494 = vld [vmem:[#allocation8 + $0x60] sm:$0xff]
    %v2495 = vld [vmem:[#allocation8 + $0x68] sm:$0xff]
    %v2496 = vld [vmem:[#allocation8 + $0x70] sm:$0xff]
    %v2497 = vld [vmem:[#allocation8 + $0x78] sm:$0xff]
    %v2498 = vld [vmem:[#allocation8 + $0x80] sm:$0xff]
    %v2499 = vld [vmem:[#allocation8 + $0x88] sm:$0xff]
    %v2500 = vld [vmem:[#allocation8 + $0x90] sm:$0xff]
    %v2501 = vld [vmem:[#allocation8 + $0x98] sm:$0xff]
    %v2502 = vld [vmem:[#allocation8 + $0xa0] sm:$0xff]
    %v2503 = vld [vmem:[#allocation8 + $0xa8] sm:$0xff]
    %v2504 = vld [vmem:[#allocation8 + $0xb0] sm:$0xff]
    %v2505 = vld [vmem:[#allocation8 + $0xb8] sm:$0xff]
    %v2506 = vld [vmem:[#allocation8 + $0xc0] sm:$0xff]
    %v2507 = vld [vmem:[#allocation8 + $0xc8] sm:$0xff]
    %v2508 = vld [vmem:[#allocation8 + $0xd0] sm:$0xff]
    %v2509 = vld [vmem:[#allocation8 + $0xd8] sm:$0xff]
    %v2510 = vld [vmem:[#allocation8 + $0xe0] sm:$0xff]
    %v2511 = vld [vmem:[#allocation8 + $0xe8] sm:$0xff]
    %v2512 = vld [vmem:[#allocation8 + $0xf0] sm:$0xff]
    %v2513 = vld [vmem:[#allocation8 + $0xf8] sm:$0xff]
    %v2514 = vld [vmem:[#allocation8 + $0x100] sm:$0xff]
    %v2515 = vld [vmem:[#allocation8 + $0x108] sm:$0xff]
    %v2516 = vld [vmem:[#allocation8 + $0x110] sm:$0xff]
    %v2517 = vld [vmem:[#allocation8 + $0x118] sm:$0xff]
    %v2518 = vld [vmem:[#allocation8 + $0x120] sm:$0xff]
    %v2519 = vld [vmem:[#allocation8 + $0x128] sm:$0xff]
    %v2520 = vld [vmem:[#allocation8 + $0x130] sm:$0xff]
    %v2521 = vld [vmem:[#allocation8 + $0x138] sm:$0xff]
    %v2522 = vld [vmem:[#allocation8 + $0x140] sm:$0xff]
    %v2523 = vld [vmem:[#allocation8 + $0x148] sm:$0xff]
    %v2524 = vld [vmem:[#allocation8 + $0x150] sm:$0xff]
    %v2525 = vld [vmem:[#allocation8 + $0x158] sm:$0xff]
    %v2526 = vld [vmem:[#allocation8 + $0x160] sm:$0xff]
    %v2527 = vld [vmem:[#allocation8 + $0x168] sm:$0xff]
    %v2528 = vld [vmem:[#allocation8 + $0x170] sm:$0xff]
    %v2529 = vld [vmem:[#allocation8 + $0x178] sm:$0xff]
    %v2530 = vld [vmem:[#allocation8 + $0x180] sm:$0xff]
    %v2531 = vld [vmem:[#allocation8 + $0x188] sm:$0xff]
    %v2532 = vld [vmem:[#allocation8 + $0x190] sm:$0xff]
    %v2533 = vld [vmem:[#allocation8 + $0x198] sm:$0xff]
    %v2534 = vld [vmem:[#allocation8 + $0x1a0] sm:$0xff]
    %v2535 = vld [vmem:[#allocation8 + $0x1a8] sm:$0xff]
    %v2536 = vld [vmem:[#allocation8 + $0x1b0] sm:$0xff]
    %v2537 = vld [vmem:[#allocation8 + $0x1b8] sm:$0xff]
    %v2538 = vld [vmem:[#allocation8 + $0x1c0] sm:$0xff]
    %v2539 = vld [vmem:[#allocation8 + $0x1c8] sm:$0xff]
    %v2540 = vld [vmem:[#allocation8 + $0x1d0] sm:$0xff]
    %v2541 = vld [vmem:[#allocation8 + $0x1d8] sm:$0xff]
    %v2542 = vld [vmem:[#allocation8 + $0x1e0] sm:$0xff]
    %v2543 = vld [vmem:[#allocation8 + $0x1e8] sm:$0xff]
    %v2544 = vld [vmem:[#allocation8 + $0x1f0] sm:$0xff]
    %v2545 = vld [vmem:[#allocation8 + $0x1f8] sm:$0xff]
    %v2546 = vld [vmem:[#allocation8 + $0x200] sm:$0xff]
    %v2547 = vld [vmem:[#allocation8 + $0x208] sm:$0xff]
    %v2548 = vld [vmem:[#allocation8 + $0x210] sm:$0xff]
    %v2549 = vld [vmem:[#allocation8 + $0x218] sm:$0xff]
    %v2550 = vld [vmem:[#allocation8 + $0x220] sm:$0xff]
    %v2551 = vld [vmem:[#allocation8 + $0x228] sm:$0xff]
    %v2552 = vld [vmem:[#allocation8 + $0x230] sm:$0xff]
    %v2553 = vld [vmem:[#allocation8 + $0x238] sm:$0xff]
    %v2554 = vld [vmem:[#allocation8 + $0x240] sm:$0xff]
    %v2555 = vld [vmem:[#allocation8 + $0x248] sm:$0xff]
    %v2556 = vld [vmem:[#allocation8 + $0x250] sm:$0xff]
    %v2557 = vld [vmem:[#allocation8 + $0x258] sm:$0xff]
    %v2558 = vld [vmem:[#allocation8 + $0x260] sm:$0xff]
    %v2559 = vld [vmem:[#allocation8 + $0x268] sm:$0xff]
    %v2560 = vld [vmem:[#allocation8 + $0x270] sm:$0xff]
    %v2561 = vld [vmem:[#allocation8 + $0x278] sm:$0xff]
    %v2562 = vld [vmem:[#allocation8 + $0x280] sm:$0xff]
    %v2563 = vld [vmem:[#allocation8 + $0x288] sm:$0xff]
    %v2564 = vld [vmem:[#allocation8 + $0x290] sm:$0xff]
    %v2565 = vld [vmem:[#allocation8 + $0x298] sm:$0xff]
    %v2566 = vld [vmem:[#allocation8 + $0x2a0] sm:$0xff]
    %v2567 = vld [vmem:[#allocation8 + $0x2a8] sm:$0xff]
    %v2568 = vld [vmem:[#allocation8 + $0x2b0] sm:$0xff]
    %v2569 = vld [vmem:[#allocation8 + $0x2b8] sm:$0xff]
    %v2570 = vld [vmem:[#allocation8 + $0x2c0] sm:$0xff]
    %v2571 = vld [vmem:[#allocation8 + $0x2c8] sm:$0xff]
    %v2572 = vld [vmem:[#allocation8 + $0x2d0] sm:$0xff]
    %v2573 = vld [vmem:[#allocation8 + $0x2d8] sm:$0xff]
    %v2574 = vld [vmem:[#allocation8 + $0x2e0] sm:$0xff]
    %v2575 = vld [vmem:[#allocation8 + $0x2e8] sm:$0xff]
    %v2576 = vld [vmem:[#allocation8 + $0x2f0] sm:$0xff]
    %v2577 = vld [vmem:[#allocation8 + $0x2f8] sm:$0xff]
    %v2578 = vld [vmem:[#allocation8 + $0x300] sm:$0xff]
    %v2579 = vld [vmem:[#allocation8 + $0x308] sm:$0xff]
    %v2580 = vld [vmem:[#allocation8 + $0x310] sm:$0xff]
    %v2581 = vld [vmem:[#allocation8 + $0x318] sm:$0xff]
    %v2582 = vld [vmem:[#allocation8 + $0x320] sm:$0xff]
    %v2583 = vld [vmem:[#allocation8 + $0x328] sm:$0xff]
    %v2584 = vld [vmem:[#allocation8 + $0x330] sm:$0xff]
    %v2585 = vld [vmem:[#allocation8 + $0x338] sm:$0xff]
    %v2586 = vld [vmem:[#allocation8 + $0x340] sm:$0xff]
    %v2587 = vld [vmem:[#allocation8 + $0x348] sm:$0xff]
    %v2588 = vld [vmem:[#allocation8 + $0x350] sm:$0xff]
    %v2589 = vld [vmem:[#allocation8 + $0x358] sm:$0xff]
    %v2590 = vld [vmem:[#allocation8 + $0x360] sm:$0xff]
    %v2591 = vld [vmem:[#allocation8 + $0x368] sm:$0xff]
    %v2592 = vld [vmem:[#allocation8 + $0x370] sm:$0xff]
    %v2593 = vld [vmem:[#allocation8 + $0x378] sm:$0xff]
    %v2594 = vld [vmem:[#allocation8 + $0x380] sm:$0xff]
    %v2595 = vld [vmem:[#allocation8 + $0x388] sm:$0xff]
    %v2596 = vld [vmem:[#allocation8 + $0x390] sm:$0xff]
    %v2597 = vld [vmem:[#allocation8 + $0x398] sm:$0xff]
    %v2598 = vld [vmem:[#allocation8 + $0x3a0] sm:$0xff]
    %v2599 = vld [vmem:[#allocation8 + $0x3a8] sm:$0xff]
    %v2600 = vld [vmem:[#allocation8 + $0x3b0] sm:$0xff]
    %v2601 = vld [vmem:[#allocation8 + $0x3b8] sm:$0xff]
    %v2602 = vld [vmem:[#allocation8 + $0x3c0] sm:$0xff]
    %v2603 = vld [vmem:[#allocation8 + $0x3c8] sm:$0xff]
    %v2604 = vld [vmem:[#allocation8 + $0x3d0] sm:$0xff]
    %v2605 = vld [vmem:[#allocation8 + $0x3d8] sm:$0xff]
    %v2606 = vld [vmem:[#allocation8 + $0x3e0] sm:$0xff]
    %v2607 = vld [vmem:[#allocation8 + $0x3e8] sm:$0xff]
    %v2608 = vld [vmem:[#allocation8 + $0x3f0] sm:$0xff]
    %v2609 = vld [vmem:[#allocation8 + $0x3f8] sm:$0xff]
    %v2610 = vld [vmem:[%s14] sm:$0xf]
    %v2612 = vlaneseq
    %v2613 = vshrl.u32 %v2612, 7
    %v2614 = vsub.s32 0, %v2613
    %v2615 = vrot.slane %v2610, %v2614
    %v2616 = vlaneseq
    %v2617 = vshrl.u32 %v2616, 7
    %v2618 = vsub.s32 1, %v2617
    %v2619 = vrot.slane %v2610, %v2618
    %v2620 = vlaneseq
    %v2621 = vshrl.u32 %v2620, 7
    %v2622 = vsub.s32 2, %v2621
    %v2623 = vrot.slane %v2610, %v2622
    %v2624 = vlaneseq
    %v2625 = vshrl.u32 %v2624, 7
    %v2626 = vsub.s32 3, %v2625
    %v2627 = vrot.slane %v2610, %v2626
    %v2760 = vunpack.c.l.b16 %v2482
    %v2761 = vunpack.c.h.b16 %v2482
    %v2762 = vunpack.c.l.b16 %v2483
    %v2763 = vunpack.c.h.b16 %v2483
    %v2764 = vunpack.c.l.b16 %v2484
    %v2765 = vunpack.c.h.b16 %v2484
    %v2766 = vunpack.c.l.b16 %v2485
    %v2767 = vunpack.c.h.b16 %v2485
    %v2768 = vunpack.c.l.b16 %v2486
    %v2769 = vunpack.c.h.b16 %v2486
    %v2770 = vunpack.c.l.b16 %v2487
    %v2771 = vunpack.c.h.b16 %v2487
    %v2772 = vunpack.c.l.b16 %v2488
    %v2773 = vunpack.c.h.b16 %v2488
    %v2774 = vunpack.c.l.b16 %v2489
    %v2775 = vunpack.c.h.b16 %v2489
    %v2776 = vunpack.c.l.b16 %v2490
    %v2777 = vunpack.c.h.b16 %v2490
    %v2778 = vunpack.c.l.b16 %v2491
    %v2779 = vunpack.c.h.b16 %v2491
    %v2780 = vunpack.c.l.b16 %v2492
    %v2781 = vunpack.c.h.b16 %v2492
    %v2782 = vunpack.c.l.b16 %v2493
    %v2783 = vunpack.c.h.b16 %v2493
    %v2784 = vunpack.c.l.b16 %v2494
    %v2785 = vunpack.c.h.b16 %v2494
    %v2786 = vunpack.c.l.b16 %v2495
    %v2787 = vunpack.c.h.b16 %v2495
    %v2788 = vunpack.c.l.b16 %v2496
    %v2789 = vunpack.c.h.b16 %v2496
    %v2790 = vunpack.c.l.b16 %v2497
    %v2791 = vunpack.c.h.b16 %v2497
    %v2792 = vunpack.c.l.b16 %v2498
    %v2793 = vunpack.c.h.b16 %v2498
    %v2794 = vunpack.c.l.b16 %v2499
    %v2795 = vunpack.c.h.b16 %v2499
    %v2796 = vunpack.c.l.b16 %v2500
    %v2797 = vunpack.c.h.b16 %v2500
    %v2798 = vunpack.c.l.b16 %v2501
    %v2799 = vunpack.c.h.b16 %v2501
    %v2800 = vunpack.c.l.b16 %v2502
    %v2801 = vunpack.c.h.b16 %v2502
    %v2802 = vunpack.c.l.b16 %v2503
    %v2803 = vunpack.c.h.b16 %v2503
    %v2804 = vunpack.c.l.b16 %v2504
    %v2805 = vunpack.c.h.b16 %v2504
    %v2806 = vunpack.c.l.b16 %v2505
    %v2807 = vunpack.c.h.b16 %v2505
    %v2808 = vunpack.c.l.b16 %v2506
    %v2809 = vunpack.c.h.b16 %v2506
    %v2810 = vunpack.c.l.b16 %v2507
    %v2811 = vunpack.c.h.b16 %v2507
    %v2812 = vunpack.c.l.b16 %v2508
    %v2813 = vunpack.c.h.b16 %v2508
    %v2814 = vunpack.c.l.b16 %v2509
    %v2815 = vunpack.c.h.b16 %v2509
    %v2816 = vunpack.c.l.b16 %v2510
    %v2817 = vunpack.c.h.b16 %v2510
    %v2818 = vunpack.c.l.b16 %v2511
    %v2819 = vunpack.c.h.b16 %v2511
    %v2820 = vunpack.c.l.b16 %v2512
    %v2821 = vunpack.c.h.b16 %v2512
    %v2822 = vunpack.c.l.b16 %v2513
    %v2823 = vunpack.c.h.b16 %v2513
    %v2824 = vunpack.c.l.b16 %v2514
    %v2825 = vunpack.c.h.b16 %v2514
    %v2826 = vunpack.c.l.b16 %v2515
    %v2827 = vunpack.c.h.b16 %v2515
    %v2828 = vunpack.c.l.b16 %v2516
    %v2829 = vunpack.c.h.b16 %v2516
    %v2830 = vunpack.c.l.b16 %v2517
    %v2831 = vunpack.c.h.b16 %v2517
    %v2832 = vunpack.c.l.b16 %v2518
    %v2833 = vunpack.c.h.b16 %v2518
    %v2834 = vunpack.c.l.b16 %v2519
    %v2835 = vunpack.c.h.b16 %v2519
    %v2836 = vunpack.c.l.b16 %v2520
    %v2837 = vunpack.c.h.b16 %v2520
    %v2838 = vunpack.c.l.b16 %v2521
    %v2839 = vunpack.c.h.b16 %v2521
    %v2840 = vunpack.c.l.b16 %v2522
    %v2841 = vunpack.c.h.b16 %v2522
    %v2842 = vunpack.c.l.b16 %v2523
    %v2843 = vunpack.c.h.b16 %v2523
    %v2844 = vunpack.c.l.b16 %v2524
    %v2845 = vunpack.c.h.b16 %v2524
    %v2846 = vunpack.c.l.b16 %v2525
    %v2847 = vunpack.c.h.b16 %v2525
    %v2848 = vunpack.c.l.b16 %v2526
    %v2849 = vunpack.c.h.b16 %v2526
    %v2850 = vunpack.c.l.b16 %v2527
    %v2851 = vunpack.c.h.b16 %v2527
    %v2852 = vunpack.c.l.b16 %v2528
    %v2853 = vunpack.c.h.b16 %v2528
    %v2854 = vunpack.c.l.b16 %v2529
    %v2855 = vunpack.c.h.b16 %v2529
    %v2856 = vunpack.c.l.b16 %v2530
    %v2857 = vunpack.c.h.b16 %v2530
    %v2858 = vunpack.c.l.b16 %v2531
    %v2859 = vunpack.c.h.b16 %v2531
    %v2860 = vunpack.c.l.b16 %v2532
    %v2861 = vunpack.c.h.b16 %v2532
    %v2862 = vunpack.c.l.b16 %v2533
    %v2863 = vunpack.c.h.b16 %v2533
    %v2864 = vunpack.c.l.b16 %v2534
    %v2865 = vunpack.c.h.b16 %v2534
    %v2866 = vunpack.c.l.b16 %v2535
    %v2867 = vunpack.c.h.b16 %v2535
    %v2868 = vunpack.c.l.b16 %v2536
    %v2869 = vunpack.c.h.b16 %v2536
    %v2870 = vunpack.c.l.b16 %v2537
    %v2871 = vunpack.c.h.b16 %v2537
    %v2872 = vunpack.c.l.b16 %v2538
    %v2873 = vunpack.c.h.b16 %v2538
    %v2874 = vunpack.c.l.b16 %v2539
    %v2875 = vunpack.c.h.b16 %v2539
    %v2876 = vunpack.c.l.b16 %v2540
    %v2877 = vunpack.c.h.b16 %v2540
    %v2878 = vunpack.c.l.b16 %v2541
    %v2879 = vunpack.c.h.b16 %v2541
    %v2880 = vunpack.c.l.b16 %v2542
    %v2881 = vunpack.c.h.b16 %v2542
    %v2882 = vunpack.c.l.b16 %v2543
    %v2883 = vunpack.c.h.b16 %v2543
    %v2884 = vunpack.c.l.b16 %v2544
    %v2885 = vunpack.c.h.b16 %v2544
    %v2886 = vunpack.c.l.b16 %v2545
    %v2887 = vunpack.c.h.b16 %v2545
    %v2888 = vunpack.c.l.b16 %v2546
    %v2889 = vunpack.c.h.b16 %v2546
    %v2890 = vunpack.c.l.b16 %v2547
    %v2891 = vunpack.c.h.b16 %v2547
    %v2892 = vunpack.c.l.b16 %v2548
    %v2893 = vunpack.c.h.b16 %v2548
    %v2894 = vunpack.c.l.b16 %v2549
    %v2895 = vunpack.c.h.b16 %v2549
    %v2896 = vunpack.c.l.b16 %v2550
    %v2897 = vunpack.c.h.b16 %v2550
    %v2898 = vunpack.c.l.b16 %v2551
    %v2899 = vunpack.c.h.b16 %v2551
    %v2900 = vunpack.c.l.b16 %v2552
    %v2901 = vunpack.c.h.b16 %v2552
    %v2902 = vunpack.c.l.b16 %v2553
    %v2903 = vunpack.c.h.b16 %v2553
    %v2904 = vunpack.c.l.b16 %v2554
    %v2905 = vunpack.c.h.b16 %v2554
    %v2906 = vunpack.c.l.b16 %v2555
    %v2907 = vunpack.c.h.b16 %v2555
    %v2908 = vunpack.c.l.b16 %v2556
    %v2909 = vunpack.c.h.b16 %v2556
    %v2910 = vunpack.c.l.b16 %v2557
    %v2911 = vunpack.c.h.b16 %v2557
    %v2912 = vunpack.c.l.b16 %v2558
    %v2913 = vunpack.c.h.b16 %v2558
    %v2914 = vunpack.c.l.b16 %v2559
    %v2915 = vunpack.c.h.b16 %v2559
    %v2916 = vunpack.c.l.b16 %v2560
    %v2917 = vunpack.c.h.b16 %v2560
    %v2918 = vunpack.c.l.b16 %v2561
    %v2919 = vunpack.c.h.b16 %v2561
    %v2920 = vunpack.c.l.b16 %v2562
    %v2921 = vunpack.c.h.b16 %v2562
    %v2922 = vunpack.c.l.b16 %v2563
    %v2923 = vunpack.c.h.b16 %v2563
    %v2924 = vunpack.c.l.b16 %v2564
    %v2925 = vunpack.c.h.b16 %v2564
    %v2926 = vunpack.c.l.b16 %v2565
    %v2927 = vunpack.c.h.b16 %v2565
    %v2928 = vunpack.c.l.b16 %v2566
    %v2929 = vunpack.c.h.b16 %v2566
    %v2930 = vunpack.c.l.b16 %v2567
    %v2931 = vunpack.c.h.b16 %v2567
    %v2932 = vunpack.c.l.b16 %v2568
    %v2933 = vunpack.c.h.b16 %v2568
    %v2934 = vunpack.c.l.b16 %v2569
    %v2935 = vunpack.c.h.b16 %v2569
    %v2936 = vunpack.c.l.b16 %v2570
    %v2937 = vunpack.c.h.b16 %v2570
    %v2938 = vunpack.c.l.b16 %v2571
    %v2939 = vunpack.c.h.b16 %v2571
    %v2940 = vunpack.c.l.b16 %v2572
    %v2941 = vunpack.c.h.b16 %v2572
    %v2942 = vunpack.c.l.b16 %v2573
    %v2943 = vunpack.c.h.b16 %v2573
    %v2944 = vunpack.c.l.b16 %v2574
    %v2945 = vunpack.c.h.b16 %v2574
    %v2946 = vunpack.c.l.b16 %v2575
    %v2947 = vunpack.c.h.b16 %v2575
    %v2948 = vunpack.c.l.b16 %v2576
    %v2949 = vunpack.c.h.b16 %v2576
    %v2950 = vunpack.c.l.b16 %v2577
    %v2951 = vunpack.c.h.b16 %v2577
    %v2952 = vunpack.c.l.b16 %v2578
    %v2953 = vunpack.c.h.b16 %v2578
    %v2954 = vunpack.c.l.b16 %v2579
    %v2955 = vunpack.c.h.b16 %v2579
    %v2956 = vunpack.c.l.b16 %v2580
    %v2957 = vunpack.c.h.b16 %v2580
    %v2958 = vunpack.c.l.b16 %v2581
    %v2959 = vunpack.c.h.b16 %v2581
    %v2960 = vunpack.c.l.b16 %v2582
    %v2961 = vunpack.c.h.b16 %v2582
    %v2962 = vunpack.c.l.b16 %v2583
    %v2963 = vunpack.c.h.b16 %v2583
    %v2964 = vunpack.c.l.b16 %v2584
    %v2965 = vunpack.c.h.b16 %v2584
    %v2966 = vunpack.c.l.b16 %v2585
    %v2967 = vunpack.c.h.b16 %v2585
    %v2968 = vunpack.c.l.b16 %v2586
    %v2969 = vunpack.c.h.b16 %v2586
    %v2970 = vunpack.c.l.b16 %v2587
    %v2971 = vunpack.c.h.b16 %v2587
    %v2972 = vunpack.c.l.b16 %v2588
    %v2973 = vunpack.c.h.b16 %v2588
    %v2974 = vunpack.c.l.b16 %v2589
    %v2975 = vunpack.c.h.b16 %v2589
    %v2976 = vunpack.c.l.b16 %v2590
    %v2977 = vunpack.c.h.b16 %v2590
    %v2978 = vunpack.c.l.b16 %v2591
    %v2979 = vunpack.c.h.b16 %v2591
    %v2980 = vunpack.c.l.b16 %v2592
    %v2981 = vunpack.c.h.b16 %v2592
    %v2982 = vunpack.c.l.b16 %v2593
    %v2983 = vunpack.c.h.b16 %v2593
    %v2984 = vunpack.c.l.b16 %v2594
    %v2985 = vunpack.c.h.b16 %v2594
    %v2986 = vunpack.c.l.b16 %v2595
    %v2987 = vunpack.c.h.b16 %v2595
    %v2988 = vunpack.c.l.b16 %v2596
    %v2989 = vunpack.c.h.b16 %v2596
    %v2990 = vunpack.c.l.b16 %v2597
    %v2991 = vunpack.c.h.b16 %v2597
    %v2992 = vunpack.c.l.b16 %v2598
    %v2993 = vunpack.c.h.b16 %v2598
    %v2994 = vunpack.c.l.b16 %v2599
    %v2995 = vunpack.c.h.b16 %v2599
    %v2996 = vunpack.c.l.b16 %v2600
    %v2997 = vunpack.c.h.b16 %v2600
    %v2998 = vunpack.c.l.b16 %v2601
    %v2999 = vunpack.c.h.b16 %v2601
    %v3000 = vunpack.c.l.b16 %v2602
    %v3001 = vunpack.c.h.b16 %v2602
    %v3002 = vunpack.c.l.b16 %v2603
    %v3003 = vunpack.c.h.b16 %v2603
    %v3004 = vunpack.c.l.b16 %v2604
    %v3005 = vunpack.c.h.b16 %v2604
    %v3006 = vunpack.c.l.b16 %v2605
    %v3007 = vunpack.c.h.b16 %v2605
    %v3008 = vunpack.c.l.b16 %v2606
    %v3009 = vunpack.c.h.b16 %v2606
    %v3010 = vunpack.c.l.b16 %v2607
    %v3011 = vunpack.c.h.b16 %v2607
    %v3012 = vunpack.c.l.b16 %v2608
    %v3013 = vunpack.c.h.b16 %v2608
    %v3014 = vunpack.c.l.b16 %v2609
    %v3015 = vunpack.c.h.b16 %v2609
    %v3016 = vpack.c.b16 %v2764, %v2760
    %v3017 = vpack.c.b16 %v2765, %v2761
    %v3018 = vpack.c.b16 %v2766, %v2762
    %v3019 = vpack.c.b16 %v2767, %v2763
    %v3020 = vpack.c.b16 %v2772, %v2768
    %v3021 = vpack.c.b16 %v2773, %v2769
    %v3022 = vpack.c.b16 %v2774, %v2770
    %v3023 = vpack.c.b16 %v2775, %v2771
    %v3024 = vpack.c.b16 %v2780, %v2776
    %v3025 = vpack.c.b16 %v2781, %v2777
    %v3026 = vpack.c.b16 %v2782, %v2778
    %v3027 = vpack.c.b16 %v2783, %v2779
    %v3028 = vpack.c.b16 %v2788, %v2784
    %v3029 = vpack.c.b16 %v2789, %v2785
    %v3030 = vpack.c.b16 %v2790, %v2786
    %v3031 = vpack.c.b16 %v2791, %v2787
    %v3032 = vpack.c.b16 %v2796, %v2792
    %v3033 = vpack.c.b16 %v2797, %v2793
    %v3034 = vpack.c.b16 %v2798, %v2794
    %v3035 = vpack.c.b16 %v2799, %v2795
    %v3036 = vpack.c.b16 %v2804, %v2800
    %v3037 = vpack.c.b16 %v2805, %v2801
    %v3038 = vpack.c.b16 %v2806, %v2802
    %v3039 = vpack.c.b16 %v2807, %v2803
    %v3040 = vpack.c.b16 %v2812, %v2808
    %v3041 = vpack.c.b16 %v2813, %v2809
    %v3042 = vpack.c.b16 %v2814, %v2810
    %v3043 = vpack.c.b16 %v2815, %v2811
    %v3044 = vpack.c.b16 %v2820, %v2816
    %v3045 = vpack.c.b16 %v2821, %v2817
    %v3046 = vpack.c.b16 %v2822, %v2818
    %v3047 = vpack.c.b16 %v2823, %v2819
    %v3048 = vpack.c.b16 %v2828, %v2824
    %v3049 = vpack.c.b16 %v2829, %v2825
    %v3050 = vpack.c.b16 %v2830, %v2826
    %v3051 = vpack.c.b16 %v2831, %v2827
    %v3052 = vpack.c.b16 %v2836, %v2832
    %v3053 = vpack.c.b16 %v2837, %v2833
    %v3054 = vpack.c.b16 %v2838, %v2834
    %v3055 = vpack.c.b16 %v2839, %v2835
    %v3056 = vpack.c.b16 %v2844, %v2840
    %v3057 = vpack.c.b16 %v2845, %v2841
    %v3058 = vpack.c.b16 %v2846, %v2842
    %v3059 = vpack.c.b16 %v2847, %v2843
    %v3060 = vpack.c.b16 %v2852, %v2848
    %v3061 = vpack.c.b16 %v2853, %v2849
    %v3062 = vpack.c.b16 %v2854, %v2850
    %v3063 = vpack.c.b16 %v2855, %v2851
    %v3064 = vpack.c.b16 %v2860, %v2856
    %v3065 = vpack.c.b16 %v2861, %v2857
    %v3066 = vpack.c.b16 %v2862, %v2858
    %v3067 = vpack.c.b16 %v2863, %v2859
    %v3068 = vpack.c.b16 %v2868, %v2864
    %v3069 = vpack.c.b16 %v2869, %v2865
    %v3070 = vpack.c.b16 %v2870, %v2866
    %v3071 = vpack.c.b16 %v2871, %v2867
    %v3072 = vpack.c.b16 %v2876, %v2872
    %v3073 = vpack.c.b16 %v2877, %v2873
    %v3074 = vpack.c.b16 %v2878, %v2874
    %v3075 = vpack.c.b16 %v2879, %v2875
    %v3076 = vpack.c.b16 %v2884, %v2880
    %v3077 = vpack.c.b16 %v2885, %v2881
    %v3078 = vpack.c.b16 %v2886, %v2882
    %v3079 = vpack.c.b16 %v2887, %v2883
    %v3080 = vpack.c.b16 %v2892, %v2888
    %v3081 = vpack.c.b16 %v2893, %v2889
    %v3082 = vpack.c.b16 %v2894, %v2890
    %v3083 = vpack.c.b16 %v2895, %v2891
    %v3084 = vpack.c.b16 %v2900, %v2896
    %v3085 = vpack.c.b16 %v2901, %v2897
    %v3086 = vpack.c.b16 %v2902, %v2898
    %v3087 = vpack.c.b16 %v2903, %v2899
    %v3088 = vpack.c.b16 %v2908, %v2904
    %v3089 = vpack.c.b16 %v2909, %v2905
    %v3090 = vpack.c.b16 %v2910, %v2906
    %v3091 = vpack.c.b16 %v2911, %v2907
    %v3092 = vpack.c.b16 %v2916, %v2912
    %v3093 = vpack.c.b16 %v2917, %v2913
    %v3094 = vpack.c.b16 %v2918, %v2914
    %v3095 = vpack.c.b16 %v2919, %v2915
    %v3096 = vpack.c.b16 %v2924, %v2920
    %v3097 = vpack.c.b16 %v2925, %v2921
    %v3098 = vpack.c.b16 %v2926, %v2922
    %v3099 = vpack.c.b16 %v2927, %v2923
    %v3100 = vpack.c.b16 %v2932, %v2928
    %v3101 = vpack.c.b16 %v2933, %v2929
    %v3102 = vpack.c.b16 %v2934, %v2930
    %v3103 = vpack.c.b16 %v2935, %v2931
    %v3104 = vpack.c.b16 %v2940, %v2936
    %v3105 = vpack.c.b16 %v2941, %v2937
    %v3106 = vpack.c.b16 %v2942, %v2938
    %v3107 = vpack.c.b16 %v2943, %v2939
    %v3108 = vpack.c.b16 %v2948, %v2944
    %v3109 = vpack.c.b16 %v2949, %v2945
    %v3110 = vpack.c.b16 %v2950, %v2946
    %v3111 = vpack.c.b16 %v2951, %v2947
    %v3112 = vpack.c.b16 %v2956, %v2952
    %v3113 = vpack.c.b16 %v2957, %v2953
    %v3114 = vpack.c.b16 %v2958, %v2954
    %v3115 = vpack.c.b16 %v2959, %v2955
    %v3116 = vpack.c.b16 %v2964, %v2960
    %v3117 = vpack.c.b16 %v2965, %v2961
    %v3118 = vpack.c.b16 %v2966, %v2962
    %v3119 = vpack.c.b16 %v2967, %v2963
    %v3120 = vpack.c.b16 %v2972, %v2968
    %v3121 = vpack.c.b16 %v2973, %v2969
    %v3122 = vpack.c.b16 %v2974, %v2970
    %v3123 = vpack.c.b16 %v2975, %v2971
    %v3124 = vpack.c.b16 %v2980, %v2976
    %v3125 = vpack.c.b16 %v2981, %v2977
    %v3126 = vpack.c.b16 %v2982, %v2978
    %v3127 = vpack.c.b16 %v2983, %v2979
    %v3128 = vpack.c.b16 %v2988, %v2984
    %v3129 = vpack.c.b16 %v2989, %v2985
    %v3130 = vpack.c.b16 %v2990, %v2986
    %v3131 = vpack.c.b16 %v2991, %v2987
    %v3132 = vpack.c.b16 %v2996, %v2992
    %v3133 = vpack.c.b16 %v2997, %v2993
    %v3134 = vpack.c.b16 %v2998, %v2994
    %v3135 = vpack.c.b16 %v2999, %v2995
    %v3136 = vpack.c.b16 %v3004, %v3000
    %v3137 = vpack.c.b16 %v3005, %v3001
    %v3138 = vpack.c.b16 %v3006, %v3002
    %v3139 = vpack.c.b16 %v3007, %v3003
    %v3140 = vpack.c.b16 %v3012, %v3008
    %v3141 = vpack.c.b16 %v3013, %v3009
    %v3142 = vpack.c.b16 %v3014, %v3010
    %v3143 = vpack.c.b16 %v3015, %v3011
    %3272 = vmatprep.subr.bf16.mxu0 %v3017
    %3273 = vmatpush1.bf16.msra.mxu0 %v3016
    %3274 = vmatprep.subr.bf16.mxu0 %v3021
    %3275 = vmatpush1.bf16.msra.mxu0 %v3020
    %3276 = vmatprep.subr.bf16.mxu0 %v3025
    %3277 = vmatpush1.bf16.msra.mxu0 %v3024
    %3278 = vmatprep.subr.bf16.mxu0 %v3029
    %3279 = vmatpush1.bf16.msra.mxu0 %v3028
    %3280 = vmatprep.subr.bf16.mxu0 %v3033
    %3281 = vmatpush1.bf16.msra.mxu0 %v3032
    %3282 = vmatprep.subr.bf16.mxu0 %v3037
    %3283 = vmatpush1.bf16.msra.mxu0 %v3036
    %3284 = vmatprep.subr.bf16.mxu0 %v3041
    %3285 = vmatpush1.bf16.msra.mxu0 %v3040
    %3286 = vmatprep.subr.bf16.mxu0 %v3045
    %3287 = vmatpush1.bf16.msra.mxu0 %v3044
    %3288 = vmatprep.subr.bf16.mxu0 %v3049
    %3289 = vmatpush1.bf16.msra.mxu0 %v3048
    %3290 = vmatprep.subr.bf16.mxu0 %v3053
    %3291 = vmatpush1.bf16.msra.mxu0 %v3052
    %3292 = vmatprep.subr.bf16.mxu0 %v3057
    %3293 = vmatpush1.bf16.msra.mxu0 %v3056
    %3294 = vmatprep.subr.bf16.mxu0 %v3061
    %3295 = vmatpush1.bf16.msra.mxu0 %v3060
    %3296 = vmatprep.subr.bf16.mxu0 %v3065
    %3297 = vmatpush1.bf16.msra.mxu0 %v3064
    %3298 = vmatprep.subr.bf16.mxu0 %v3069
    %3299 = vmatpush1.bf16.msra.mxu0 %v3068
    %3300 = vmatprep.subr.bf16.mxu0 %v3073
    %3301 = vmatpush1.bf16.msra.mxu0 %v3072
    %3302 = vmatprep.subr.bf16.mxu0 %v3077
    %3303 = vmatpush1.bf16.msra.mxu0 %v3076
    %3304 = vmatprep.mubr.bf16.mxu0 %v2479
    %3305 = vmatmul.mubr.bf16.gmra.mrb[0].mxu0 %v2478
    %v3306 = vpop.f32.mrb[0].mxu0
    %v3307 = vadd.f32 %v2615, %v3306
    %v3308 = vpop.f32.mrb[0].mxu0
    %v3309 = vadd.f32 %v2619, %v3308
    %v3310 = vpop.f32.mrb[0].mxu0
    %v3311 = vpop.f32.mrb[0].mxu0
    %3312 = vdwg.mxu0
    %3313 = vmatprep.subr.bf16.mxu0 %v3081
    %3314 = vmatpush1.bf16.msra.mxu0 %v3080
    %3315 = vmatprep.subr.bf16.mxu0 %v3085
    %3316 = vmatpush1.bf16.msra.mxu0 %v3084
    %3317 = vmatprep.subr.bf16.mxu0 %v3089
    %3318 = vmatpush1.bf16.msra.mxu0 %v3088
    %3319 = vmatprep.subr.bf16.mxu0 %v3093
    %3320 = vmatpush1.bf16.msra.mxu0 %v3092
    %3321 = vmatprep.subr.bf16.mxu0 %v3097
    %3322 = vmatpush1.bf16.msra.mxu0 %v3096
    %3323 = vmatprep.subr.bf16.mxu0 %v3101
    %3324 = vmatpush1.bf16.msra.mxu0 %v3100
    %3325 = vmatprep.subr.bf16.mxu0 %v3105
    %3326 = vmatpush1.bf16.msra.mxu0 %v3104
    %3327 = vmatprep.subr.bf16.mxu0 %v3109
    %3328 = vmatpush1.bf16.msra.mxu0 %v3108
    %3329 = vmatprep.subr.bf16.mxu0 %v3113
    %3330 = vmatpush1.bf16.msra.mxu0 %v3112
    %3331 = vmatprep.subr.bf16.mxu0 %v3117
    %3332 = vmatpush1.bf16.msra.mxu0 %v3116
    %3333 = vmatprep.subr.bf16.mxu0 %v3121
    %3334 = vmatpush1.bf16.msra.mxu0 %v3120
    %3335 = vmatprep.subr.bf16.mxu0 %v3125
    %3336 = vmatpush1.bf16.msra.mxu0 %v3124
    %3337 = vmatprep.subr.bf16.mxu0 %v3129
    %3338 = vmatpush1.bf16.msra.mxu0 %v3128
    %3339 = vmatprep.subr.bf16.mxu0 %v3133
    %3340 = vmatpush1.bf16.msra.mxu0 %v3132
    %3341 = vmatprep.subr.bf16.mxu0 %v3137
    %3342 = vmatpush1.bf16.msra.mxu0 %v3136
    %3343 = vmatprep.subr.bf16.mxu0 %v3141
    %3344 = vmatpush1.bf16.msra.mxu0 %v3140
    %3345 = vmatprep.mubr.bf16.mxu0 %v2481
    %3346 = vmatmul.mubr.bf16.gmra.mrb[0].mxu0 %v2480
    %v3347 = vpop.f32.mrb[0].mxu0
    %v3348 = vadd.f32 %v3307, %v3347
    %v3349 = vpop.f32.mrb[0].mxu0
    %v3350 = vadd.f32 %v3309, %v3349
    %v3351 = vpop.f32.mrb[0].mxu0
    %v3352 = vpop.f32.mrb[0].mxu0
    %3353 = vdwg.mxu0
    %3354 = vmatprep.subr.bf16.mxu0 %v3019
    %3355 = vmatpush1.bf16.msra.mxu0 %v3018
    %3356 = vmatprep.subr.bf16.mxu0 %v3023
    %3357 = vmatpush1.bf16.msra.mxu0 %v3022
    %3358 = vmatprep.subr.bf16.mxu0 %v3027
    %3359 = vmatpush1.bf16.msra.mxu0 %v3026
    %3360 = vmatprep.subr.bf16.mxu0 %v3031
    %3361 = vmatpush1.bf16.msra.mxu0 %v3030
    %3362 = vmatprep.subr.bf16.mxu0 %v3035
    %3363 = vmatpush1.bf16.msra.mxu0 %v3034
    %3364 = vmatprep.subr.bf16.mxu0 %v3039
    %3365 = vmatpush1.bf16.msra.mxu0 %v3038
    %3366 = vmatprep.subr.bf16.mxu0 %v3043
    %3367 = vmatpush1.bf16.msra.mxu0 %v3042
    %3368 = vmatprep.subr.bf16.mxu0 %v3047
    %3369 = vmatpush1.bf16.msra.mxu0 %v3046
    %3370 = vmatprep.subr.bf16.mxu0 %v3051
    %3371 = vmatpush1.bf16.msra.mxu0 %v3050
    %3372 = vmatprep.subr.bf16.mxu0 %v3055
    %3373 = vmatpush1.bf16.msra.mxu0 %v3054
    %3374 = vmatprep.subr.bf16.mxu0 %v3059
    %3375 = vmatpush1.bf16.msra.mxu0 %v3058
    %3376 = vmatprep.subr.bf16.mxu0 %v3063
    %3377 = vmatpush1.bf16.msra.mxu0 %v3062
    %3378 = vmatprep.subr.bf16.mxu0 %v3067
    %3379 = vmatpush1.bf16.msra.mxu0 %v3066
    %3380 = vmatprep.subr.bf16.mxu0 %v3071
    %3381 = vmatpush1.bf16.msra.mxu0 %v3070
    %3382 = vmatprep.subr.bf16.mxu0 %v3075
    %3383 = vmatpush1.bf16.msra.mxu0 %v3074
    %3384 = vmatprep.subr.bf16.mxu0 %v3079
    %3385 = vmatpush1.bf16.msra.mxu0 %v3078
    %3386 = vmatprep.mubr.bf16.mxu0 %v2479
    %3387 = vmatmul.mubr.bf16.gmra.mrb[0].mxu0 %v2478
    %v3388 = vpop.f32.mrb[0].mxu0
    %v3389 = vadd.f32 %v2623, %v3388
    %v3390 = vpop.f32.mrb[0].mxu0
    %v3391 = vadd.f32 %v2627, %v3390
    %v3392 = vpop.f32.mrb[0].mxu0
    %v3393 = vpop.f32.mrb[0].mxu0
    %3394 = vdwg.mxu0
    %3395 = vmatprep.subr.bf16.mxu0 %v3083
    %3396 = vmatpush1.bf16.msra.mxu0 %v3082
    %3397 = vmatprep.subr.bf16.mxu0 %v3087
    %3398 = vmatpush1.bf16.msra.mxu0 %v3086
    %3399 = vmatprep.subr.bf16.mxu0 %v3091
    %3400 = vmatpush1.bf16.msra.mxu0 %v3090
    %3401 = vmatprep.subr.bf16.mxu0 %v3095
    %3402 = vmatpush1.bf16.msra.mxu0 %v3094
    %3403 = vmatprep.subr.bf16.mxu0 %v3099
    %3404 = vmatpush1.bf16.msra.mxu0 %v3098
    %3405 = vmatprep.subr.bf16.mxu0 %v3103
    %3406 = vmatpush1.bf16.msra.mxu0 %v3102
    %3407 = vmatprep.subr.bf16.mxu0 %v3107
    %3408 = vmatpush1.bf16.msra.mxu0 %v3106
    %3409 = vmatprep.subr.bf16.mxu0 %v3111
    %3410 = vmatpush1.bf16.msra.mxu0 %v3110
    %3411 = vmatprep.subr.bf16.mxu0 %v3115
    %3412 = vmatpush1.bf16.msra.mxu0 %v3114
    %3413 = vmatprep.subr.bf16.mxu0 %v3119
    %3414 = vmatpush1.bf16.msra.mxu0 %v3118
    %3415 = vmatprep.subr.bf16.mxu0 %v3123
    %3416 = vmatpush1.bf16.msra.mxu0 %v3122
    %3417 = vmatprep.subr.bf16.mxu0 %v3127
    %3418 = vmatpush1.bf16.msra.mxu0 %v3126
    %3419 = vmatprep.subr.bf16.mxu0 %v3131
    %3420 = vmatpush1.bf16.msra.mxu0 %v3130
    %3421 = vmatprep.subr.bf16.mxu0 %v3135
    %3422 = vmatpush1.bf16.msra.mxu0 %v3134
    %3423 = vmatprep.subr.bf16.mxu0 %v3139
    %3424 = vmatpush1.bf16.msra.mxu0 %v3138
    %3425 = vmatprep.subr.bf16.mxu0 %v3143
    %3426 = vmatpush1.bf16.msra.mxu0 %v3142
    %3427 = vmatprep.mubr.bf16.mxu0 %v2481
    %3428 = vmatmul.mubr.bf16.gmra.mrb[0].mxu0 %v2480
    %v3429 = vpop.f32.mrb[0].mxu0
    %v3430 = vadd.f32 %v3389, %v3429
    %v3431 = vpop.f32.mrb[0].mxu0
    %v3432 = vadd.f32 %v3391, %v3431
    %v3433 = vpop.f32.mrb[0].mxu0
    %v3434 = vpop.f32.mrb[0].mxu0
    %3435 = vdwg.mxu0
    %v3436 = vmax.f32 %v3348, 0.0
    %v3437 = vmax.f32 %v3350, 0.0
    %v3438 = vmax.f32 %v3430, 0.0
    %v3439 = vmax.f32 %v3432, 0.0
    %v3440 = vld [vmem:[%s15] sm:$0xf]
    %v3442 = vlaneseq
    %v3443 = vshrl.u32 %v3442, 7
    %v3444 = vsub.s32 0, %v3443
    %v3445 = vrot.slane %v3440, %v3444
    %v3446 = vlaneseq
    %v3447 = vshrl.u32 %v3446, 7
    %v3448 = vsub.s32 1, %v3447
    %v3449 = vrot.slane %v3440, %v3448
    %v3450 = vlaneseq
    %v3451 = vshrl.u32 %v3450, 7
    %v3452 = vsub.s32 2, %v3451
    %v3453 = vrot.slane %v3440, %v3452
    %v3454 = vlaneseq
    %v3455 = vshrl.u32 %v3454, 7
    %v3456 = vsub.s32 3, %v3455
    %v3457 = vrot.slane %v3440, %v3456
    %v3462 = vmul.f32 %v3436, %v3445
    %v3463 = vmul.f32 %v3437, %v3449
    %v3464 = vmul.f32 %v3438, %v3453
    %v3465 = vmul.f32 %v3439, %v3457
    %v3466 = vadd.f32 %v3462, %v3463
    %v3467 = vadd.f32 %v3466, %v3464
    %v3468 = vadd.f32 %v3467, %v3465
    %3469 = vadd.xlane.f32.xlu0 %v3468
    %v3470 = vpop.xlane.xlu0 %3469
    %v3471 = vld [vmem:[#allocation2] sm:$0x1]
    %v3473 = vlaneseq
    %v3474 = vshrl.u32 %v3473, 7
    %v3475 = vsub.s32 0, %v3474
    %v3476 = vrot.slane %v3471, %v3475
    %v3478 = vadd.f32 %v3470, %v3476
    %v3479 = vtanh.pop %v3478
    %vm3480 = vcmask 130048
    %3481 = vst.msk [vmem:[%s17] sm:$0xff] %vm3480, %v1958
    %vm3482 = vcmask 261248
    %3483 = vst.msk [vmem:[%s17] sm:$0xff] %vm3482, %v1966
    %3485 = vset.pattern.permute.xlu0 0
    %3486 = vperm.xlu0 %3485, %v3479
    %v3487 = vpop.permute.xlu0 %3486
    %vm3489 = vcmask 1047808
    %3490 = vst.msk [vmem:[%s17] sm:$0xff] %vm3489, %v3487
    // Predicated region
    $region86: #{vae_forward.1} parent=1 // pred_check
      _
    $region87: #{vae_forward.1} parent=1 // pred_check_branch
      %3492 = sbr.rel (0) target = $region89
    $region88: #{vae_forward.1} parent=1 // pred_region
      _
    $region89: #{vae_forward.1} parent=1 // pred_fallthru
      _
    // Predicated region
    $region90: #{vae_forward.1} parent=1 // pred_check
      _
    $region91: #{vae_forward.1} parent=1 // pred_check_branch
      %3494 = sbr.rel (0) target = $region93
    $region92: #{vae_forward.1} parent=1 // pred_region
      _
    $region93: #{vae_forward.1} parent=1 // pred_fallthru
      _
    %3495 = vsyncpa [#allocation4], 1
    %3496 = vsyncpa [#allocation6], 1
    %3497 = vsyncpa [#allocation9], 1

</llo_original>
